<compile_context>
chip_gen: v5e
topology: v5e:2x2
jax: 0.10.0
libtpu: 0.0.40
codegen_flags: <defaults>
</compile_context>

<pallas_src>
import functools
import math

import numpy as np
import jax
import jax.numpy as jnp
from jax.experimental import pallas as pl
from jax.experimental.pallas import tpu as pltpu

EPS = 1e-5              # PyTorch LayerNorm default eps
_HALF_PI = math.pi / 2.0


# --------------------------------------------------------------------------------------
# Small in-kernel helpers
# --------------------------------------------------------------------------------------
def _ln(v, g, b):
    mu = jnp.mean(v, axis=-1, keepdims=True)
    var = jnp.mean(jnp.square(v - mu), axis=-1, keepdims=True)
    return (v - mu) * jax.lax.rsqrt(var + EPS) * g + b


def _mm(a, w):
    """2-D GEMM, bf16 inputs, f32 accumulation (MXU friendly on v5e/v6e/v7x)."""
    return jnp.dot(a.astype(jnp.bfloat16), w.astype(jnp.bfloat16),
                   preferred_element_type=jnp.float32)


def _bmm(wb, x3):
    """Batched matmul (c, M, K) x (c, K, N) -> (c, M, N), bf16 in / f32 acc."""
    return jax.lax.dot_general(
        wb.astype(jnp.bfloat16), x3.astype(jnp.bfloat16),
        dimension_numbers=(((2,), (1,)), ((0,), (0,))),
        preferred_element_type=jnp.float32)


def _sin_cos(t):
    """sin/cos via quadrant reduction + short Taylor series (mul/add/floor/select)."""
    k = jnp.floor(t * (1.0 / _HALF_PI) + 0.5)
    r = t - k * _HALF_PI                            # |r| <= pi/4
    q = k - 4.0 * jnp.floor(k * 0.25)               # quadrant in {0,1,2,3}
    r2 = r * r
    sin_r = r * (1.0 + r2 * (-1.0 / 6.0 + r2 * (1.0 / 120.0 + r2 * (-1.0 / 5040.0))))
    cos_r = 1.0 + r2 * (-0.5 + r2 * (1.0 / 24.0
                  + r2 * (-1.0 / 720.0 + r2 * (1.0 / 40320.0))))
    sin_t = jnp.where(q == 0.0, sin_r,
            jnp.where(q == 1.0, cos_r,
            jnp.where(q == 2.0, -sin_r, -cos_r)))
    cos_t = jnp.where(q == 0.0, cos_r,
            jnp.where(q == 1.0, -sin_r,
            jnp.where(q == 2.0, -cos_r, sin_r)))
    return sin_t, cos_t


# --------------------------------------------------------------------------------------
# Fused encoder kernel: one grid step = one (batch, layer) pair.
# Activation layout: (Rb, D) with Rb = c_in * q_len, rows ordered (channel, seg).
# --------------------------------------------------------------------------------------
def _tst_encoder_kernel(x_ref, mask_ref,
                        w_in3_ref, w_lp_ref,
                        rw1_ref, rb1_ref, rw2_ref, rb2_ref,
                        mw1_ref, mb1_ref, mw2_ref, mb2_ref,
                        wqkv_ref, bqkv_ref, wo_ref, vecs_ref,
                        o_ref, xa_ref,
                        *, c_in, q_len, d_model, num_heads):
    L, D = q_len, d_model
    Rb = c_in * L
    hd = D // num_heads
    scale = 1.0 / math.sqrt(hd)
    layer = pl.program_id(1)

    # ------- activation carry: init from input at the first layer step -------
    @pl.when(layer == 0)
    def _init():
        xa_ref[...] = x_ref[0]

    x = xa_ref[...]                                  # (Rb, D) f32
    mask = mask_ref[...]                             # (Rb, Rb) additive mask, f32

    def row(k):                                      # per-layer (1, D) packed vector
        return vecs_ref[0, k:k + 1, :]

    def bcast(w):                                    # tiny seq-mix weight -> per-channel
        return jnp.broadcast_to(w[None], (c_in,) + w.shape)

    # --- seq-axis Mlp (Linear(L->4L), ReLU, Linear(4L->L)) + residual + LayerNorm ---
    # Batched over channels: exact FLOPs (no Kronecker expansion).     [review item 5]
    def mlp_ln(v, which, g, b):
        w1 = mw1_ref[0, which]                       # (4L, L)  bf16
        w2 = mw2_ref[0, which]                       # (L, 4L)  bf16
        b1 = mb1_ref[0, which]                       # (4L, 1)  f32
        b2 = mb2_ref[0, which]                       # (L, 1)   f32
        v3 = v.reshape(c_in, L, D)
        h = jnp.maximum(_bmm(bcast(w1), v3) + b1[None], 0.0)    # (c_in, 4L, D)
        o = _bmm(bcast(w2), h) + b2[None]                       # (c_in, L, D)
        return _ln(v + o.reshape(Rb, D), g, b)

    # =================================== DWFM ===================================
    # Fused theta_h_conv / fc_h / fc_h1 projections: one (D, 3D) GEMM. [review item 1]
    t3 = _mm(x, w_in3_ref[0])                                    # (Rb, 3D) f32
    theta = jnp.maximum(_ln(t3[:, 0 * D:1 * D] + row(0), row(4), row(8)), 0.0)
    xh    = jnp.maximum(_ln(t3[:, 1 * D:2 * D] + row(1), row(5), row(9)), 0.0)
    xh1   = jnp.maximum(_ln(t3[:, 2 * D:3 * D] + row(2), row(6), row(10)), 0.0)
    sin_t, cos_t = _sin_cos(theta)
    mixed = xh * cos_t + xh1 * sin_t

    w_lp = w_lp_ref[0]                                           # (D, 2D) bf16: [lin|proj]
    z = jnp.maximum(_ln(_mm(mixed, w_lp[:, :D]) + row(3), row(7), row(11)), 0.0)

    # Reweight on a narrow (c_in, L, 1) slab: avg-pool over D, Conv1d(L->2L) -> ReLU ->
    # Conv1d(2L->L), softmax over L per channel (group-stable max).   [review item 10]
    z3 = z.reshape(c_in, L, D)
    pooled = jnp.mean(z3, axis=-1, keepdims=True)                # (c_in, L, 1)
    r = jnp.maximum(_bmm(bcast(rw1_ref[0]), pooled) + rb1_ref[0][None], 0.0)
    r = _bmm(bcast(rw2_ref[0]), r) + rb2_ref[0][None]            # (c_in, L, 1)
    r = jnp.exp(r - jnp.max(r, axis=1, keepdims=True))
    r = r * pl.reciprocal(jnp.sum(r, axis=1, keepdims=True), approx=True)

    dwf = _mm((z3 * r).reshape(Rb, D), w_lp[:, D:]) + row(12)    # proj
    x = _ln(x + dwf, row(13), row(14))                           # DWFM norm1
    x = mlp_ln(x, 0, row(15), row(16))                           # DWFM norm2(x + Mlp)

    # ================================= BHCGSAM ==================================
    # TODO(synk): placeholder BHCGSA = 2-head local-window channel self-attention.
    # Fused Q/K/V across heads: one (D, 3D) GEMM.                     [review item 2]
    qkv = _mm(x, wqkv_ref[0]) + bqkv_ref[0]                      # (Rb, 3D) f32
    ctx = []
    for h in range(num_heads):
        q = qkv[:, h * hd:(h + 1) * hd]
        k = qkv[:, D + h * hd:D + (h + 1) * hd]
        v = qkv[:, 2 * D + h * hd:2 * D + (h + 1) * hd]
        s = jax.lax.dot_general(q.astype(jnp.bfloat16), k.astype(jnp.bfloat16),
                                (((1,), (1,)), ((), ())),
                                preferred_element_type=jnp.float32) * scale + mask
        p = jnp.exp(s - jnp.max(s, axis=-1, keepdims=True))
        p = p * pl.reciprocal(jnp.sum(p, axis=-1, keepdims=True), approx=True)
        ctx.append(_mm(p, v))                                    # (Rb, hd) f32
    # Fused output projection on the concatenated contexts.           [review item 3]
    attn = _mm(jnp.concatenate(ctx, axis=-1), wo_ref[0]) + row(17)
    x = _ln(x + attn, row(18), row(19))                          # BHCGSAM norm1
    x = mlp_ln(x, 1, row(20), row(21))                           # BHCGSAM norm2

    xa_ref[...] = x

    @pl.when(layer == pl.num_programs(1) - 1)
    def _store():
        o_ref[0] = x


# --------------------------------------------------------------------------------------
# Parameter packing: natural per-layer params -> per-layer-indexed VMEM slabs.
# --------------------------------------------------------------------------------------
def pack_params(params, *, c_in, q_len, d_model, local_size):
    D, L = d_model, q_len
    bf = lambda a: a.astype(jnp.bfloat16)                        # noqa: E731
    col = lambda v: v.reshape(-1, 1).astype(jnp.float32)         # noqa: E731

    w_in3, w_lp, rw1, rb1, rw2, rb2 = [], [], [], [], [], []
    mw1, mb1, mw2, mb2 = [], [], [], []
    wqkv, bqkv, wo, vecs = [], [], [], []

    for lp in params["layers"]:
        dw = lp["dwfm"]["dwf"]
        bh = lp["bhcgsam"]
        at = bh["attn"]

        # fused DWF input projections (theta | fc_h | fc_h1) and (linear | proj)
        w_in3.append(jnp.concatenate([dw["lin_w"][0], dw["lin_w"][1], dw["lin_w"][2]],
                                     axis=1))                    # (D, 3D)
        w_lp.append(jnp.concatenate([dw["lin_w"][3], dw["proj_w"]], axis=1))  # (D, 2D)

        rw1.append(dw["rw1"]); rb1.append(col(dw["rb1"]))
        rw2.append(dw["rw2"]); rb2.append(col(dw["rb2"]))

        m0, m1 = lp["dwfm"]["mlp"], bh["mlp"]
        mw1.append(jnp.stack([m0["w1"], m1["w1"]]))              # (2, 4L, L)
        mb1.append(jnp.stack([col(m0["b1"]), col(m1["b1"])]))    # (2, 4L, 1)
        mw2.append(jnp.stack([m0["w2"], m1["w2"]]))              # (2, L, 4L)
        mb2.append(jnp.stack([col(m0["b2"]), col(m1["b2"])]))    # (2, L, 1)

        # fused QKV (both heads) and output projection
        wqkv.append(jnp.concatenate([at["wq"], at["wk"], at["wv"]], axis=1))  # (D, 3D)
        bqkv.append(jnp.concatenate([at["bq"], at["bk"], at["bv"]]).reshape(1, 3 * D))
        wo.append(at["wo"])                                      # (D, D)

        vecs.append(jnp.stack(
            [dw["lin_b"][i] for i in range(4)]
            + [dw["lin_g"][i] for i in range(4)]
            + [dw["lin_beta"][i] for i in range(4)]
            + [dw["proj_b"],
               lp["dwfm"]["norm1_g"], lp["dwfm"]["norm1_b"],
               lp["dwfm"]["norm2_g"], lp["dwfm"]["norm2_b"],
               at["bo"],
               bh["norm1_g"], bh["norm1_b"],
               bh["norm2_g"], bh["norm2_b"]]))                   # (22, D)

    slabs = (bf(jnp.stack(w_in3)), bf(jnp.stack(w_lp)),
             bf(jnp.stack(rw1)), jnp.stack(rb1),
             bf(jnp.stack(rw2)), jnp.stack(rb2),
             bf(jnp.stack(mw1)), jnp.stack(mb1),
             bf(jnp.stack(mw2)), jnp.stack(mb2),
             bf(jnp.stack(wqkv)), jnp.stack(bqkv), bf(jnp.stack(wo)),
             jnp.stack(vecs))

    # per-batch local-window channel-attention mask (rows = (channel, seg))
    Rb = c_in * L
    idx = np.arange(Rb)
    n, s = idx // L, idx % L
    win = n // local_size
    allowed = (s[:, None] == s[None, :]) & (win[:, None] == win[None, :])
    mask = jnp.asarray(np.where(allowed, 0.0, -1e30), dtype=jnp.float32)
    return mask, slabs


# --------------------------------------------------------------------------------------
# Wrapper: matches TSTEncoder.forward(src) with src = (bs*c_in, q_len, d_model).
# --------------------------------------------------------------------------------------
def _nbytes(a):
    return int(np.prod(a.shape)) * int(np.dtype(a.dtype).itemsize)


def tst_encoder(src, params, *, bs, c_in, q_len, d_model, pad_size, local_size,
                n_layers, num_heads=2):
    del pad_size  # see TODO(synk) at top of file
    L, D = q_len, d_model
    Rb = c_in * L
    mask, slabs = pack_params(params, c_in=c_in, q_len=q_len, d_model=d_model,
                              local_size=local_size)

    # (bs*c_in, L, D) -> (bs, c_in*L, D): pure leading-dim reshape, no transpose.
    x = src.reshape(bs, Rb, D)

    def layer_spec(a):
        nd = a.ndim
        return pl.BlockSpec((1,) + a.shape[1:],
                            lambda b, l, _nd=nd: (l,) + (0,) * (_nd - 1))

    in_specs = ([pl.BlockSpec((1, Rb, D), lambda b, l: (b, 0, 0)),     # activation
                 pl.BlockSpec((Rb, Rb), lambda b, l: (0, 0))]          # mask (resident)
                + [layer_spec(a) for a in slabs])
    out_spec = pl.BlockSpec((1, Rb, D), lambda b, l: (b, 0, 0))

    # explicit VMEM budget from the packed slabs (+ double-buffer headroom)  [item 8]
    step_bytes = (2 * (_nbytes(x) // bs) + _nbytes(mask)
                  + sum(_nbytes(a) // n_layers for a in slabs) + Rb * D * 4)
    vmem_limit = int(min(100 * 2 ** 20, max(16 * 2 ** 20, 2 * step_bytes + (4 << 20))))

    kern = functools.partial(_tst_encoder_kernel, c_in=c_in, q_len=q_len,
                             d_model=d_model, num_heads=num_heads)
    out = pl.pallas_call(
        kern,
        out_shape=jax.ShapeDtypeStruct((bs, Rb, D), jnp.float32),
        grid_spec=pltpu.PrefetchScalarGridSpec(
            num_scalar_prefetch=0,
            grid=(bs, n_layers),
            in_specs=in_specs,
            out_specs=out_spec,
            scratch_shapes=[pltpu.VMEM((Rb, D), jnp.float32)]),
        compiler_params=pltpu.CompilerParams(
            dimension_semantics=("parallel", "arbitrary"),
            vmem_limit_bytes=vmem_limit),
    )(x, mask, *slabs)

    return out.reshape(bs * c_in, L, D)


# --------------------------------------------------------------------------------------
# Deterministic parameter init (PyTorch-like shapes; D-side Linear weights in x@W form,
# seq-mix weights in PyTorch (out, in) form).
# --------------------------------------------------------------------------------------
def init_params(key, *, q_len, d_model, n_layers):
    D, L = d_model, q_len
    H_MLP, H_RW = 4 * L, 2 * L
    keys = iter(jax.random.split(key, 1024))

    def w(shape, scale=0.05):
        return (scale * jax.random.normal(next(keys), shape)).astype(jnp.float32)

    zeros = lambda s: jnp.zeros(s, jnp.float32)                  # noqa: E731
    ones = lambda s: jnp.ones(s, jnp.float32)                    # noqa: E731

    def mlp():
        return {"w1": w((H_MLP, L)), "b1": zeros((H_MLP,)),
                "w2": w((L, H_MLP)), "b2": zeros((L,))}

    layers = []
    for _ in range(n_layers):
        dwf = {"lin_w": w((4, D, D)), "lin_b": zeros((4, D)),
               "lin_g": ones((4, D)), "lin_beta": zeros((4, D)),
               "rw1": w((H_RW, L)), "rb1": zeros((H_RW,)),
               "rw2": w((L, H_RW)), "rb2": zeros((L,)),
               "proj_w": w((D, D)), "proj_b": zeros((D,))}
        dwfm = {"dwf": dwf, "norm1_g": ones((D,)), "norm1_b": zeros((D,)),
                "mlp": mlp(), "norm2_g": ones((D,)), "norm2_b": zeros((D,))}
        attn = {"wq": w((D, D)), "bq": zeros((D,)),
                "wk": w((D, D)), "bk": zeros((D,)),
                "wv": w((D, D)), "bv": zeros((D,)),
                "wo": w((D, D)), "bo": zeros((D,))}
        bh = {"attn": attn, "norm1_g": ones((D,)), "norm1_b": zeros((D,)),
              "mlp": mlp(), "norm2_g": ones((D,)), "norm2_b": zeros((D,))}
        layers.append({"dwfm": dwfm, "bhcgsam": bh})
    return {"layers": layers}


if __name__ == "__main__":
    bs, c_in = 2, 4
    q_len, d_model = 8, 32
    n_layers = 2
    pad_size, local_size = 4, 4
    num_heads = 2

    key = jax.random.PRNGKey(0)
    kx, kp = jax.random.split(key)
    src = jax.random.normal(kx, (bs * c_in, q_len, d_model), dtype=jnp.float32)
    params = init_params(kp, q_len=q_len, d_model=d_model, n_layers=n_layers)

    encode = jax.jit(functools.partial(
        tst_encoder, bs=bs, c_in=c_in, q_len=q_len, d_model=d_model,
        pad_size=pad_size, local_size=local_size, n_layers=n_layers,
        num_heads=num_heads))

    out = jax.block_until_ready(encode(src, params))
    assert out.shape == (bs * c_in, q_len, d_model), out.shape
    assert bool(jnp.all(jnp.isfinite(out)))
    print("KERNEL_OK")
</pallas_src>

<mosaic_0001>
module attributes {stable_mosaic.version = 11 : i64} {
  func.func @_tst_encoder_kernel(%arg0: i32, %arg1: i32, %arg2: memref<1x32x32xf32, #tpu.memory_space<vmem>>, %arg3: memref<32x32xf32, #tpu.memory_space<vmem>>, %arg4: memref<1x32x96xbf16, #tpu.memory_space<vmem>>, %arg5: memref<1x32x64xbf16, #tpu.memory_space<vmem>>, %arg6: memref<1x16x8xbf16, #tpu.memory_space<vmem>>, %arg7: memref<1x16x1xf32, #tpu.memory_space<vmem>>, %arg8: memref<1x8x16xbf16, #tpu.memory_space<vmem>>, %arg9: memref<1x8x1xf32, #tpu.memory_space<vmem>>, %arg10: memref<1x2x32x8xbf16, #tpu.memory_space<vmem>>, %arg11: memref<1x2x32x1xf32, #tpu.memory_space<vmem>>, %arg12: memref<1x2x8x32xbf16, #tpu.memory_space<vmem>>, %arg13: memref<1x2x8x1xf32, #tpu.memory_space<vmem>>, %arg14: memref<1x32x96xbf16, #tpu.memory_space<vmem>>, %arg15: memref<1x1x96xf32, #tpu.memory_space<vmem>>, %arg16: memref<1x32x32xbf16, #tpu.memory_space<vmem>>, %arg17: memref<1x22x32xf32, #tpu.memory_space<vmem>>, %arg18: memref<1x32x32xf32, #tpu.memory_space<vmem>>, %arg19: memref<32x32xf32, #tpu.memory_space<vmem>>) attributes {dimension_semantics = [#tpu.dimension_semantics<parallel>, #tpu.dimension_semantics<arbitrary>], iteration_bounds = array<i64: 2, 2>, scalar_prefetch = 0 : i64, scratch_operands = 1 : i64, tpu.core_type = #tpu.core_type<tc>, window_params = [{transform_indices = @transform_0, window_bounds = array<i64: 1, 32, 32>}, {pipeline_mode = #tpu.pipeline_mode<synchronous>, transform_indices = @transform_1, window_bounds = array<i64: 32, 32>}, {transform_indices = @transform_2, window_bounds = array<i64: 1, 32, 96>}, {transform_indices = @transform_3, window_bounds = array<i64: 1, 32, 64>}, {transform_indices = @transform_4, window_bounds = array<i64: 1, 16, 8>}, {transform_indices = @transform_5, window_bounds = array<i64: 1, 16, 1>}, {transform_indices = @transform_6, window_bounds = array<i64: 1, 8, 16>}, {transform_indices = @transform_7, window_bounds = array<i64: 1, 8, 1>}, {transform_indices = @transform_8, window_bounds = array<i64: 1, 2, 32, 8>}, {transform_indices = @transform_9, window_bounds = array<i64: 1, 2, 32, 1>}, {transform_indices = @transform_10, window_bounds = array<i64: 1, 2, 8, 32>}, {transform_indices = @transform_11, window_bounds = array<i64: 1, 2, 8, 1>}, {transform_indices = @transform_12, window_bounds = array<i64: 1, 32, 96>}, {transform_indices = @transform_13, window_bounds = array<i64: 1, 1, 96>}, {transform_indices = @transform_14, window_bounds = array<i64: 1, 32, 32>}, {transform_indices = @transform_15, window_bounds = array<i64: 1, 22, 32>}, {transform_indices = @transform_16, window_bounds = array<i64: 1, 32, 32>}]} {
    %c0_i32 = arith.constant 0 : i32
    %0 = arith.cmpi eq, %arg1, %c0_i32 : i32
    %1 = arith.extui %0 : i1 to i32
    %c0_i32_0 = arith.constant 0 : i32
    %2 = arith.cmpi ne, %1, %c0_i32_0 : i32
    scf.if %2 {
      %c0_206 = arith.constant 0 : index
      %c0_207 = arith.constant 0 : index
      %c0_208 = arith.constant 0 : index
      %493 = vector.load %arg2[%c0_206, %c0_207, %c0_208] : memref<1x32x32xf32, #tpu.memory_space<vmem>>, vector<1x32x32xf32>
      %494 = vector.shape_cast %493 : vector<1x32x32xf32> to vector<32x32xf32>
      %c0_209 = arith.constant 0 : index
      %c0_210 = arith.constant 0 : index
      %495 = vector.load %arg19[%c0_209, %c0_210] : memref<32x32xf32, #tpu.memory_space<vmem>>, vector<32x32xf32>
      tpu.vector_store %arg19[%c0_209, %c0_210], %494 {strides = array<i32>} : memref<32x32xf32, #tpu.memory_space<vmem>>, vector<32x32xf32>,
    } else {
    }
    %c0 = arith.constant 0 : index
    %c0_1 = arith.constant 0 : index
    %3 = vector.load %arg19[%c0, %c0_1] : memref<32x32xf32, #tpu.memory_space<vmem>>, vector<32x32xf32>
    %c0_2 = arith.constant 0 : index
    %c0_3 = arith.constant 0 : index
    %4 = vector.load %arg3[%c0_2, %c0_3] : memref<32x32xf32, #tpu.memory_space<vmem>>, vector<32x32xf32>
    %c0_4 = arith.constant 0 : index
    %c0_5 = arith.constant 0 : index
    %c0_6 = arith.constant 0 : index
    %5 = vector.load %arg4[%c0_4, %c0_5, %c0_6] : memref<1x32x96xbf16, #tpu.memory_space<vmem>>, vector<1x32x96xbf16>
    %6 = vector.shape_cast %5 : vector<1x32x96xbf16> to vector<32x96xbf16>
    %7 = arith.truncf %3 : vector<32x32xf32> to vector<32x32xbf16>
    %cst = arith.constant dense<0.000000e+00> : vector<32x96xf32>
    %8 = tpu.matmul %7, %6, %cst {dimension_numbers = #tpu.dot_dimension_numbers<[1], [0], [0], [1], [0, 0, 1, 1], [], []>} : vector<32x32xbf16>, vector<32x96xbf16>, vector<32x96xf32> -> vector<32x96xf32>
    %9 = vector.extract_strided_slice %8 {offsets = [0, 0], sizes = [32, 32], strides = [1, 1]} : vector<32x96xf32> to vector<32x32xf32>
    %c0_7 = arith.constant 0 : index
    %c0_8 = arith.constant 0 : index
    %c0_9 = arith.constant 0 : index
    %10 = vector.load %arg17[%c0_7, %c0_8, %c0_9] : memref<1x22x32xf32, #tpu.memory_space<vmem>>, vector<1x1x32xf32>
    %11 = vector.shape_cast %10 : vector<1x1x32xf32> to vector<1x32xf32>
    %12 = vector.broadcast %11 : vector<1x32xf32> to vector<32x32xf32>
    %13 = arith.addf %9, %12 : vector<32x32xf32>
    %c0_10 = arith.constant 0 : index
    %c4 = arith.constant 4 : index
    %c0_11 = arith.constant 0 : index
    %14 = vector.load %arg17[%c0_10, %c4, %c0_11] : memref<1x22x32xf32, #tpu.memory_space<vmem>>, vector<1x1x32xf32>
    %15 = vector.shape_cast %14 : vector<1x1x32xf32> to vector<1x32xf32>
    %c0_12 = arith.constant 0 : index
    %c8 = arith.constant 8 : index
    %c0_13 = arith.constant 0 : index
    %16 = vector.load %arg17[%c0_12, %c8, %c0_13] : memref<1x22x32xf32, #tpu.memory_space<vmem>>, vector<1x1x32xf32>
    %17 = vector.shape_cast %16 : vector<1x1x32xf32> to vector<1x32xf32>
    %cst_14 = arith.constant dense<0.000000e+00> : vector<32xf32>
    %18 = vector.multi_reduction <add>, %13, %cst_14 [1] : vector<32x32xf32> to vector<32xf32>
    %19 = vector.shape_cast %18 : vector<32xf32> to vector<32x1xf32>
    %cst_15 = arith.constant 3.200000e+01 : f32
    %20 = vector.broadcast %cst_15 : f32 to vector<32x1xf32>
    %21 = arith.divf %19, %20 : vector<32x1xf32>
    %22 = vector.broadcast %21 : vector<32x1xf32> to vector<32x32xf32>
    %23 = arith.subf %13, %22 : vector<32x32xf32>
    %24 = arith.mulf %23, %23 : vector<32x32xf32>
    %cst_16 = arith.constant dense<0.000000e+00> : vector<32xf32>
    %25 = vector.multi_reduction <add>, %24, %cst_16 [1] : vector<32x32xf32> to vector<32xf32>
    %26 = vector.shape_cast %25 : vector<32xf32> to vector<32x1xf32>
    %cst_17 = arith.constant 3.200000e+01 : f32
    %27 = vector.broadcast %cst_17 : f32 to vector<32x1xf32>
    %28 = arith.divf %26, %27 : vector<32x1xf32>
    %29 = vector.broadcast %21 : vector<32x1xf32> to vector<32x32xf32>
    %30 = arith.subf %13, %29 : vector<32x32xf32>
    %cst_18 = arith.constant 9.99999974E-6 : f32
    %31 = vector.broadcast %cst_18 : f32 to vector<32x1xf32>
    %32 = arith.addf %28, %31 : vector<32x1xf32>
    %33 = math.rsqrt %32 : vector<32x1xf32>
    %34 = vector.broadcast %33 : vector<32x1xf32> to vector<32x32xf32>
    %35 = arith.mulf %30, %34 : vector<32x32xf32>
    %36 = vector.broadcast %15 : vector<1x32xf32> to vector<32x32xf32>
    %37 = arith.mulf %35, %36 : vector<32x32xf32>
    %38 = vector.broadcast %17 : vector<1x32xf32> to vector<32x32xf32>
    %39 = arith.addf %37, %38 : vector<32x32xf32>
    %cst_19 = arith.constant 0.000000e+00 : f32
    %40 = vector.broadcast %cst_19 : f32 to vector<32x32xf32>
    %41 = arith.maximumf %39, %40 : vector<32x32xf32>
    %42 = vector.extract_strided_slice %8 {offsets = [0, 32], sizes = [32, 32], strides = [1, 1]} : vector<32x96xf32> to vector<32x32xf32>
    %c0_20 = arith.constant 0 : index
    %c1 = arith.constant 1 : index
    %c0_21 = arith.constant 0 : index
    %43 = vector.load %arg17[%c0_20, %c1, %c0_21] : memref<1x22x32xf32, #tpu.memory_space<vmem>>, vector<1x1x32xf32>
    %44 = vector.shape_cast %43 : vector<1x1x32xf32> to vector<1x32xf32>
    %45 = vector.broadcast %44 : vector<1x32xf32> to vector<32x32xf32>
    %46 = arith.addf %42, %45 : vector<32x32xf32>
    %c0_22 = arith.constant 0 : index
    %c5 = arith.constant 5 : index
    %c0_23 = arith.constant 0 : index
    %47 = vector.load %arg17[%c0_22, %c5, %c0_23] : memref<1x22x32xf32, #tpu.memory_space<vmem>>, vector<1x1x32xf32>
    %48 = vector.shape_cast %47 : vector<1x1x32xf32> to vector<1x32xf32>
    %c0_24 = arith.constant 0 : index
    %c9 = arith.constant 9 : index
    %c0_25 = arith.constant 0 : index
    %49 = vector.load %arg17[%c0_24, %c9, %c0_25] : memref<1x22x32xf32, #tpu.memory_space<vmem>>, vector<1x1x32xf32>
    %50 = vector.shape_cast %49 : vector<1x1x32xf32> to vector<1x32xf32>
    %cst_26 = arith.constant dense<0.000000e+00> : vector<32xf32>
    %51 = vector.multi_reduction <add>, %46, %cst_26 [1] : vector<32x32xf32> to vector<32xf32>
    %52 = vector.shape_cast %51 : vector<32xf32> to vector<32x1xf32>
    %cst_27 = arith.constant 3.200000e+01 : f32
    %53 = vector.broadcast %cst_27 : f32 to vector<32x1xf32>
    %54 = arith.divf %52, %53 : vector<32x1xf32>
    %55 = vector.broadcast %54 : vector<32x1xf32> to vector<32x32xf32>
    %56 = arith.subf %46, %55 : vector<32x32xf32>
    %57 = arith.mulf %56, %56 : vector<32x32xf32>
    %cst_28 = arith.constant dense<0.000000e+00> : vector<32xf32>
    %58 = vector.multi_reduction <add>, %57, %cst_28 [1] : vector<32x32xf32> to vector<32xf32>
    %59 = vector.shape_cast %58 : vector<32xf32> to vector<32x1xf32>
    %cst_29 = arith.constant 3.200000e+01 : f32
    %60 = vector.broadcast %cst_29 : f32 to vector<32x1xf32>
    %61 = arith.divf %59, %60 : vector<32x1xf32>
    %62 = vector.broadcast %54 : vector<32x1xf32> to vector<32x32xf32>
    %63 = arith.subf %46, %62 : vector<32x32xf32>
    %cst_30 = arith.constant 9.99999974E-6 : f32
    %64 = vector.broadcast %cst_30 : f32 to vector<32x1xf32>
    %65 = arith.addf %61, %64 : vector<32x1xf32>
    %66 = math.rsqrt %65 : vector<32x1xf32>
    %67 = vector.broadcast %66 : vector<32x1xf32> to vector<32x32xf32>
    %68 = arith.mulf %63, %67 : vector<32x32xf32>
    %69 = vector.broadcast %48 : vector<1x32xf32> to vector<32x32xf32>
    %70 = arith.mulf %68, %69 : vector<32x32xf32>
    %71 = vector.broadcast %50 : vector<1x32xf32> to vector<32x32xf32>
    %72 = arith.addf %70, %71 : vector<32x32xf32>
    %cst_31 = arith.constant 0.000000e+00 : f32
    %73 = vector.broadcast %cst_31 : f32 to vector<32x32xf32>
    %74 = arith.maximumf %72, %73 : vector<32x32xf32>
    %75 = vector.extract_strided_slice %8 {offsets = [0, 64], sizes = [32, 32], strides = [1, 1]} : vector<32x96xf32> to vector<32x32xf32>
    %c0_32 = arith.constant 0 : index
    %c2 = arith.constant 2 : index
    %c0_33 = arith.constant 0 : index
    %76 = vector.load %arg17[%c0_32, %c2, %c0_33] : memref<1x22x32xf32, #tpu.memory_space<vmem>>, vector<1x1x32xf32>
    %77 = vector.shape_cast %76 : vector<1x1x32xf32> to vector<1x32xf32>
    %78 = vector.broadcast %77 : vector<1x32xf32> to vector<32x32xf32>
    %79 = arith.addf %75, %78 : vector<32x32xf32>
    %c0_34 = arith.constant 0 : index
    %c6 = arith.constant 6 : index
    %c0_35 = arith.constant 0 : index
    %80 = vector.load %arg17[%c0_34, %c6, %c0_35] : memref<1x22x32xf32, #tpu.memory_space<vmem>>, vector<1x1x32xf32>
    %81 = vector.shape_cast %80 : vector<1x1x32xf32> to vector<1x32xf32>
    %c0_36 = arith.constant 0 : index
    %c10 = arith.constant 10 : index
    %c0_37 = arith.constant 0 : index
    %82 = vector.load %arg17[%c0_36, %c10, %c0_37] : memref<1x22x32xf32, #tpu.memory_space<vmem>>, vector<1x1x32xf32>
    %83 = vector.shape_cast %82 : vector<1x1x32xf32> to vector<1x32xf32>
    %cst_38 = arith.constant dense<0.000000e+00> : vector<32xf32>
    %84 = vector.multi_reduction <add>, %79, %cst_38 [1] : vector<32x32xf32> to vector<32xf32>
    %85 = vector.shape_cast %84 : vector<32xf32> to vector<32x1xf32>
    %cst_39 = arith.constant 3.200000e+01 : f32
    %86 = vector.broadcast %cst_39 : f32 to vector<32x1xf32>
    %87 = arith.divf %85, %86 : vector<32x1xf32>
    %88 = vector.broadcast %87 : vector<32x1xf32> to vector<32x32xf32>
    %89 = arith.subf %79, %88 : vector<32x32xf32>
    %90 = arith.mulf %89, %89 : vector<32x32xf32>
    %cst_40 = arith.constant dense<0.000000e+00> : vector<32xf32>
    %91 = vector.multi_reduction <add>, %90, %cst_40 [1] : vector<32x32xf32> to vector<32xf32>
    %92 = vector.shape_cast %91 : vector<32xf32> to vector<32x1xf32>
    %cst_41 = arith.constant 3.200000e+01 : f32
    %93 = vector.broadcast %cst_41 : f32 to vector<32x1xf32>
    %94 = arith.divf %92, %93 : vector<32x1xf32>
    %95 = vector.broadcast %87 : vector<32x1xf32> to vector<32x32xf32>
    %96 = arith.subf %79, %95 : vector<32x32xf32>
    %cst_42 = arith.constant 9.99999974E-6 : f32
    %97 = vector.broadcast %cst_42 : f32 to vector<32x1xf32>
    %98 = arith.addf %94, %97 : vector<32x1xf32>
    %99 = math.rsqrt %98 : vector<32x1xf32>
    %100 = vector.broadcast %99 : vector<32x1xf32> to vector<32x32xf32>
    %101 = arith.mulf %96, %100 : vector<32x32xf32>
    %102 = vector.broadcast %81 : vector<1x32xf32> to vector<32x32xf32>
    %103 = arith.mulf %101, %102 : vector<32x32xf32>
    %104 = vector.broadcast %83 : vector<1x32xf32> to vector<32x32xf32>
    %105 = arith.addf %103, %104 : vector<32x32xf32>
    %cst_43 = arith.constant 0.000000e+00 : f32
    %106 = vector.broadcast %cst_43 : f32 to vector<32x32xf32>
    %107 = arith.maximumf %105, %106 : vector<32x32xf32>
    %cst_44 = arith.constant 0.636619746 : f32
    %108 = vector.broadcast %cst_44 : f32 to vector<32x32xf32>
    %109 = arith.mulf %41, %108 : vector<32x32xf32>
    %cst_45 = arith.constant 5.000000e-01 : f32
    %110 = vector.broadcast %cst_45 : f32 to vector<32x32xf32>
    %111 = arith.addf %109, %110 : vector<32x32xf32>
    %112 = math.floor %111 : vector<32x32xf32>
    %cst_46 = arith.constant 1.57079637 : f32
    %113 = vector.broadcast %cst_46 : f32 to vector<32x32xf32>
    %114 = arith.mulf %112, %113 : vector<32x32xf32>
    %115 = arith.subf %41, %114 : vector<32x32xf32>
    %cst_47 = arith.constant 2.500000e-01 : f32
    %116 = vector.broadcast %cst_47 : f32 to vector<32x32xf32>
    %117 = arith.mulf %112, %116 : vector<32x32xf32>
    %118 = math.floor %117 : vector<32x32xf32>
    %cst_48 = arith.constant 4.000000e+00 : f32
    %119 = vector.broadcast %cst_48 : f32 to vector<32x32xf32>
    %120 = arith.mulf %119, %118 : vector<32x32xf32>
    %121 = arith.subf %112, %120 : vector<32x32xf32>
    %122 = arith.mulf %115, %115 : vector<32x32xf32>
    %cst_49 = arith.constant -1.98412701E-4 : f32
    %123 = vector.broadcast %cst_49 : f32 to vector<32x32xf32>
    %124 = arith.mulf %122, %123 : vector<32x32xf32>
    %cst_50 = arith.constant 0.00833333377 : f32
    %125 = vector.broadcast %cst_50 : f32 to vector<32x32xf32>
    %126 = arith.addf %125, %124 : vector<32x32xf32>
    %127 = arith.mulf %122, %126 : vector<32x32xf32>
    %cst_51 = arith.constant -0.166666672 : f32
    %128 = vector.broadcast %cst_51 : f32 to vector<32x32xf32>
    %129 = arith.addf %128, %127 : vector<32x32xf32>
    %130 = arith.mulf %122, %129 : vector<32x32xf32>
    %cst_52 = arith.constant 1.000000e+00 : f32
    %131 = vector.broadcast %cst_52 : f32 to vector<32x32xf32>
    %132 = arith.addf %131, %130 : vector<32x32xf32>
    %133 = arith.mulf %115, %132 : vector<32x32xf32>
    %cst_53 = arith.constant 2.48015876E-5 : f32
    %134 = vector.broadcast %cst_53 : f32 to vector<32x32xf32>
    %135 = arith.mulf %122, %134 : vector<32x32xf32>
    %cst_54 = arith.constant -0.00138888892 : f32
    %136 = vector.broadcast %cst_54 : f32 to vector<32x32xf32>
    %137 = arith.addf %136, %135 : vector<32x32xf32>
    %138 = arith.mulf %122, %137 : vector<32x32xf32>
    %cst_55 = arith.constant 0.0416666679 : f32
    %139 = vector.broadcast %cst_55 : f32 to vector<32x32xf32>
    %140 = arith.addf %139, %138 : vector<32x32xf32>
    %141 = arith.mulf %122, %140 : vector<32x32xf32>
    %cst_56 = arith.constant -5.000000e-01 : f32
    %142 = vector.broadcast %cst_56 : f32 to vector<32x32xf32>
    %143 = arith.addf %142, %141 : vector<32x32xf32>
    %144 = arith.mulf %122, %143 : vector<32x32xf32>
    %cst_57 = arith.constant 1.000000e+00 : f32
    %145 = vector.broadcast %cst_57 : f32 to vector<32x32xf32>
    %146 = arith.addf %145, %144 : vector<32x32xf32>
    %cst_58 = arith.constant 0.000000e+00 : f32
    %147 = vector.broadcast %cst_58 : f32 to vector<32x32xf32>
    %148 = arith.cmpf oeq, %121, %147 : vector<32x32xf32>
    %cst_59 = arith.constant 1.000000e+00 : f32
    %149 = vector.broadcast %cst_59 : f32 to vector<32x32xf32>
    %150 = arith.cmpf oeq, %121, %149 : vector<32x32xf32>
    %cst_60 = arith.constant 2.000000e+00 : f32
    %151 = vector.broadcast %cst_60 : f32 to vector<32x32xf32>
    %152 = arith.cmpf oeq, %121, %151 : vector<32x32xf32>
    %cst_61 = arith.constant 0.000000e+00 : f32
    %153 = vector.broadcast %cst_61 : f32 to vector<32x32xf32>
    %154 = arith.subf %153, %133 : vector<32x32xf32>
    %cst_62 = arith.constant 0.000000e+00 : f32
    %155 = vector.broadcast %cst_62 : f32 to vector<32x32xf32>
    %156 = arith.subf %155, %146 : vector<32x32xf32>
    %157 = arith.select %152, %154, %156 : vector<32x32xi1>, vector<32x32xf32>
    %158 = arith.select %150, %146, %157 : vector<32x32xi1>, vector<32x32xf32>
    %159 = arith.select %148, %133, %158 : vector<32x32xi1>, vector<32x32xf32>
    %cst_63 = arith.constant 0.000000e+00 : f32
    %160 = vector.broadcast %cst_63 : f32 to vector<32x32xf32>
    %161 = arith.cmpf oeq, %121, %160 : vector<32x32xf32>
    %cst_64 = arith.constant 1.000000e+00 : f32
    %162 = vector.broadcast %cst_64 : f32 to vector<32x32xf32>
    %163 = arith.cmpf oeq, %121, %162 : vector<32x32xf32>
    %cst_65 = arith.constant 0.000000e+00 : f32
    %164 = vector.broadcast %cst_65 : f32 to vector<32x32xf32>
    %165 = arith.subf %164, %133 : vector<32x32xf32>
    %cst_66 = arith.constant 2.000000e+00 : f32
    %166 = vector.broadcast %cst_66 : f32 to vector<32x32xf32>
    %167 = arith.cmpf oeq, %121, %166 : vector<32x32xf32>
    %cst_67 = arith.constant 0.000000e+00 : f32
    %168 = vector.broadcast %cst_67 : f32 to vector<32x32xf32>
    %169 = arith.subf %168, %146 : vector<32x32xf32>
    %170 = arith.select %167, %169, %133 : vector<32x32xi1>, vector<32x32xf32>
    %171 = arith.select %163, %165, %170 : vector<32x32xi1>, vector<32x32xf32>
    %172 = arith.select %161, %146, %171 : vector<32x32xi1>, vector<32x32xf32>
    %173 = arith.mulf %74, %172 : vector<32x32xf32>
    %174 = arith.mulf %107, %159 : vector<32x32xf32>
    %175 = arith.addf %173, %174 : vector<32x32xf32>
    %c0_68 = arith.constant 0 : index
    %c0_69 = arith.constant 0 : index
    %c0_70 = arith.constant 0 : index
    %176 = vector.load %arg5[%c0_68, %c0_69, %c0_70] : memref<1x32x64xbf16, #tpu.memory_space<vmem>>, vector<1x32x64xbf16>
    %177 = vector.shape_cast %176 : vector<1x32x64xbf16> to vector<32x64xbf16>
    %178 = vector.extract_strided_slice %177 {offsets = [0, 0], sizes = [32, 32], strides = [1, 1]} : vector<32x64xbf16> to vector<32x32xbf16>
    %179 = arith.truncf %175 : vector<32x32xf32> to vector<32x32xbf16>
    %cst_71 = arith.constant dense<0.000000e+00> : vector<32x32xf32>
    %180 = tpu.matmul %179, %178, %cst_71 {dimension_numbers = #tpu.dot_dimension_numbers<[1], [0], [0], [1], [0, 0, 1, 1], [], []>} : vector<32x32xbf16>, vector<32x32xbf16>, vector<32x32xf32> -> vector<32x32xf32>
    %c0_72 = arith.constant 0 : index
    %c3 = arith.constant 3 : index
    %c0_73 = arith.constant 0 : index
    %181 = vector.load %arg17[%c0_72, %c3, %c0_73] : memref<1x22x32xf32, #tpu.memory_space<vmem>>, vector<1x1x32xf32>
    %182 = vector.shape_cast %181 : vector<1x1x32xf32> to vector<1x32xf32>
    %183 = vector.broadcast %182 : vector<1x32xf32> to vector<32x32xf32>
    %184 = arith.addf %180, %183 : vector<32x32xf32>
    %c0_74 = arith.constant 0 : index
    %c7 = arith.constant 7 : index
    %c0_75 = arith.constant 0 : index
    %185 = vector.load %arg17[%c0_74, %c7, %c0_75] : memref<1x22x32xf32, #tpu.memory_space<vmem>>, vector<1x1x32xf32>
    %186 = vector.shape_cast %185 : vector<1x1x32xf32> to vector<1x32xf32>
    %c0_76 = arith.constant 0 : index
    %c11 = arith.constant 11 : index
    %c0_77 = arith.constant 0 : index
    %187 = vector.load %arg17[%c0_76, %c11, %c0_77] : memref<1x22x32xf32, #tpu.memory_space<vmem>>, vector<1x1x32xf32>
    %188 = vector.shape_cast %187 : vector<1x1x32xf32> to vector<1x32xf32>
    %cst_78 = arith.constant dense<0.000000e+00> : vector<32xf32>
    %189 = vector.multi_reduction <add>, %184, %cst_78 [1] : vector<32x32xf32> to vector<32xf32>
    %190 = vector.shape_cast %189 : vector<32xf32> to vector<32x1xf32>
    %cst_79 = arith.constant 3.200000e+01 : f32
    %191 = vector.broadcast %cst_79 : f32 to vector<32x1xf32>
    %192 = arith.divf %190, %191 : vector<32x1xf32>
    %193 = vector.broadcast %192 : vector<32x1xf32> to vector<32x32xf32>
    %194 = arith.subf %184, %193 : vector<32x32xf32>
    %195 = arith.mulf %194, %194 : vector<32x32xf32>
    %cst_80 = arith.constant dense<0.000000e+00> : vector<32xf32>
    %196 = vector.multi_reduction <add>, %195, %cst_80 [1] : vector<32x32xf32> to vector<32xf32>
    %197 = vector.shape_cast %196 : vector<32xf32> to vector<32x1xf32>
    %cst_81 = arith.constant 3.200000e+01 : f32
    %198 = vector.broadcast %cst_81 : f32 to vector<32x1xf32>
    %199 = arith.divf %197, %198 : vector<32x1xf32>
    %200 = vector.broadcast %192 : vector<32x1xf32> to vector<32x32xf32>
    %201 = arith.subf %184, %200 : vector<32x32xf32>
    %cst_82 = arith.constant 9.99999974E-6 : f32
    %202 = vector.broadcast %cst_82 : f32 to vector<32x1xf32>
    %203 = arith.addf %199, %202 : vector<32x1xf32>
    %204 = math.rsqrt %203 : vector<32x1xf32>
    %205 = vector.broadcast %204 : vector<32x1xf32> to vector<32x32xf32>
    %206 = arith.mulf %201, %205 : vector<32x32xf32>
    %207 = vector.broadcast %186 : vector<1x32xf32> to vector<32x32xf32>
    %208 = arith.mulf %206, %207 : vector<32x32xf32>
    %209 = vector.broadcast %188 : vector<1x32xf32> to vector<32x32xf32>
    %210 = arith.addf %208, %209 : vector<32x32xf32>
    %cst_83 = arith.constant 0.000000e+00 : f32
    %211 = vector.broadcast %cst_83 : f32 to vector<32x32xf32>
    %212 = arith.maximumf %210, %211 : vector<32x32xf32>
    %213 = vector.shape_cast %212 : vector<32x32xf32> to vector<4x8x32xf32>
    %cst_84 = arith.constant dense<0.000000e+00> : vector<4x8xf32>
    %214 = vector.multi_reduction <add>, %213, %cst_84 [2] : vector<4x8x32xf32> to vector<4x8xf32>
    %215 = vector.shape_cast %214 : vector<4x8xf32> to vector<4x8x1xf32>
    %cst_85 = arith.constant 3.200000e+01 : f32
    %216 = vector.broadcast %cst_85 : f32 to vector<4x8x1xf32>
    %217 = arith.divf %215, %216 : vector<4x8x1xf32>
    %c0_86 = arith.constant 0 : index
    %c0_87 = arith.constant 0 : index
    %c0_88 = arith.constant 0 : index
    %218 = vector.load %arg6[%c0_86, %c0_87, %c0_88] : memref<1x16x8xbf16, #tpu.memory_space<vmem>>, vector<1x16x8xbf16>
    %219 = vector.shape_cast %218 : vector<1x16x8xbf16> to vector<16x8xbf16>
    %220 = vector.shape_cast %219 : vector<16x8xbf16> to vector<1x16x8xbf16>
    %221 = vector.shape_cast %220 : vector<1x16x8xbf16> to vector<1x16x8xbf16>
    %222 = vector.broadcast %221 : vector<1x16x8xbf16> to vector<4x16x8xbf16>
    %223 = arith.truncf %217 : vector<4x8x1xf32> to vector<4x8x1xbf16>
    %cst_89 = arith.constant dense<0.000000e+00> : vector<4x16x1xf32>
    %224 = tpu.matmul %222, %223, %cst_89 {dimension_numbers = #tpu.dot_dimension_numbers<[2], [1], [1], [2], [0, 0, 0, 1, 1, 2], [0], [0]>} : vector<4x16x8xbf16>, vector<4x8x1xbf16>, vector<4x16x1xf32> -> vector<4x16x1xf32>
    %c0_90 = arith.constant 0 : index
    %c0_91 = arith.constant 0 : index
    %c0_92 = arith.constant 0 : index
    %225 = vector.load %arg7[%c0_90, %c0_91, %c0_92] : memref<1x16x1xf32, #tpu.memory_space<vmem>>, vector<1x16x1xf32>
    %226 = vector.shape_cast %225 : vector<1x16x1xf32> to vector<16x1xf32>
    %227 = vector.shape_cast %226 : vector<16x1xf32> to vector<1x16x1xf32>
    %228 = vector.broadcast %227 : vector<1x16x1xf32> to vector<4x16x1xf32>
    %229 = arith.addf %224, %228 : vector<4x16x1xf32>
    %cst_93 = arith.constant 0.000000e+00 : f32
    %230 = vector.broadcast %cst_93 : f32 to vector<4x16x1xf32>
    %231 = arith.maximumf %229, %230 : vector<4x16x1xf32>
    %c0_94 = arith.constant 0 : index
    %c0_95 = arith.constant 0 : index
    %c0_96 = arith.constant 0 : index
    %232 = vector.load %arg8[%c0_94, %c0_95, %c0_96] : memref<1x8x16xbf16, #tpu.memory_space<vmem>>, vector<1x8x16xbf16>
    %233 = vector.shape_cast %232 : vector<1x8x16xbf16> to vector<8x16xbf16>
    %234 = vector.shape_cast %233 : vector<8x16xbf16> to vector<1x8x16xbf16>
    %235 = vector.shape_cast %234 : vector<1x8x16xbf16> to vector<1x8x16xbf16>
    %236 = vector.broadcast %235 : vector<1x8x16xbf16> to vector<4x8x16xbf16>
    %237 = arith.truncf %231 : vector<4x16x1xf32> to vector<4x16x1xbf16>
    %cst_97 = arith.constant dense<0.000000e+00> : vector<4x8x1xf32>
    %238 = tpu.matmul %236, %237, %cst_97 {dimension_numbers = #tpu.dot_dimension_numbers<[2], [1], [1], [2], [0, 0, 0, 1, 1, 2], [0], [0]>} : vector<4x8x16xbf16>, vector<4x16x1xbf16>, vector<4x8x1xf32> -> vector<4x8x1xf32>
    %c0_98 = arith.constant 0 : index
    %c0_99 = arith.constant 0 : index
    %c0_100 = arith.constant 0 : index
    %239 = vector.load %arg9[%c0_98, %c0_99, %c0_100] : memref<1x8x1xf32, #tpu.memory_space<vmem>>, vector<1x8x1xf32>
    %240 = vector.shape_cast %239 : vector<1x8x1xf32> to vector<8x1xf32>
    %241 = vector.shape_cast %240 : vector<8x1xf32> to vector<1x8x1xf32>
    %242 = vector.broadcast %241 : vector<1x8x1xf32> to vector<4x8x1xf32>
    %243 = arith.addf %238, %242 : vector<4x8x1xf32>
    %cst_101 = arith.constant dense<0xFF800000> : vector<4x1xf32>
    %244 = vector.multi_reduction <maximumf>, %243, %cst_101 [1] : vector<4x8x1xf32> to vector<4x1xf32>
    %245 = vector.shape_cast %244 : vector<4x1xf32> to vector<4x1x1xf32>
    %246 = vector.broadcast %245 : vector<4x1x1xf32> to vector<4x8x1xf32>
    %247 = arith.subf %243, %246 : vector<4x8x1xf32>
    %248 = math.exp %247 : vector<4x8x1xf32>
    %cst_102 = arith.constant dense<0.000000e+00> : vector<4x1xf32>
    %249 = vector.multi_reduction <add>, %248, %cst_102 [1] : vector<4x8x1xf32> to vector<4x1xf32>
    %250 = vector.shape_cast %249 : vector<4x1xf32> to vector<4x1x1xf32>
    %251 = tpu.reciprocal %250 {approx = true} : vector<4x1x1xf32> -> vector<4x1x1xf32>
    %252 = vector.broadcast %251 : vector<4x1x1xf32> to vector<4x8x1xf32>
    %253 = arith.mulf %248, %252 : vector<4x8x1xf32>
    %254 = vector.broadcast %253 : vector<4x8x1xf32> to vector<4x8x32xf32>
    %255 = arith.mulf %213, %254 : vector<4x8x32xf32>
    %256 = vector.shape_cast %255 : vector<4x8x32xf32> to vector<32x32xf32>
    %257 = vector.extract_strided_slice %177 {offsets = [0, 32], sizes = [32, 32], strides = [1, 1]} : vector<32x64xbf16> to vector<32x32xbf16>
    %258 = arith.truncf %256 : vector<32x32xf32> to vector<32x32xbf16>
    %cst_103 = arith.constant dense<0.000000e+00> : vector<32x32xf32>
    %259 = tpu.matmul %258, %257, %cst_103 {dimension_numbers = #tpu.dot_dimension_numbers<[1], [0], [0], [1], [0, 0, 1, 1], [], []>} : vector<32x32xbf16>, vector<32x32xbf16>, vector<32x32xf32> -> vector<32x32xf32>
    %c0_104 = arith.constant 0 : index
    %c12 = arith.constant 12 : index
    %c0_105 = arith.constant 0 : index
    %260 = vector.load %arg17[%c0_104, %c12, %c0_105] : memref<1x22x32xf32, #tpu.memory_space<vmem>>, vector<1x1x32xf32>
    %261 = vector.shape_cast %260 : vector<1x1x32xf32> to vector<1x32xf32>
    %262 = vector.broadcast %261 : vector<1x32xf32> to vector<32x32xf32>
    %263 = arith.addf %259, %262 : vector<32x32xf32>
    %264 = arith.addf %3, %263 : vector<32x32xf32>
    %c0_106 = arith.constant 0 : index
    %c13 = arith.constant 13 : index
    %c0_107 = arith.constant 0 : index
    %265 = vector.load %arg17[%c0_106, %c13, %c0_107] : memref<1x22x32xf32, #tpu.memory_space<vmem>>, vector<1x1x32xf32>
    %266 = vector.shape_cast %265 : vector<1x1x32xf32> to vector<1x32xf32>
    %c0_108 = arith.constant 0 : index
    %c14 = arith.constant 14 : index
    %c0_109 = arith.constant 0 : index
    %267 = vector.load %arg17[%c0_108, %c14, %c0_109] : memref<1x22x32xf32, #tpu.memory_space<vmem>>, vector<1x1x32xf32>
    %268 = vector.shape_cast %267 : vector<1x1x32xf32> to vector<1x32xf32>
    %cst_110 = arith.constant dense<0.000000e+00> : vector<32xf32>
    %269 = vector.multi_reduction <add>, %264, %cst_110 [1] : vector<32x32xf32> to vector<32xf32>
    %270 = vector.shape_cast %269 : vector<32xf32> to vector<32x1xf32>
    %cst_111 = arith.constant 3.200000e+01 : f32
    %271 = vector.broadcast %cst_111 : f32 to vector<32x1xf32>
    %272 = arith.divf %270, %271 : vector<32x1xf32>
    %273 = vector.broadcast %272 : vector<32x1xf32> to vector<32x32xf32>
    %274 = arith.subf %264, %273 : vector<32x32xf32>
    %275 = arith.mulf %274, %274 : vector<32x32xf32>
    %cst_112 = arith.constant dense<0.000000e+00> : vector<32xf32>
    %276 = vector.multi_reduction <add>, %275, %cst_112 [1] : vector<32x32xf32> to vector<32xf32>
    %277 = vector.shape_cast %276 : vector<32xf32> to vector<32x1xf32>
    %cst_113 = arith.constant 3.200000e+01 : f32
    %278 = vector.broadcast %cst_113 : f32 to vector<32x1xf32>
    %279 = arith.divf %277, %278 : vector<32x1xf32>
    %280 = vector.broadcast %272 : vector<32x1xf32> to vector<32x32xf32>
    %281 = arith.subf %264, %280 : vector<32x32xf32>
    %cst_114 = arith.constant 9.99999974E-6 : f32
    %282 = vector.broadcast %cst_114 : f32 to vector<32x1xf32>
    %283 = arith.addf %279, %282 : vector<32x1xf32>
    %284 = math.rsqrt %283 : vector<32x1xf32>
    %285 = vector.broadcast %284 : vector<32x1xf32> to vector<32x32xf32>
    %286 = arith.mulf %281, %285 : vector<32x32xf32>
    %287 = vector.broadcast %266 : vector<1x32xf32> to vector<32x32xf32>
    %288 = arith.mulf %286, %287 : vector<32x32xf32>
    %289 = vector.broadcast %268 : vector<1x32xf32> to vector<32x32xf32>
    %290 = arith.addf %288, %289 : vector<32x32xf32>
    %c0_115 = arith.constant 0 : index
    %c15 = arith.constant 15 : index
    %c0_116 = arith.constant 0 : index
    %291 = vector.load %arg17[%c0_115, %c15, %c0_116] : memref<1x22x32xf32, #tpu.memory_space<vmem>>, vector<1x1x32xf32>
    %292 = vector.shape_cast %291 : vector<1x1x32xf32> to vector<1x32xf32>
    %c0_117 = arith.constant 0 : index
    %c16 = arith.constant 16 : index
    %c0_118 = arith.constant 0 : index
    %293 = vector.load %arg17[%c0_117, %c16, %c0_118] : memref<1x22x32xf32, #tpu.memory_space<vmem>>, vector<1x1x32xf32>
    %294 = vector.shape_cast %293 : vector<1x1x32xf32> to vector<1x32xf32>
    %c0_119 = arith.constant 0 : index
    %c0_120 = arith.constant 0 : index
    %c0_121 = arith.constant 0 : index
    %c0_122 = arith.constant 0 : index
    %295 = vector.load %arg10[%c0_119, %c0_120, %c0_121, %c0_122] : memref<1x2x32x8xbf16, #tpu.memory_space<vmem>>, vector<1x1x32x8xbf16>
    %296 = vector.shape_cast %295 : vector<1x1x32x8xbf16> to vector<32x8xbf16>
    %c0_123 = arith.constant 0 : index
    %c0_124 = arith.constant 0 : index
    %c0_125 = arith.constant 0 : index
    %c0_126 = arith.constant 0 : index
    %297 = vector.load %arg12[%c0_123, %c0_124, %c0_125, %c0_126] : memref<1x2x8x32xbf16, #tpu.memory_space<vmem>>, vector<1x1x8x32xbf16>
    %298 = vector.shape_cast %297 : vector<1x1x8x32xbf16> to vector<8x32xbf16>
    %c0_127 = arith.constant 0 : index
    %c0_128 = arith.constant 0 : index
    %c0_129 = arith.constant 0 : index
    %c0_130 = arith.constant 0 : index
    %299 = vector.load %arg11[%c0_127, %c0_128, %c0_129, %c0_130] : memref<1x2x32x1xf32, #tpu.memory_space<vmem>>, vector<1x1x32x1xf32>
    %300 = vector.shape_cast %299 : vector<1x1x32x1xf32> to vector<32x1xf32>
    %c0_131 = arith.constant 0 : index
    %c0_132 = arith.constant 0 : index
    %c0_133 = arith.constant 0 : index
    %c0_134 = arith.constant 0 : index
    %301 = vector.load %arg13[%c0_131, %c0_132, %c0_133, %c0_134] : memref<1x2x8x1xf32, #tpu.memory_space<vmem>>, vector<1x1x8x1xf32>
    %302 = vector.shape_cast %301 : vector<1x1x8x1xf32> to vector<8x1xf32>
    %303 = vector.shape_cast %290 : vector<32x32xf32> to vector<4x8x32xf32>
    %304 = vector.shape_cast %296 : vector<32x8xbf16> to vector<1x32x8xbf16>
    %305 = vector.shape_cast %304 : vector<1x32x8xbf16> to vector<1x32x8xbf16>
    %306 = vector.broadcast %305 : vector<1x32x8xbf16> to vector<4x32x8xbf16>
    %307 = arith.truncf %303 : vector<4x8x32xf32> to vector<4x8x32xbf16>
    %cst_135 = arith.constant dense<0.000000e+00> : vector<4x32x32xf32>
    %308 = tpu.matmul %306, %307, %cst_135 {dimension_numbers = #tpu.dot_dimension_numbers<[2], [1], [1], [2], [0, 0, 0, 1, 1, 2], [0], [0]>} : vector<4x32x8xbf16>, vector<4x8x32xbf16>, vector<4x32x32xf32> -> vector<4x32x32xf32>
    %309 = vector.shape_cast %300 : vector<32x1xf32> to vector<1x32x1xf32>
    %310 = vector.broadcast %309 : vector<1x32x1xf32> to vector<4x32x32xf32>
    %311 = arith.addf %308, %310 : vector<4x32x32xf32>
    %cst_136 = arith.constant 0.000000e+00 : f32
    %312 = vector.broadcast %cst_136 : f32 to vector<4x32x32xf32>
    %313 = arith.maximumf %311, %312 : vector<4x32x32xf32>
    %314 = vector.shape_cast %298 : vector<8x32xbf16> to vector<1x8x32xbf16>
    %315 = vector.shape_cast %314 : vector<1x8x32xbf16> to vector<1x8x32xbf16>
    %316 = vector.broadcast %315 : vector<1x8x32xbf16> to vector<4x8x32xbf16>
    %317 = arith.truncf %313 : vector<4x32x32xf32> to vector<4x32x32xbf16>
    %cst_137 = arith.constant dense<0.000000e+00> : vector<4x8x32xf32>
    %318 = tpu.matmul %316, %317, %cst_137 {dimension_numbers = #tpu.dot_dimension_numbers<[2], [1], [1], [2], [0, 0, 0, 1, 1, 2], [0], [0]>} : vector<4x8x32xbf16>, vector<4x32x32xbf16>, vector<4x8x32xf32> -> vector<4x8x32xf32>
    %319 = vector.shape_cast %302 : vector<8x1xf32> to vector<1x8x1xf32>
    %320 = vector.broadcast %319 : vector<1x8x1xf32> to vector<4x8x32xf32>
    %321 = arith.addf %318, %320 : vector<4x8x32xf32>
    %322 = vector.shape_cast %321 : vector<4x8x32xf32> to vector<32x32xf32>
    %323 = arith.addf %290, %322 : vector<32x32xf32>
    %cst_138 = arith.constant dense<0.000000e+00> : vector<32xf32>
    %324 = vector.multi_reduction <add>, %323, %cst_138 [1] : vector<32x32xf32> to vector<32xf32>
    %325 = vector.shape_cast %324 : vector<32xf32> to vector<32x1xf32>
    %cst_139 = arith.constant 3.200000e+01 : f32
    %326 = vector.broadcast %cst_139 : f32 to vector<32x1xf32>
    %327 = arith.divf %325, %326 : vector<32x1xf32>
    %328 = vector.broadcast %327 : vector<32x1xf32> to vector<32x32xf32>
    %329 = arith.subf %323, %328 : vector<32x32xf32>
    %330 = arith.mulf %329, %329 : vector<32x32xf32>
    %cst_140 = arith.constant dense<0.000000e+00> : vector<32xf32>
    %331 = vector.multi_reduction <add>, %330, %cst_140 [1] : vector<32x32xf32> to vector<32xf32>
    %332 = vector.shape_cast %331 : vector<32xf32> to vector<32x1xf32>
    %cst_141 = arith.constant 3.200000e+01 : f32
    %333 = vector.broadcast %cst_141 : f32 to vector<32x1xf32>
    %334 = arith.divf %332, %333 : vector<32x1xf32>
    %335 = vector.broadcast %327 : vector<32x1xf32> to vector<32x32xf32>
    %336 = arith.subf %323, %335 : vector<32x32xf32>
    %cst_142 = arith.constant 9.99999974E-6 : f32
    %337 = vector.broadcast %cst_142 : f32 to vector<32x1xf32>
    %338 = arith.addf %334, %337 : vector<32x1xf32>
    %339 = math.rsqrt %338 : vector<32x1xf32>
    %340 = vector.broadcast %339 : vector<32x1xf32> to vector<32x32xf32>
    %341 = arith.mulf %336, %340 : vector<32x32xf32>
    %342 = vector.broadcast %292 : vector<1x32xf32> to vector<32x32xf32>
    %343 = arith.mulf %341, %342 : vector<32x32xf32>
    %344 = vector.broadcast %294 : vector<1x32xf32> to vector<32x32xf32>
    %345 = arith.addf %343, %344 : vector<32x32xf32>
    %c0_143 = arith.constant 0 : index
    %c0_144 = arith.constant 0 : index
    %c0_145 = arith.constant 0 : index
    %346 = vector.load %arg14[%c0_143, %c0_144, %c0_145] : memref<1x32x96xbf16, #tpu.memory_space<vmem>>, vector<1x32x96xbf16>
    %347 = vector.shape_cast %346 : vector<1x32x96xbf16> to vector<32x96xbf16>
    %348 = arith.truncf %345 : vector<32x32xf32> to vector<32x32xbf16>
    %cst_146 = arith.constant dense<0.000000e+00> : vector<32x96xf32>
    %349 = tpu.matmul %348, %347, %cst_146 {dimension_numbers = #tpu.dot_dimension_numbers<[1], [0], [0], [1], [0, 0, 1, 1], [], []>} : vector<32x32xbf16>, vector<32x96xbf16>, vector<32x96xf32> -> vector<32x96xf32>
    %c0_147 = arith.constant 0 : index
    %c0_148 = arith.constant 0 : index
    %c0_149 = arith.constant 0 : index
    %350 = vector.load %arg15[%c0_147, %c0_148, %c0_149] : memref<1x1x96xf32, #tpu.memory_space<vmem>>, vector<1x1x96xf32>
    %351 = vector.shape_cast %350 : vector<1x1x96xf32> to vector<1x96xf32>
    %352 = vector.broadcast %351 : vector<1x96xf32> to vector<32x96xf32>
    %353 = arith.addf %349, %352 : vector<32x96xf32>
    %354 = vector.extract_strided_slice %353 {offsets = [0, 0], sizes = [32, 16], strides = [1, 1]} : vector<32x96xf32> to vector<32x16xf32>
    %355 = vector.extract_strided_slice %353 {offsets = [0, 32], sizes = [32, 16], strides = [1, 1]} : vector<32x96xf32> to vector<32x16xf32>
    %356 = vector.extract_strided_slice %353 {offsets = [0, 64], sizes = [32, 16], strides = [1, 1]} : vector<32x96xf32> to vector<32x16xf32>
    %357 = arith.truncf %354 : vector<32x16xf32> to vector<32x16xbf16>
    %358 = arith.truncf %355 : vector<32x16xf32> to vector<32x16xbf16>
    %cst_150 = arith.constant dense<0.000000e+00> : vector<32x32xf32>
    %359 = tpu.matmul %357, %358, %cst_150 {dimension_numbers = #tpu.dot_dimension_numbers<[1], [1], [0], [0], [0, 0, 1, 0], [], []>} : vector<32x16xbf16>, vector<32x16xbf16>, vector<32x32xf32> -> vector<32x32xf32>
    %cst_151 = arith.constant 2.500000e-01 : f32
    %360 = vector.broadcast %cst_151 : f32 to vector<32x32xf32>
    %361 = arith.mulf %359, %360 : vector<32x32xf32>
    %362 = arith.addf %361, %4 : vector<32x32xf32>
    %cst_152 = arith.constant dense<0xFF800000> : vector<32xf32>
    %363 = vector.multi_reduction <maximumf>, %362, %cst_152 [1] : vector<32x32xf32> to vector<32xf32>
    %364 = vector.shape_cast %363 : vector<32xf32> to vector<32x1xf32>
    %365 = vector.broadcast %364 : vector<32x1xf32> to vector<32x32xf32>
    %366 = arith.subf %362, %365 : vector<32x32xf32>
    %367 = math.exp %366 : vector<32x32xf32>
    %cst_153 = arith.constant dense<0.000000e+00> : vector<32xf32>
    %368 = vector.multi_reduction <add>, %367, %cst_153 [1] : vector<32x32xf32> to vector<32xf32>
    %369 = vector.shape_cast %368 : vector<32xf32> to vector<32x1xf32>
    %370 = tpu.reciprocal %369 {approx = true} : vector<32x1xf32> -> vector<32x1xf32>
    %371 = vector.broadcast %370 : vector<32x1xf32> to vector<32x32xf32>
    %372 = arith.mulf %367, %371 : vector<32x32xf32>
    %373 = arith.truncf %372 : vector<32x32xf32> to vector<32x32xbf16>
    %374 = arith.truncf %356 : vector<32x16xf32> to vector<32x16xbf16>
    %cst_154 = arith.constant dense<0.000000e+00> : vector<32x16xf32>
    %375 = tpu.matmul %373, %374, %cst_154 {dimension_numbers = #tpu.dot_dimension_numbers<[1], [0], [0], [1], [0, 0, 1, 1], [], []>} : vector<32x32xbf16>, vector<32x16xbf16>, vector<32x16xf32> -> vector<32x16xf32>
    %376 = vector.extract_strided_slice %353 {offsets = [0, 16], sizes = [32, 16], strides = [1, 1]} : vector<32x96xf32> to vector<32x16xf32>
    %377 = vector.extract_strided_slice %353 {offsets = [0, 48], sizes = [32, 16], strides = [1, 1]} : vector<32x96xf32> to vector<32x16xf32>
    %378 = vector.extract_strided_slice %353 {offsets = [0, 80], sizes = [32, 16], strides = [1, 1]} : vector<32x96xf32> to vector<32x16xf32>
    %379 = arith.truncf %376 : vector<32x16xf32> to vector<32x16xbf16>
    %380 = arith.truncf %377 : vector<32x16xf32> to vector<32x16xbf16>
    %cst_155 = arith.constant dense<0.000000e+00> : vector<32x32xf32>
    %381 = tpu.matmul %379, %380, %cst_155 {dimension_numbers = #tpu.dot_dimension_numbers<[1], [1], [0], [0], [0, 0, 1, 0], [], []>} : vector<32x16xbf16>, vector<32x16xbf16>, vector<32x32xf32> -> vector<32x32xf32>
    %cst_156 = arith.constant 2.500000e-01 : f32
    %382 = vector.broadcast %cst_156 : f32 to vector<32x32xf32>
    %383 = arith.mulf %381, %382 : vector<32x32xf32>
    %384 = arith.addf %383, %4 : vector<32x32xf32>
    %cst_157 = arith.constant dense<0xFF800000> : vector<32xf32>
    %385 = vector.multi_reduction <maximumf>, %384, %cst_157 [1] : vector<32x32xf32> to vector<32xf32>
    %386 = vector.shape_cast %385 : vector<32xf32> to vector<32x1xf32>
    %387 = vector.broadcast %386 : vector<32x1xf32> to vector<32x32xf32>
    %388 = arith.subf %384, %387 : vector<32x32xf32>
    %389 = math.exp %388 : vector<32x32xf32>
    %cst_158 = arith.constant dense<0.000000e+00> : vector<32xf32>
    %390 = vector.multi_reduction <add>, %389, %cst_158 [1] : vector<32x32xf32> to vector<32xf32>
    %391 = vector.shape_cast %390 : vector<32xf32> to vector<32x1xf32>
    %392 = tpu.reciprocal %391 {approx = true} : vector<32x1xf32> -> vector<32x1xf32>
    %393 = vector.broadcast %392 : vector<32x1xf32> to vector<32x32xf32>
    %394 = arith.mulf %389, %393 : vector<32x32xf32>
    %395 = arith.truncf %394 : vector<32x32xf32> to vector<32x32xbf16>
    %396 = arith.truncf %378 : vector<32x16xf32> to vector<32x16xbf16>
    %cst_159 = arith.constant dense<0.000000e+00> : vector<32x16xf32>
    %397 = tpu.matmul %395, %396, %cst_159 {dimension_numbers = #tpu.dot_dimension_numbers<[1], [0], [0], [1], [0, 0, 1, 1], [], []>} : vector<32x32xbf16>, vector<32x16xbf16>, vector<32x16xf32> -> vector<32x16xf32>
    %398 = tpu.concatenate %375, %397 in 1 : vector<32x16xf32>, vector<32x16xf32> -> vector<32x32xf32>
    %c0_160 = arith.constant 0 : index
    %c0_161 = arith.constant 0 : index
    %c0_162 = arith.constant 0 : index
    %399 = vector.load %arg16[%c0_160, %c0_161, %c0_162] : memref<1x32x32xbf16, #tpu.memory_space<vmem>>, vector<1x32x32xbf16>
    %400 = vector.shape_cast %399 : vector<1x32x32xbf16> to vector<32x32xbf16>
    %401 = arith.truncf %398 : vector<32x32xf32> to vector<32x32xbf16>
    %cst_163 = arith.constant dense<0.000000e+00> : vector<32x32xf32>
    %402 = tpu.matmul %401, %400, %cst_163 {dimension_numbers = #tpu.dot_dimension_numbers<[1], [0], [0], [1], [0, 0, 1, 1], [], []>} : vector<32x32xbf16>, vector<32x32xbf16>, vector<32x32xf32> -> vector<32x32xf32>
    %c0_164 = arith.constant 0 : index
    %c17 = arith.constant 17 : index
    %c0_165 = arith.constant 0 : index
    %403 = vector.load %arg17[%c0_164, %c17, %c0_165] : memref<1x22x32xf32, #tpu.memory_space<vmem>>, vector<1x1x32xf32>
    %404 = vector.shape_cast %403 : vector<1x1x32xf32> to vector<1x32xf32>
    %405 = vector.broadcast %404 : vector<1x32xf32> to vector<32x32xf32>
    %406 = arith.addf %402, %405 : vector<32x32xf32>
    %407 = arith.addf %345, %406 : vector<32x32xf32>
    %c0_166 = arith.constant 0 : index
    %c18 = arith.constant 18 : index
    %c0_167 = arith.constant 0 : index
    %408 = vector.load %arg17[%c0_166, %c18, %c0_167] : memref<1x22x32xf32, #tpu.memory_space<vmem>>, vector<1x1x32xf32>
    %409 = vector.shape_cast %408 : vector<1x1x32xf32> to vector<1x32xf32>
    %c0_168 = arith.constant 0 : index
    %c19 = arith.constant 19 : index
    %c0_169 = arith.constant 0 : index
    %410 = vector.load %arg17[%c0_168, %c19, %c0_169] : memref<1x22x32xf32, #tpu.memory_space<vmem>>, vector<1x1x32xf32>
    %411 = vector.shape_cast %410 : vector<1x1x32xf32> to vector<1x32xf32>
    %cst_170 = arith.constant dense<0.000000e+00> : vector<32xf32>
    %412 = vector.multi_reduction <add>, %407, %cst_170 [1] : vector<32x32xf32> to vector<32xf32>
    %413 = vector.shape_cast %412 : vector<32xf32> to vector<32x1xf32>
    %cst_171 = arith.constant 3.200000e+01 : f32
    %414 = vector.broadcast %cst_171 : f32 to vector<32x1xf32>
    %415 = arith.divf %413, %414 : vector<32x1xf32>
    %416 = vector.broadcast %415 : vector<32x1xf32> to vector<32x32xf32>
    %417 = arith.subf %407, %416 : vector<32x32xf32>
    %418 = arith.mulf %417, %417 : vector<32x32xf32>
    %cst_172 = arith.constant dense<0.000000e+00> : vector<32xf32>
    %419 = vector.multi_reduction <add>, %418, %cst_172 [1] : vector<32x32xf32> to vector<32xf32>
    %420 = vector.shape_cast %419 : vector<32xf32> to vector<32x1xf32>
    %cst_173 = arith.constant 3.200000e+01 : f32
    %421 = vector.broadcast %cst_173 : f32 to vector<32x1xf32>
    %422 = arith.divf %420, %421 : vector<32x1xf32>
    %423 = vector.broadcast %415 : vector<32x1xf32> to vector<32x32xf32>
    %424 = arith.subf %407, %423 : vector<32x32xf32>
    %cst_174 = arith.constant 9.99999974E-6 : f32
    %425 = vector.broadcast %cst_174 : f32 to vector<32x1xf32>
    %426 = arith.addf %422, %425 : vector<32x1xf32>
    %427 = math.rsqrt %426 : vector<32x1xf32>
    %428 = vector.broadcast %427 : vector<32x1xf32> to vector<32x32xf32>
    %429 = arith.mulf %424, %428 : vector<32x32xf32>
    %430 = vector.broadcast %409 : vector<1x32xf32> to vector<32x32xf32>
    %431 = arith.mulf %429, %430 : vector<32x32xf32>
    %432 = vector.broadcast %411 : vector<1x32xf32> to vector<32x32xf32>
    %433 = arith.addf %431, %432 : vector<32x32xf32>
    %c0_175 = arith.constant 0 : index
    %c20 = arith.constant 20 : index
    %c0_176 = arith.constant 0 : index
    %434 = vector.load %arg17[%c0_175, %c20, %c0_176] : memref<1x22x32xf32, #tpu.memory_space<vmem>>, vector<1x1x32xf32>
    %435 = vector.shape_cast %434 : vector<1x1x32xf32> to vector<1x32xf32>
    %c0_177 = arith.constant 0 : index
    %c21 = arith.constant 21 : index
    %c0_178 = arith.constant 0 : index
    %436 = vector.load %arg17[%c0_177, %c21, %c0_178] : memref<1x22x32xf32, #tpu.memory_space<vmem>>, vector<1x1x32xf32>
    %437 = vector.shape_cast %436 : vector<1x1x32xf32> to vector<1x32xf32>
    %c0_179 = arith.constant 0 : index
    %c1_180 = arith.constant 1 : index
    %c0_181 = arith.constant 0 : index
    %c0_182 = arith.constant 0 : index
    %438 = vector.load %arg10[%c0_179, %c1_180, %c0_181, %c0_182] : memref<1x2x32x8xbf16, #tpu.memory_space<vmem>>, vector<1x1x32x8xbf16>
    %439 = vector.shape_cast %438 : vector<1x1x32x8xbf16> to vector<32x8xbf16>
    %c0_183 = arith.constant 0 : index
    %c1_184 = arith.constant 1 : index
    %c0_185 = arith.constant 0 : index
    %c0_186 = arith.constant 0 : index
    %440 = vector.load %arg12[%c0_183, %c1_184, %c0_185, %c0_186] : memref<1x2x8x32xbf16, #tpu.memory_space<vmem>>, vector<1x1x8x32xbf16>
    %441 = vector.shape_cast %440 : vector<1x1x8x32xbf16> to vector<8x32xbf16>
    %c0_187 = arith.constant 0 : index
    %c1_188 = arith.constant 1 : index
    %c0_189 = arith.constant 0 : index
    %c0_190 = arith.constant 0 : index
    %442 = vector.load %arg11[%c0_187, %c1_188, %c0_189, %c0_190] : memref<1x2x32x1xf32, #tpu.memory_space<vmem>>, vector<1x1x32x1xf32>
    %443 = vector.shape_cast %442 : vector<1x1x32x1xf32> to vector<32x1xf32>
    %c0_191 = arith.constant 0 : index
    %c1_192 = arith.constant 1 : index
    %c0_193 = arith.constant 0 : index
    %c0_194 = arith.constant 0 : index
    %444 = vector.load %arg13[%c0_191, %c1_192, %c0_193, %c0_194] : memref<1x2x8x1xf32, #tpu.memory_space<vmem>>, vector<1x1x8x1xf32>
    %445 = vector.shape_cast %444 : vector<1x1x8x1xf32> to vector<8x1xf32>
    %446 = vector.shape_cast %433 : vector<32x32xf32> to vector<4x8x32xf32>
    %447 = vector.shape_cast %439 : vector<32x8xbf16> to vector<1x32x8xbf16>
    %448 = vector.shape_cast %447 : vector<1x32x8xbf16> to vector<1x32x8xbf16>
    %449 = vector.broadcast %448 : vector<1x32x8xbf16> to vector<4x32x8xbf16>
    %450 = arith.truncf %446 : vector<4x8x32xf32> to vector<4x8x32xbf16>
    %cst_195 = arith.constant dense<0.000000e+00> : vector<4x32x32xf32>
    %451 = tpu.matmul %449, %450, %cst_195 {dimension_numbers = #tpu.dot_dimension_numbers<[2], [1], [1], [2], [0, 0, 0, 1, 1, 2], [0], [0]>} : vector<4x32x8xbf16>, vector<4x8x32xbf16>, vector<4x32x32xf32> -> vector<4x32x32xf32>
    %452 = vector.shape_cast %443 : vector<32x1xf32> to vector<1x32x1xf32>
    %453 = vector.broadcast %452 : vector<1x32x1xf32> to vector<4x32x32xf32>
    %454 = arith.addf %451, %453 : vector<4x32x32xf32>
    %cst_196 = arith.constant 0.000000e+00 : f32
    %455 = vector.broadcast %cst_196 : f32 to vector<4x32x32xf32>
    %456 = arith.maximumf %454, %455 : vector<4x32x32xf32>
    %457 = vector.shape_cast %441 : vector<8x32xbf16> to vector<1x8x32xbf16>
    %458 = vector.shape_cast %457 : vector<1x8x32xbf16> to vector<1x8x32xbf16>
    %459 = vector.broadcast %458 : vector<1x8x32xbf16> to vector<4x8x32xbf16>
    %460 = arith.truncf %456 : vector<4x32x32xf32> to vector<4x32x32xbf16>
    %cst_197 = arith.constant dense<0.000000e+00> : vector<4x8x32xf32>
    %461 = tpu.matmul %459, %460, %cst_197 {dimension_numbers = #tpu.dot_dimension_numbers<[2], [1], [1], [2], [0, 0, 0, 1, 1, 2], [0], [0]>} : vector<4x8x32xbf16>, vector<4x32x32xbf16>, vector<4x8x32xf32> -> vector<4x8x32xf32>
    %462 = vector.shape_cast %445 : vector<8x1xf32> to vector<1x8x1xf32>
    %463 = vector.broadcast %462 : vector<1x8x1xf32> to vector<4x8x32xf32>
    %464 = arith.addf %461, %463 : vector<4x8x32xf32>
    %465 = vector.shape_cast %464 : vector<4x8x32xf32> to vector<32x32xf32>
    %466 = arith.addf %433, %465 : vector<32x32xf32>
    %cst_198 = arith.constant dense<0.000000e+00> : vector<32xf32>
    %467 = vector.multi_reduction <add>, %466, %cst_198 [1] : vector<32x32xf32> to vector<32xf32>
    %468 = vector.shape_cast %467 : vector<32xf32> to vector<32x1xf32>
    %cst_199 = arith.constant 3.200000e+01 : f32
    %469 = vector.broadcast %cst_199 : f32 to vector<32x1xf32>
    %470 = arith.divf %468, %469 : vector<32x1xf32>
    %471 = vector.broadcast %470 : vector<32x1xf32> to vector<32x32xf32>
    %472 = arith.subf %466, %471 : vector<32x32xf32>
    %473 = arith.mulf %472, %472 : vector<32x32xf32>
    %cst_200 = arith.constant dense<0.000000e+00> : vector<32xf32>
    %474 = vector.multi_reduction <add>, %473, %cst_200 [1] : vector<32x32xf32> to vector<32xf32>
    %475 = vector.shape_cast %474 : vector<32xf32> to vector<32x1xf32>
    %cst_201 = arith.constant 3.200000e+01 : f32
    %476 = vector.broadcast %cst_201 : f32 to vector<32x1xf32>
    %477 = arith.divf %475, %476 : vector<32x1xf32>
    %478 = vector.broadcast %470 : vector<32x1xf32> to vector<32x32xf32>
    %479 = arith.subf %466, %478 : vector<32x32xf32>
    %cst_202 = arith.constant 9.99999974E-6 : f32
    %480 = vector.broadcast %cst_202 : f32 to vector<32x1xf32>
    %481 = arith.addf %477, %480 : vector<32x1xf32>
    %482 = math.rsqrt %481 : vector<32x1xf32>
    %483 = vector.broadcast %482 : vector<32x1xf32> to vector<32x32xf32>
    %484 = arith.mulf %479, %483 : vector<32x32xf32>
    %485 = vector.broadcast %435 : vector<1x32xf32> to vector<32x32xf32>
    %486 = arith.mulf %484, %485 : vector<32x32xf32>
    %487 = vector.broadcast %437 : vector<1x32xf32> to vector<32x32xf32>
    %488 = arith.addf %486, %487 : vector<32x32xf32>
    %c0_203 = arith.constant 0 : index
    %c0_204 = arith.constant 0 : index
    %489 = vector.load %arg19[%c0_203, %c0_204] : memref<32x32xf32, #tpu.memory_space<vmem>>, vector<32x32xf32>
    tpu.vector_store %arg19[%c0_203, %c0_204], %488 {strides = array<i32>} : memref<32x32xf32, #tpu.memory_space<vmem>>, vector<32x32xf32>,
    %c1_i32 = arith.constant 1 : i32
    %490 = arith.cmpi eq, %arg1, %c1_i32 : i32
    %491 = arith.extui %490 : i1 to i32
    %c0_i32_205 = arith.constant 0 : i32
    %492 = arith.cmpi ne, %491, %c0_i32_205 : i32
    scf.if %492 {
      %c0_206 = arith.constant 0 : index
      %c0_207 = arith.constant 0 : index
      %c0_208 = arith.constant 0 : index
      %493 = vector.load %arg18[%c0_206, %c0_207, %c0_208] : memref<1x32x32xf32, #tpu.memory_space<vmem>>, vector<1x32x32xf32>
      %494 = vector.shape_cast %493 : vector<1x32x32xf32> to vector<32x32xf32>
      %495 = vector.shape_cast %488 : vector<32x32xf32> to vector<1x32x32xf32>
      tpu.vector_store %arg18[%c0_206, %c0_207, %c0_208], %495 {strides = array<i32>} : memref<1x32x32xf32, #tpu.memory_space<vmem>>, vector<1x32x32xf32>,
    } else {
    }
    return
  }
  func.func @transform_0(%arg0: i32, %arg1: i32) -> (i32, i32, i32) {
    %c0_i32 = arith.constant 0 : i32
    %c0_i32_0 = arith.constant 0 : i32
    %c0_i32_1 = arith.constant 0 : i32
    return %arg0, %c0_i32, %c0_i32_0 : i32, i32, i32
  }
  func.func @transform_1(%arg0: i32, %arg1: i32) -> (i32, i32) {
    %c0_i32 = arith.constant 0 : i32
    %c0_i32_0 = arith.constant 0 : i32
    %c0_i32_1 = arith.constant 0 : i32
    return %c0_i32, %c0_i32_0 : i32, i32
  }
  func.func @transform_2(%arg0: i32, %arg1: i32) -> (i32, i32, i32) {
    %c0_i32 = arith.constant 0 : i32
    %c0_i32_0 = arith.constant 0 : i32
    %c0_i32_1 = arith.constant 0 : i32
    return %arg1, %c0_i32, %c0_i32_0 : i32, i32, i32
  }
  func.func @transform_3(%arg0: i32, %arg1: i32) -> (i32, i32, i32) {
    %c0_i32 = arith.constant 0 : i32
    %c0_i32_0 = arith.constant 0 : i32
    %c0_i32_1 = arith.constant 0 : i32
    return %arg1, %c0_i32, %c0_i32_0 : i32, i32, i32
  }
  func.func @transform_4(%arg0: i32, %arg1: i32) -> (i32, i32, i32) {
    %c0_i32 = arith.constant 0 : i32
    %c0_i32_0 = arith.constant 0 : i32
    %c0_i32_1 = arith.constant 0 : i32
    return %arg1, %c0_i32, %c0_i32_0 : i32, i32, i32
  }
  func.func @transform_5(%arg0: i32, %arg1: i32) -> (i32, i32, i32) {
    %c0_i32 = arith.constant 0 : i32
    %c0_i32_0 = arith.constant 0 : i32
    %c0_i32_1 = arith.constant 0 : i32
    return %arg1, %c0_i32, %c0_i32_0 : i32, i32, i32
  }
  func.func @transform_6(%arg0: i32, %arg1: i32) -> (i32, i32, i32) {
    %c0_i32 = arith.constant 0 : i32
    %c0_i32_0 = arith.constant 0 : i32
    %c0_i32_1 = arith.constant 0 : i32
    return %arg1, %c0_i32, %c0_i32_0 : i32, i32, i32
  }
  func.func @transform_7(%arg0: i32, %arg1: i32) -> (i32, i32, i32) {
    %c0_i32 = arith.constant 0 : i32
    %c0_i32_0 = arith.constant 0 : i32
    %c0_i32_1 = arith.constant 0 : i32
    return %arg1, %c0_i32, %c0_i32_0 : i32, i32, i32
  }
  func.func @transform_8(%arg0: i32, %arg1: i32) -> (i32, i32, i32, i32) {
    %c0_i32 = arith.constant 0 : i32
    %c0_i32_0 = arith.constant 0 : i32
    %c0_i32_1 = arith.constant 0 : i32
    %c0_i32_2 = arith.constant 0 : i32
    return %arg1, %c0_i32, %c0_i32_0, %c0_i32_1 : i32, i32, i32, i32
  }
  func.func @transform_9(%arg0: i32, %arg1: i32) -> (i32, i32, i32, i32) {
    %c0_i32 = arith.constant 0 : i32
    %c0_i32_0 = arith.constant 0 : i32
    %c0_i32_1 = arith.constant 0 : i32
    %c0_i32_2 = arith.constant 0 : i32
    return %arg1, %c0_i32, %c0_i32_0, %c0_i32_1 : i32, i32, i32, i32
  }
  func.func @transform_10(%arg0: i32, %arg1: i32) -> (i32, i32, i32, i32) {
    %c0_i32 = arith.constant 0 : i32
    %c0_i32_0 = arith.constant 0 : i32
    %c0_i32_1 = arith.constant 0 : i32
    %c0_i32_2 = arith.constant 0 : i32
    return %arg1, %c0_i32, %c0_i32_0, %c0_i32_1 : i32, i32, i32, i32
  }
  func.func @transform_11(%arg0: i32, %arg1: i32) -> (i32, i32, i32, i32) {
    %c0_i32 = arith.constant 0 : i32
    %c0_i32_0 = arith.constant 0 : i32
    %c0_i32_1 = arith.constant 0 : i32
    %c0_i32_2 = arith.constant 0 : i32
    return %arg1, %c0_i32, %c0_i32_0, %c0_i32_1 : i32, i32, i32, i32
  }
  func.func @transform_12(%arg0: i32, %arg1: i32) -> (i32, i32, i32) {
    %c0_i32 = arith.constant 0 : i32
    %c0_i32_0 = arith.constant 0 : i32
    %c0_i32_1 = arith.constant 0 : i32
    return %arg1, %c0_i32, %c0_i32_0 : i32, i32, i32
  }
  func.func @transform_13(%arg0: i32, %arg1: i32) -> (i32, i32, i32) {
    %c0_i32 = arith.constant 0 : i32
    %c0_i32_0 = arith.constant 0 : i32
    %c0_i32_1 = arith.constant 0 : i32
    return %arg1, %c0_i32, %c0_i32_0 : i32, i32, i32
  }
  func.func @transform_14(%arg0: i32, %arg1: i32) -> (i32, i32, i32) {
    %c0_i32 = arith.constant 0 : i32
    %c0_i32_0 = arith.constant 0 : i32
    %c0_i32_1 = arith.constant 0 : i32
    return %arg1, %c0_i32, %c0_i32_0 : i32, i32, i32
  }
  func.func @transform_15(%arg0: i32, %arg1: i32) -> (i32, i32, i32) {
    %c0_i32 = arith.constant 0 : i32
    %c0_i32_0 = arith.constant 0 : i32
    %c0_i32_1 = arith.constant 0 : i32
    return %arg1, %c0_i32, %c0_i32_0 : i32, i32, i32
  }
  func.func @transform_16(%arg0: i32, %arg1: i32) -> (i32, i32, i32) {
    %c0_i32 = arith.constant 0 : i32
    %c0_i32_0 = arith.constant 0 : i32
    %c0_i32_1 = arith.constant 0 : i32
    return %arg0, %c0_i32, %c0_i32_0 : i32, i32, i32
  }
}

</mosaic_0001>

<llo_original>
// kernel: tst_encoder.1
$region0: #{tst_encoder.1}
  #allocation0 [shape = 'u32[]', space=smem, size = 0x4, offset = 0x4, fixed_abs, tag = 'smem constant byte address 0x4 - core index']
  #allocation1 [shape = 'u32[72,128]{1,0:T(1,128)}', space=vmem, size = 0x9000, scoped, tag = 'internal scratch']
  #allocation2 [shape = 'f32[32,32]{1,0:T(8,128)}', space=vmem, size = 0x4000, scoped, tag = 'scratch operand']
  %s0 = inlined_call_operand.vmem [shape: f32[2,32,32], index: 0, kind: input, shape index: {}]
  %s1 = inlined_call_operand.vmem [shape: f32[32,32], index: 1, kind: input, shape index: {}]
  %s2 = inlined_call_operand.vmem [shape: bf16[2,32,96], index: 2, kind: input, shape index: {}]
  %s3 = inlined_call_operand.vmem [shape: bf16[2,32,64], index: 3, kind: input, shape index: {}]
  %s4 = inlined_call_operand.vmem [shape: bf16[2,16,8], index: 4, kind: input, shape index: {}]
  %s5 = inlined_call_operand.vmem [shape: f32[2,16,1], index: 5, kind: input, shape index: {}]
  %s6 = inlined_call_operand.vmem [shape: bf16[2,8,16], index: 6, kind: input, shape index: {}]
  %s7 = inlined_call_operand.vmem [shape: f32[2,8,1], index: 7, kind: input, shape index: {}]
  %s8 = inlined_call_operand.vmem [shape: bf16[2,2,32,8], index: 8, kind: input, shape index: {}]
  %s9 = inlined_call_operand.vmem [shape: f32[2,2,32,1], index: 9, kind: input, shape index: {}]
  %s10 = inlined_call_operand.vmem [shape: bf16[2,2,8,32], index: 10, kind: input, shape index: {}]
  %s11 = inlined_call_operand.vmem [shape: f32[2,2,8,1], index: 11, kind: input, shape index: {}]
  %s12 = inlined_call_operand.vmem [shape: bf16[2,32,96], index: 12, kind: input, shape index: {}]
  %s13 = inlined_call_operand.vmem [shape: f32[2,1,96], index: 13, kind: input, shape index: {}]
  %s14 = inlined_call_operand.vmem [shape: bf16[2,32,32], index: 14, kind: input, shape index: {}]
  %s15 = inlined_call_operand.vmem [shape: f32[2,22,32], index: 15, kind: input, shape index: {}]
  %s16 = inlined_call_operand.hbm [shape: f32[2,32,32], index: 16, kind: output, shape index: {}]
  %s17 = sld [smem:[#allocation0]]
  $region105: #{tst_encoder.1} parent=0
    _
  %s19 = ssub.s32 1, %s17
  %s20 = scalar_select 0, %s19, %s17
  $region1: #{tst_encoder.1} parent=0
    #allocation3 [shape = 'u8[32768]{0}', space=vmem, size = 0x8000, scoped, tag = 'output window, operand 0']
    #allocation4 [shape = 's32[2]{0}', space=sflag, size = 0x8, scoped, tag = 'scoped memory for tst_encoder.1']
    %21 = vsyncpa [#allocation4], 0
    %s22 = scalar_lea.sflag [#allocation4], 1
    %23 = vsyncpa %s22, 0
    loop: start=0, step=1, limit=6
    $region2: #{tst_encoder.1} parent=1 // loop_pre_header
      _
    $region3: #{tst_encoder.1} parent=1 // loop_header
      %s25 = sphi 0, %s29
      %p26 = scmp.ge.s32.totalorder %s25, 6
      %s32 = sphi 0, %s44
      %s33 = sphi 0, %s40
      %s34 = sphi 0, %s32
      %s35 = sphi 0, %s33
      %s36 = sphi 0, %s34
      %s37 = sphi 0, %s35
      %s47 = sphi 0, %s49
      %s50 = sphi 0, %s47
      %s51 = sphi 0, %s50
      %s67 = sphi 0, %s51
      %s71 = sphi 0, %s71
      %s73 = sphi 0, %s71
      %s74 = sphi 0, %s73
      %s88 = sphi 0, %s74
      %s94 = sphi 0, %s96
      %s97 = sphi 0, %s94
      %s98 = sphi 0, %s97
      %s114 = sphi 0, %s98
      %s120 = sphi 0, %s122
      %s123 = sphi 0, %s120
      %s124 = sphi 0, %s123
      %s140 = sphi 0, %s124
      %s146 = sphi 0, %s148
      %s149 = sphi 0, %s146
      %s150 = sphi 0, %s149
      %s166 = sphi 0, %s150
      %s172 = sphi 0, %s174
      %s175 = sphi 0, %s172
      %s176 = sphi 0, %s175
      %s192 = sphi 0, %s176
      %s198 = sphi 0, %s200
      %s201 = sphi 0, %s198
      %s202 = sphi 0, %s201
      %s218 = sphi 0, %s202
      %s224 = sphi 0, %s226
      %s227 = sphi 0, %s224
      %s228 = sphi 0, %s227
      %s244 = sphi 0, %s228
      %s250 = sphi 0, %s252
      %s253 = sphi 0, %s250
      %s254 = sphi 0, %s253
      %s270 = sphi 0, %s254
      %s276 = sphi 0, %s278
      %s279 = sphi 0, %s276
      %s280 = sphi 0, %s279
      %s296 = sphi 0, %s280
      %s302 = sphi 0, %s304
      %s305 = sphi 0, %s302
      %s306 = sphi 0, %s305
      %s322 = sphi 0, %s306
      %s328 = sphi 0, %s330
      %s331 = sphi 0, %s328
      %s332 = sphi 0, %s331
      %s348 = sphi 0, %s332
      %s354 = sphi 0, %s356
      %s357 = sphi 0, %s354
      %s358 = sphi 0, %s357
      %s374 = sphi 0, %s358
      %s380 = sphi 0, %s382
      %s383 = sphi 0, %s380
      %s384 = sphi 0, %s383
      %s400 = sphi 0, %s384
      %s406 = sphi 0, %s408
      %s409 = sphi 0, %s406
      %s410 = sphi 0, %s409
      %s426 = sphi 0, %s410
      %s432 = sphi 0, %s434
      %s435 = sphi 0, %s432
      %s436 = sphi 0, %s435
      %s452 = sphi 0, %s436
      %s458 = sphi 0, %s460
      %s461 = sphi 0, %s458
      %s462 = sphi 0, %s461
      %s478 = sphi 0, %s462
    $region4: #{tst_encoder.1} parent=1 // loop_header_branch
      %28 = sbr.rel (%p26) target = $region8
    $region5: #{tst_encoder.1} parent=1 // loop_body
      %s30 = ssub.s32 %s25, 1
      %s31 = ssub.s32 %s25, 2
      %s38 = sadd.s32 1, %s33
      %p39 = scmp.ge.s32.totalorder %s38, 2
      %s40 = scalar_select %p39, 0, %s38
      %s41 = sadd.s32 1, %s32
      %s42 = scalar_select %p39, %s41, %s32
      %p43 = scmp.ge.s32.totalorder %s42, 2
      %s44 = scalar_select %p43, 0, %s42
      %s45 = ssub.s32 %s32, %s44
      %p46 = scmp.eq.s32.totalorder %s45, 0
      %s48 = sadd.s32 %s47, 1
      %s49 = scalar_select %p46, %s47, %s48
      %p52 = pneg %p46
      %p53 = scmp.eq.s32.totalorder %s25, 3
      %p54 = por %p52, %p53
      %p55 = scmp.ne.s32.totalorder %s47, %s50
      %p56 = scmp.eq.s32.totalorder %s25, 0
      %p57 = por %p55, %p56
      %p58 = scmp.ne.s32.totalorder %s47, %s50
      %p59 = scmp.eq.s32.totalorder %s30, 3
      %p60 = por %p58, %p59
      %p61 = scmp.ne.s32.totalorder %s50, %s51
      %p62 = scmp.eq.s32.totalorder %s30, 0
      %p63 = por %p61, %p62
      %p64 = scmp.ne.s32.totalorder %s50, %s51
      %p65 = scmp.eq.s32.totalorder %s31, 3
      %p66 = por %p64, %p65
      %p68 = scmp.ne.s32.totalorder %s51, %s67
      %p69 = scmp.eq.s32.totalorder %s31, 0
      %p70 = por %p68, %p69
      %s72 = sadd.s32 %s71, 1
      %p75 = scmp.eq.s32.totalorder %s25, 3
      %p76 = scmp.ne.s32.totalorder %s71, %s73
      %p77 = scmp.eq.s32.totalorder %s25, 0
      %p78 = por %p76, %p77
      %p79 = scmp.ne.s32.totalorder %s71, %s73
      %p80 = scmp.eq.s32.totalorder %s30, 3
      %p81 = por %p79, %p80
      %p82 = scmp.ne.s32.totalorder %s73, %s74
      %p83 = scmp.eq.s32.totalorder %s30, 0
      %p84 = por %p82, %p83
      %p85 = scmp.ne.s32.totalorder %s73, %s74
      %p86 = scmp.eq.s32.totalorder %s31, 3
      %p87 = por %p85, %p86
      %p89 = scmp.ne.s32.totalorder %s74, %s88
      %p90 = scmp.eq.s32.totalorder %s31, 0
      %p91 = por %p89, %p90
      %s92 = ssub.s32 %s33, %s40
      %p93 = scmp.eq.s32.totalorder %s92, 0
      %s95 = sadd.s32 %s94, 1
      %s96 = scalar_select %p93, %s94, %s95
      %p99 = pneg %p93
      %p100 = scmp.eq.s32.totalorder %s25, 3
      %p101 = por %p99, %p100
      %p102 = scmp.ne.s32.totalorder %s94, %s97
      %p103 = scmp.eq.s32.totalorder %s25, 0
      %p104 = por %p102, %p103
      %p105 = scmp.ne.s32.totalorder %s94, %s97
      %p106 = scmp.eq.s32.totalorder %s30, 3
      %p107 = por %p105, %p106
      %p108 = scmp.ne.s32.totalorder %s97, %s98
      %p109 = scmp.eq.s32.totalorder %s30, 0
      %p110 = por %p108, %p109
      %p111 = scmp.ne.s32.totalorder %s97, %s98
      %p112 = scmp.eq.s32.totalorder %s31, 3
      %p113 = por %p111, %p112
      %p115 = scmp.ne.s32.totalorder %s98, %s114
      %p116 = scmp.eq.s32.totalorder %s31, 0
      %p117 = por %p115, %p116
      %s118 = ssub.s32 %s33, %s40
      %p119 = scmp.eq.s32.totalorder %s118, 0
      %s121 = sadd.s32 %s120, 1
      %s122 = scalar_select %p119, %s120, %s121
      %p125 = pneg %p119
      %p126 = scmp.eq.s32.totalorder %s25, 3
      %p127 = por %p125, %p126
      %p128 = scmp.ne.s32.totalorder %s120, %s123
      %p129 = scmp.eq.s32.totalorder %s25, 0
      %p130 = por %p128, %p129
      %p131 = scmp.ne.s32.totalorder %s120, %s123
      %p132 = scmp.eq.s32.totalorder %s30, 3
      %p133 = por %p131, %p132
      %p134 = scmp.ne.s32.totalorder %s123, %s124
      %p135 = scmp.eq.s32.totalorder %s30, 0
      %p136 = por %p134, %p135
      %p137 = scmp.ne.s32.totalorder %s123, %s124
      %p138 = scmp.eq.s32.totalorder %s31, 3
      %p139 = por %p137, %p138
      %p141 = scmp.ne.s32.totalorder %s124, %s140
      %p142 = scmp.eq.s32.totalorder %s31, 0
      %p143 = por %p141, %p142
      %s144 = ssub.s32 %s33, %s40
      %p145 = scmp.eq.s32.totalorder %s144, 0
      %s147 = sadd.s32 %s146, 1
      %s148 = scalar_select %p145, %s146, %s147
      %p151 = pneg %p145
      %p152 = scmp.eq.s32.totalorder %s25, 3
      %p153 = por %p151, %p152
      %p154 = scmp.ne.s32.totalorder %s146, %s149
      %p155 = scmp.eq.s32.totalorder %s25, 0
      %p156 = por %p154, %p155
      %p157 = scmp.ne.s32.totalorder %s146, %s149
      %p158 = scmp.eq.s32.totalorder %s30, 3
      %p159 = por %p157, %p158
      %p160 = scmp.ne.s32.totalorder %s149, %s150
      %p161 = scmp.eq.s32.totalorder %s30, 0
      %p162 = por %p160, %p161
      %p163 = scmp.ne.s32.totalorder %s149, %s150
      %p164 = scmp.eq.s32.totalorder %s31, 3
      %p165 = por %p163, %p164
      %p167 = scmp.ne.s32.totalorder %s150, %s166
      %p168 = scmp.eq.s32.totalorder %s31, 0
      %p169 = por %p167, %p168
      %s170 = ssub.s32 %s33, %s40
      %p171 = scmp.eq.s32.totalorder %s170, 0
      %s173 = sadd.s32 %s172, 1
      %s174 = scalar_select %p171, %s172, %s173
      %p177 = pneg %p171
      %p178 = scmp.eq.s32.totalorder %s25, 3
      %p179 = por %p177, %p178
      %p180 = scmp.ne.s32.totalorder %s172, %s175
      %p181 = scmp.eq.s32.totalorder %s25, 0
      %p182 = por %p180, %p181
      %p183 = scmp.ne.s32.totalorder %s172, %s175
      %p184 = scmp.eq.s32.totalorder %s30, 3
      %p185 = por %p183, %p184
      %p186 = scmp.ne.s32.totalorder %s175, %s176
      %p187 = scmp.eq.s32.totalorder %s30, 0
      %p188 = por %p186, %p187
      %p189 = scmp.ne.s32.totalorder %s175, %s176
      %p190 = scmp.eq.s32.totalorder %s31, 3
      %p191 = por %p189, %p190
      %p193 = scmp.ne.s32.totalorder %s176, %s192
      %p194 = scmp.eq.s32.totalorder %s31, 0
      %p195 = por %p193, %p194
      %s196 = ssub.s32 %s33, %s40
      %p197 = scmp.eq.s32.totalorder %s196, 0
      %s199 = sadd.s32 %s198, 1
      %s200 = scalar_select %p197, %s198, %s199
      %p203 = pneg %p197
      %p204 = scmp.eq.s32.totalorder %s25, 3
      %p205 = por %p203, %p204
      %p206 = scmp.ne.s32.totalorder %s198, %s201
      %p207 = scmp.eq.s32.totalorder %s25, 0
      %p208 = por %p206, %p207
      %p209 = scmp.ne.s32.totalorder %s198, %s201
      %p210 = scmp.eq.s32.totalorder %s30, 3
      %p211 = por %p209, %p210
      %p212 = scmp.ne.s32.totalorder %s201, %s202
      %p213 = scmp.eq.s32.totalorder %s30, 0
      %p214 = por %p212, %p213
      %p215 = scmp.ne.s32.totalorder %s201, %s202
      %p216 = scmp.eq.s32.totalorder %s31, 3
      %p217 = por %p215, %p216
      %p219 = scmp.ne.s32.totalorder %s202, %s218
      %p220 = scmp.eq.s32.totalorder %s31, 0
      %p221 = por %p219, %p220
      %s222 = ssub.s32 %s33, %s40
      %p223 = scmp.eq.s32.totalorder %s222, 0
      %s225 = sadd.s32 %s224, 1
      %s226 = scalar_select %p223, %s224, %s225
      %p229 = pneg %p223
      %p230 = scmp.eq.s32.totalorder %s25, 3
      %p231 = por %p229, %p230
      %p232 = scmp.ne.s32.totalorder %s224, %s227
      %p233 = scmp.eq.s32.totalorder %s25, 0
      %p234 = por %p232, %p233
      %p235 = scmp.ne.s32.totalorder %s224, %s227
      %p236 = scmp.eq.s32.totalorder %s30, 3
      %p237 = por %p235, %p236
      %p238 = scmp.ne.s32.totalorder %s227, %s228
      %p239 = scmp.eq.s32.totalorder %s30, 0
      %p240 = por %p238, %p239
      %p241 = scmp.ne.s32.totalorder %s227, %s228
      %p242 = scmp.eq.s32.totalorder %s31, 3
      %p243 = por %p241, %p242
      %p245 = scmp.ne.s32.totalorder %s228, %s244
      %p246 = scmp.eq.s32.totalorder %s31, 0
      %p247 = por %p245, %p246
      %s248 = ssub.s32 %s33, %s40
      %p249 = scmp.eq.s32.totalorder %s248, 0
      %s251 = sadd.s32 %s250, 1
      %s252 = scalar_select %p249, %s250, %s251
      %p255 = pneg %p249
      %p256 = scmp.eq.s32.totalorder %s25, 3
      %p257 = por %p255, %p256
      %p258 = scmp.ne.s32.totalorder %s250, %s253
      %p259 = scmp.eq.s32.totalorder %s25, 0
      %p260 = por %p258, %p259
      %p261 = scmp.ne.s32.totalorder %s250, %s253
      %p262 = scmp.eq.s32.totalorder %s30, 3
      %p263 = por %p261, %p262
      %p264 = scmp.ne.s32.totalorder %s253, %s254
      %p265 = scmp.eq.s32.totalorder %s30, 0
      %p266 = por %p264, %p265
      %p267 = scmp.ne.s32.totalorder %s253, %s254
      %p268 = scmp.eq.s32.totalorder %s31, 3
      %p269 = por %p267, %p268
      %p271 = scmp.ne.s32.totalorder %s254, %s270
      %p272 = scmp.eq.s32.totalorder %s31, 0
      %p273 = por %p271, %p272
      %s274 = ssub.s32 %s33, %s40
      %p275 = scmp.eq.s32.totalorder %s274, 0
      %s277 = sadd.s32 %s276, 1
      %s278 = scalar_select %p275, %s276, %s277
      %p281 = pneg %p275
      %p282 = scmp.eq.s32.totalorder %s25, 3
      %p283 = por %p281, %p282
      %p284 = scmp.ne.s32.totalorder %s276, %s279
      %p285 = scmp.eq.s32.totalorder %s25, 0
      %p286 = por %p284, %p285
      %p287 = scmp.ne.s32.totalorder %s276, %s279
      %p288 = scmp.eq.s32.totalorder %s30, 3
      %p289 = por %p287, %p288
      %p290 = scmp.ne.s32.totalorder %s279, %s280
      %p291 = scmp.eq.s32.totalorder %s30, 0
      %p292 = por %p290, %p291
      %p293 = scmp.ne.s32.totalorder %s279, %s280
      %p294 = scmp.eq.s32.totalorder %s31, 3
      %p295 = por %p293, %p294
      %p297 = scmp.ne.s32.totalorder %s280, %s296
      %p298 = scmp.eq.s32.totalorder %s31, 0
      %p299 = por %p297, %p298
      %s300 = ssub.s32 %s33, %s40
      %p301 = scmp.eq.s32.totalorder %s300, 0
      %s303 = sadd.s32 %s302, 1
      %s304 = scalar_select %p301, %s302, %s303
      %p307 = pneg %p301
      %p308 = scmp.eq.s32.totalorder %s25, 3
      %p309 = por %p307, %p308
      %p310 = scmp.ne.s32.totalorder %s302, %s305
      %p311 = scmp.eq.s32.totalorder %s25, 0
      %p312 = por %p310, %p311
      %p313 = scmp.ne.s32.totalorder %s302, %s305
      %p314 = scmp.eq.s32.totalorder %s30, 3
      %p315 = por %p313, %p314
      %p316 = scmp.ne.s32.totalorder %s305, %s306
      %p317 = scmp.eq.s32.totalorder %s30, 0
      %p318 = por %p316, %p317
      %p319 = scmp.ne.s32.totalorder %s305, %s306
      %p320 = scmp.eq.s32.totalorder %s31, 3
      %p321 = por %p319, %p320
      %p323 = scmp.ne.s32.totalorder %s306, %s322
      %p324 = scmp.eq.s32.totalorder %s31, 0
      %p325 = por %p323, %p324
      %s326 = ssub.s32 %s33, %s40
      %p327 = scmp.eq.s32.totalorder %s326, 0
      %s329 = sadd.s32 %s328, 1
      %s330 = scalar_select %p327, %s328, %s329
      %p333 = pneg %p327
      %p334 = scmp.eq.s32.totalorder %s25, 3
      %p335 = por %p333, %p334
      %p336 = scmp.ne.s32.totalorder %s328, %s331
      %p337 = scmp.eq.s32.totalorder %s25, 0
      %p338 = por %p336, %p337
      %p339 = scmp.ne.s32.totalorder %s328, %s331
      %p340 = scmp.eq.s32.totalorder %s30, 3
      %p341 = por %p339, %p340
      %p342 = scmp.ne.s32.totalorder %s331, %s332
      %p343 = scmp.eq.s32.totalorder %s30, 0
      %p344 = por %p342, %p343
      %p345 = scmp.ne.s32.totalorder %s331, %s332
      %p346 = scmp.eq.s32.totalorder %s31, 3
      %p347 = por %p345, %p346
      %p349 = scmp.ne.s32.totalorder %s332, %s348
      %p350 = scmp.eq.s32.totalorder %s31, 0
      %p351 = por %p349, %p350
      %s352 = ssub.s32 %s33, %s40
      %p353 = scmp.eq.s32.totalorder %s352, 0
      %s355 = sadd.s32 %s354, 1
      %s356 = scalar_select %p353, %s354, %s355
      %p359 = pneg %p353
      %p360 = scmp.eq.s32.totalorder %s25, 3
      %p361 = por %p359, %p360
      %p362 = scmp.ne.s32.totalorder %s354, %s357
      %p363 = scmp.eq.s32.totalorder %s25, 0
      %p364 = por %p362, %p363
      %p365 = scmp.ne.s32.totalorder %s354, %s357
      %p366 = scmp.eq.s32.totalorder %s30, 3
      %p367 = por %p365, %p366
      %p368 = scmp.ne.s32.totalorder %s357, %s358
      %p369 = scmp.eq.s32.totalorder %s30, 0
      %p370 = por %p368, %p369
      %p371 = scmp.ne.s32.totalorder %s357, %s358
      %p372 = scmp.eq.s32.totalorder %s31, 3
      %p373 = por %p371, %p372
      %p375 = scmp.ne.s32.totalorder %s358, %s374
      %p376 = scmp.eq.s32.totalorder %s31, 0
      %p377 = por %p375, %p376
      %s378 = ssub.s32 %s33, %s40
      %p379 = scmp.eq.s32.totalorder %s378, 0
      %s381 = sadd.s32 %s380, 1
      %s382 = scalar_select %p379, %s380, %s381
      %p385 = pneg %p379
      %p386 = scmp.eq.s32.totalorder %s25, 3
      %p387 = por %p385, %p386
      %p388 = scmp.ne.s32.totalorder %s380, %s383
      %p389 = scmp.eq.s32.totalorder %s25, 0
      %p390 = por %p388, %p389
      %p391 = scmp.ne.s32.totalorder %s380, %s383
      %p392 = scmp.eq.s32.totalorder %s30, 3
      %p393 = por %p391, %p392
      %p394 = scmp.ne.s32.totalorder %s383, %s384
      %p395 = scmp.eq.s32.totalorder %s30, 0
      %p396 = por %p394, %p395
      %p397 = scmp.ne.s32.totalorder %s383, %s384
      %p398 = scmp.eq.s32.totalorder %s31, 3
      %p399 = por %p397, %p398
      %p401 = scmp.ne.s32.totalorder %s384, %s400
      %p402 = scmp.eq.s32.totalorder %s31, 0
      %p403 = por %p401, %p402
      %s404 = ssub.s32 %s33, %s40
      %p405 = scmp.eq.s32.totalorder %s404, 0
      %s407 = sadd.s32 %s406, 1
      %s408 = scalar_select %p405, %s406, %s407
      %p411 = pneg %p405
      %p412 = scmp.eq.s32.totalorder %s25, 3
      %p413 = por %p411, %p412
      %p414 = scmp.ne.s32.totalorder %s406, %s409
      %p415 = scmp.eq.s32.totalorder %s25, 0
      %p416 = por %p414, %p415
      %p417 = scmp.ne.s32.totalorder %s406, %s409
      %p418 = scmp.eq.s32.totalorder %s30, 3
      %p419 = por %p417, %p418
      %p420 = scmp.ne.s32.totalorder %s409, %s410
      %p421 = scmp.eq.s32.totalorder %s30, 0
      %p422 = por %p420, %p421
      %p423 = scmp.ne.s32.totalorder %s409, %s410
      %p424 = scmp.eq.s32.totalorder %s31, 3
      %p425 = por %p423, %p424
      %p427 = scmp.ne.s32.totalorder %s410, %s426
      %p428 = scmp.eq.s32.totalorder %s31, 0
      %p429 = por %p427, %p428
      %s430 = ssub.s32 %s33, %s40
      %p431 = scmp.eq.s32.totalorder %s430, 0
      %s433 = sadd.s32 %s432, 1
      %s434 = scalar_select %p431, %s432, %s433
      %p437 = pneg %p431
      %p438 = scmp.eq.s32.totalorder %s25, 3
      %p439 = por %p437, %p438
      %p440 = scmp.ne.s32.totalorder %s432, %s435
      %p441 = scmp.eq.s32.totalorder %s25, 0
      %p442 = por %p440, %p441
      %p443 = scmp.ne.s32.totalorder %s432, %s435
      %p444 = scmp.eq.s32.totalorder %s30, 3
      %p445 = por %p443, %p444
      %p446 = scmp.ne.s32.totalorder %s435, %s436
      %p447 = scmp.eq.s32.totalorder %s30, 0
      %p448 = por %p446, %p447
      %p449 = scmp.ne.s32.totalorder %s435, %s436
      %p450 = scmp.eq.s32.totalorder %s31, 3
      %p451 = por %p449, %p450
      %p453 = scmp.ne.s32.totalorder %s436, %s452
      %p454 = scmp.eq.s32.totalorder %s31, 0
      %p455 = por %p453, %p454
      %s456 = ssub.s32 %s32, %s44
      %p457 = scmp.eq.s32.totalorder %s456, 0
      %s459 = sadd.s32 %s458, 1
      %s460 = scalar_select %p457, %s458, %s459
      %p463 = pneg %p457
      %p464 = scmp.eq.s32.totalorder %s25, 3
      %p465 = por %p463, %p464
      %p466 = scmp.ne.s32.totalorder %s458, %s461
      %p467 = scmp.eq.s32.totalorder %s25, 0
      %p468 = por %p466, %p467
      %p469 = scmp.ne.s32.totalorder %s458, %s461
      %p470 = scmp.eq.s32.totalorder %s30, 3
      %p471 = por %p469, %p470
      %p472 = scmp.ne.s32.totalorder %s461, %s462
      %p473 = scmp.eq.s32.totalorder %s30, 0
      %p474 = por %p472, %p473
      %p475 = scmp.ne.s32.totalorder %s461, %s462
      %p476 = scmp.eq.s32.totalorder %s31, 3
      %p477 = por %p475, %p476
      %p479 = scmp.ne.s32.totalorder %s462, %s478
      %p480 = scmp.eq.s32.totalorder %s31, 0
      %p481 = por %p479, %p480
      %p482 = scmp.le.s32.totalorder 1, %s25
      %p483 = scmp.lt.s32.totalorder %s25, 5
      %p484 = pnand %p482, %p483
      %p485 = pneg %p484
      // Predicated region
      $region9: #{tst_encoder.1} parent=5 // pred_check
        _
      $region10: #{tst_encoder.1} parent=5 // pred_check_branch
        %487 = sbr.rel (%p484) target = $region12
      $region11: #{tst_encoder.1} parent=5 // pred_region
        %s488 = ssub.s32 %s25, 1
        // Predicated region
        $region13: #{tst_encoder.1} parent=11 // pred_check
          %p489 = pneg %p84
        $region14: #{tst_encoder.1} parent=11 // pred_check_branch
          %491 = sbr.rel (%p489) target = $region16
        $region15: #{tst_encoder.1} parent=11 // pred_region
          _
        $region16: #{tst_encoder.1} parent=11 // pred_fallthru
          _
      $region12: #{tst_encoder.1} parent=5 // pred_fallthru
        _
      %p492 = scmp.lt.s32.totalorder %s25, 4
      // Predicated region
      $region17: #{tst_encoder.1} parent=5 // pred_check
        %p493 = pneg %p492
      $region18: #{tst_encoder.1} parent=5 // pred_check_branch
        %495 = sbr.rel (%p493) target = $region20
      $region19: #{tst_encoder.1} parent=5 // pred_region
        // Predicated region
        $region21: #{tst_encoder.1} parent=19 // pred_check
          %p496 = pneg %p57
        $region22: #{tst_encoder.1} parent=19 // pred_check_branch
          %498 = sbr.rel (%p496) target = $region24
        $region23: #{tst_encoder.1} parent=19 // pred_region
          %p499 = scmp.lt.s32.totalorder %s32, 1
          %s500 = scalar_select %p499, %s32, 1
          %s501 = smul.addr %s500, 4
          %s502 = smul.addr %s501, 8
          %s503 = scalar_lea.vmem %s0, %s502
        $region24: #{tst_encoder.1} parent=19 // pred_fallthru
          _
        // Predicated region
        $region25: #{tst_encoder.1} parent=19 // pred_check
          %p504 = pneg %p104
        $region26: #{tst_encoder.1} parent=19 // pred_check_branch
          %506 = sbr.rel (%p504) target = $region28
        $region27: #{tst_encoder.1} parent=19 // pred_region
          %p507 = scmp.lt.s32.totalorder %s33, 1
          %s508 = scalar_select %p507, %s33, 1
          %s509 = smul.addr %s508, 4
          %s510 = smul.addr %s509, 4
          %s511 = scalar_lea.vmem %s2, %s510
        $region28: #{tst_encoder.1} parent=19 // pred_fallthru
          _
        // Predicated region
        $region29: #{tst_encoder.1} parent=19 // pred_check
          %p512 = pneg %p130
        $region30: #{tst_encoder.1} parent=19 // pred_check_branch
          %514 = sbr.rel (%p512) target = $region32
        $region31: #{tst_encoder.1} parent=19 // pred_region
          %p515 = scmp.lt.s32.totalorder %s33, 1
          %s516 = scalar_select %p515, %s33, 1
          %s517 = smul.addr %s516, 4
          %s518 = smul.addr %s517, 4
          %s519 = scalar_lea.vmem %s3, %s518
        $region32: #{tst_encoder.1} parent=19 // pred_fallthru
          _
        // Predicated region
        $region33: #{tst_encoder.1} parent=19 // pred_check
          %p520 = pneg %p156
        $region34: #{tst_encoder.1} parent=19 // pred_check_branch
          %522 = sbr.rel (%p520) target = $region36
        $region35: #{tst_encoder.1} parent=19 // pred_region
          %p523 = scmp.lt.s32.totalorder %s33, 1
          %s524 = scalar_select %p523, %s33, 1
          %s525 = smul.addr %s524, 2
          %s526 = smul.addr %s525, 4
          %s527 = scalar_lea.vmem %s4, %s526
        $region36: #{tst_encoder.1} parent=19 // pred_fallthru
          _
        // Predicated region
        $region37: #{tst_encoder.1} parent=19 // pred_check
          %p528 = pneg %p182
        $region38: #{tst_encoder.1} parent=19 // pred_check_branch
          %530 = sbr.rel (%p528) target = $region40
        $region39: #{tst_encoder.1} parent=19 // pred_region
          %p531 = scmp.lt.s32.totalorder %s33, 1
          %s532 = scalar_select %p531, %s33, 1
          %s533 = smul.addr %s532, 2
          %s534 = smul.addr %s533, 8
          %s535 = scalar_lea.vmem %s5, %s534
        $region40: #{tst_encoder.1} parent=19 // pred_fallthru
          _
        // Predicated region
        $region41: #{tst_encoder.1} parent=19 // pred_check
          %p536 = pneg %p208
        $region42: #{tst_encoder.1} parent=19 // pred_check_branch
          %538 = sbr.rel (%p536) target = $region44
        $region43: #{tst_encoder.1} parent=19 // pred_region
          %p539 = scmp.lt.s32.totalorder %s33, 1
          %s540 = scalar_select %p539, %s33, 1
          %s541 = smul.addr %s540, 4
          %s542 = scalar_lea.vmem %s6, %s541
        $region44: #{tst_encoder.1} parent=19 // pred_fallthru
          _
        // Predicated region
        $region45: #{tst_encoder.1} parent=19 // pred_check
          %p543 = pneg %p234
        $region46: #{tst_encoder.1} parent=19 // pred_check_branch
          %545 = sbr.rel (%p543) target = $region48
        $region47: #{tst_encoder.1} parent=19 // pred_region
          %p546 = scmp.lt.s32.totalorder %s33, 1
          %s547 = scalar_select %p546, %s33, 1
          %s548 = smul.addr %s547, 8
          %s549 = scalar_lea.vmem %s7, %s548
        $region48: #{tst_encoder.1} parent=19 // pred_fallthru
          _
        // Predicated region
        $region49: #{tst_encoder.1} parent=19 // pred_check
          %p550 = pneg %p260
        $region50: #{tst_encoder.1} parent=19 // pred_check_branch
          %552 = sbr.rel (%p550) target = $region52
        $region51: #{tst_encoder.1} parent=19 // pred_region
          %p553 = scmp.lt.s32.totalorder %s33, 1
          %s554 = scalar_select %p553, %s33, 1
          %s555 = smul.addr %s554, 8
          %s556 = smul.addr %s555, 4
          %s557 = scalar_lea.vmem %s8, %s556
        $region52: #{tst_encoder.1} parent=19 // pred_fallthru
          _
        // Predicated region
        $region53: #{tst_encoder.1} parent=19 // pred_check
          %p558 = pneg %p286
        $region54: #{tst_encoder.1} parent=19 // pred_check_branch
          %560 = sbr.rel (%p558) target = $region56
        $region55: #{tst_encoder.1} parent=19 // pred_region
          %p561 = scmp.lt.s32.totalorder %s33, 1
          %s562 = scalar_select %p561, %s33, 1
          %s563 = smul.addr %s562, 8
          %s564 = smul.addr %s563, 8
          %s565 = scalar_lea.vmem %s9, %s564
        $region56: #{tst_encoder.1} parent=19 // pred_fallthru
          _
        // Predicated region
        $region57: #{tst_encoder.1} parent=19 // pred_check
          %p566 = pneg %p312
        $region58: #{tst_encoder.1} parent=19 // pred_check_branch
          %568 = sbr.rel (%p566) target = $region60
        $region59: #{tst_encoder.1} parent=19 // pred_region
          %p569 = scmp.lt.s32.totalorder %s33, 1
          %s570 = scalar_select %p569, %s33, 1
          %s571 = smul.addr %s570, 2
          %s572 = smul.addr %s571, 4
          %s573 = scalar_lea.vmem %s10, %s572
        $region60: #{tst_encoder.1} parent=19 // pred_fallthru
          _
        // Predicated region
        $region61: #{tst_encoder.1} parent=19 // pred_check
          %p574 = pneg %p338
        $region62: #{tst_encoder.1} parent=19 // pred_check_branch
          %576 = sbr.rel (%p574) target = $region64
        $region63: #{tst_encoder.1} parent=19 // pred_region
          %p577 = scmp.lt.s32.totalorder %s33, 1
          %s578 = scalar_select %p577, %s33, 1
          %s579 = smul.addr %s578, 2
          %s580 = smul.addr %s579, 8
          %s581 = scalar_lea.vmem %s11, %s580
        $region64: #{tst_encoder.1} parent=19 // pred_fallthru
          _
        // Predicated region
        $region65: #{tst_encoder.1} parent=19 // pred_check
          %p582 = pneg %p364
        $region66: #{tst_encoder.1} parent=19 // pred_check_branch
          %584 = sbr.rel (%p582) target = $region68
        $region67: #{tst_encoder.1} parent=19 // pred_region
          %p585 = scmp.lt.s32.totalorder %s33, 1
          %s586 = scalar_select %p585, %s33, 1
          %s587 = smul.addr %s586, 4
          %s588 = smul.addr %s587, 4
          %s589 = scalar_lea.vmem %s12, %s588
        $region68: #{tst_encoder.1} parent=19 // pred_fallthru
          _
        // Predicated region
        $region69: #{tst_encoder.1} parent=19 // pred_check
          %p590 = pneg %p390
        $region70: #{tst_encoder.1} parent=19 // pred_check_branch
          %592 = sbr.rel (%p590) target = $region72
        $region71: #{tst_encoder.1} parent=19 // pred_region
          %p593 = scmp.lt.s32.totalorder %s33, 1
          %s594 = scalar_select %p593, %s33, 1
          %s595 = scalar_lea.vmem %s13, %s594
        $region72: #{tst_encoder.1} parent=19 // pred_fallthru
          _
        // Predicated region
        $region73: #{tst_encoder.1} parent=19 // pred_check
          %p596 = pneg %p416
        $region74: #{tst_encoder.1} parent=19 // pred_check_branch
          %598 = sbr.rel (%p596) target = $region76
        $region75: #{tst_encoder.1} parent=19 // pred_region
          %p599 = scmp.lt.s32.totalorder %s33, 1
          %s600 = scalar_select %p599, %s33, 1
          %s601 = smul.addr %s600, 4
          %s602 = smul.addr %s601, 4
          %s603 = scalar_lea.vmem %s14, %s602
        $region76: #{tst_encoder.1} parent=19 // pred_fallthru
          _
        // Predicated region
        $region77: #{tst_encoder.1} parent=19 // pred_check
          %p604 = pneg %p442
        $region78: #{tst_encoder.1} parent=19 // pred_check_branch
          %606 = sbr.rel (%p604) target = $region80
        $region79: #{tst_encoder.1} parent=19 // pred_region
          %p607 = scmp.lt.s32.totalorder %s33, 1
          %s608 = scalar_select %p607, %s33, 1
          %s609 = smul.addr %s608, 3
          %s610 = smul.addr %s609, 8
          %s611 = scalar_lea.vmem %s15, %s610
        $region80: #{tst_encoder.1} parent=19 // pred_fallthru
          _
      $region20: #{tst_encoder.1} parent=5 // pred_fallthru
        _
      %p612 = scmp.le.s32.totalorder 1, %s25
      %p613 = scmp.lt.s32.totalorder %s25, 5
      %p614 = pnand %p612, %p613
      %p615 = pneg %p614
      // Predicated region
      $region81: #{tst_encoder.1} parent=5 // pred_check
        _
      $region82: #{tst_encoder.1} parent=5 // pred_check_branch
        %617 = sbr.rel (%p614) target = $region84
      $region83: #{tst_encoder.1} parent=5 // pred_region
        %s618 = ssub.s32 %s25, 1
        %p619 = scmp.lt.s32.totalorder %s34, 1
        %s620 = scalar_select %p619, %s34, 1
        %s621 = smul.addr %s620, 4
        %s622 = smul.addr %s621, 8
        %s623 = scalar_lea.vmem %s0, %s622
        %p624 = pneg %p63
        %p625 = pneg %p60
        %p626 = pneg %p84
        %p627 = pneg %p81
        %p628 = scmp.lt.s32.totalorder %s35, 1
        %s629 = scalar_select %p628, %s35, 1
        %s630 = smul.addr %s629, 4
        %s631 = smul.addr %s630, 4
        %s632 = scalar_lea.vmem %s2, %s631
        %p633 = pneg %p110
        %p634 = pneg %p107
        %p635 = scmp.lt.s32.totalorder %s35, 1
        %s636 = scalar_select %p635, %s35, 1
        %s637 = smul.addr %s636, 4
        %s638 = smul.addr %s637, 4
        %s639 = scalar_lea.vmem %s3, %s638
        %p640 = pneg %p136
        %p641 = pneg %p133
        %p642 = scmp.lt.s32.totalorder %s35, 1
        %s643 = scalar_select %p642, %s35, 1
        %s644 = smul.addr %s643, 2
        %s645 = smul.addr %s644, 4
        %s646 = scalar_lea.vmem %s4, %s645
        %p647 = pneg %p162
        %p648 = pneg %p159
        %p649 = scmp.lt.s32.totalorder %s35, 1
        %s650 = scalar_select %p649, %s35, 1
        %s651 = smul.addr %s650, 2
        %s652 = smul.addr %s651, 8
        %s653 = scalar_lea.vmem %s5, %s652
        %p654 = pneg %p188
        %p655 = pneg %p185
        %p656 = scmp.lt.s32.totalorder %s35, 1
        %s657 = scalar_select %p656, %s35, 1
        %s658 = smul.addr %s657, 4
        %s659 = scalar_lea.vmem %s6, %s658
        %p660 = pneg %p214
        %p661 = pneg %p211
        %p662 = scmp.lt.s32.totalorder %s35, 1
        %s663 = scalar_select %p662, %s35, 1
        %s664 = smul.addr %s663, 8
        %s665 = scalar_lea.vmem %s7, %s664
        %p666 = pneg %p240
        %p667 = pneg %p237
        %p668 = scmp.lt.s32.totalorder %s35, 1
        %s669 = scalar_select %p668, %s35, 1
        %s670 = smul.addr %s669, 8
        %s671 = smul.addr %s670, 4
        %s672 = scalar_lea.vmem %s8, %s671
        %p673 = pneg %p266
        %p674 = pneg %p263
        %p675 = scmp.lt.s32.totalorder %s35, 1
        %s676 = scalar_select %p675, %s35, 1
        %s677 = smul.addr %s676, 8
        %s678 = smul.addr %s677, 8
        %s679 = scalar_lea.vmem %s9, %s678
        %p680 = pneg %p292
        %p681 = pneg %p289
        %p682 = scmp.lt.s32.totalorder %s35, 1
        %s683 = scalar_select %p682, %s35, 1
        %s684 = smul.addr %s683, 2
        %s685 = smul.addr %s684, 4
        %s686 = scalar_lea.vmem %s10, %s685
        %p687 = pneg %p318
        %p688 = pneg %p315
        %p689 = scmp.lt.s32.totalorder %s35, 1
        %s690 = scalar_select %p689, %s35, 1
        %s691 = smul.addr %s690, 2
        %s692 = smul.addr %s691, 8
        %s693 = scalar_lea.vmem %s11, %s692
        %p694 = pneg %p344
        %p695 = pneg %p341
        %p696 = scmp.lt.s32.totalorder %s35, 1
        %s697 = scalar_select %p696, %s35, 1
        %s698 = smul.addr %s697, 4
        %s699 = smul.addr %s698, 4
        %s700 = scalar_lea.vmem %s12, %s699
        %p701 = pneg %p370
        %p702 = pneg %p367
        %p703 = scmp.lt.s32.totalorder %s35, 1
        %s704 = scalar_select %p703, %s35, 1
        %s705 = scalar_lea.vmem %s13, %s704
        %p706 = pneg %p396
        %p707 = pneg %p393
        %p708 = scmp.lt.s32.totalorder %s35, 1
        %s709 = scalar_select %p708, %s35, 1
        %s710 = smul.addr %s709, 4
        %s711 = smul.addr %s710, 4
        %s712 = scalar_lea.vmem %s14, %s711
        %p713 = pneg %p422
        %p714 = pneg %p419
        %p715 = scmp.lt.s32.totalorder %s35, 1
        %s716 = scalar_select %p715, %s35, 1
        %s717 = smul.addr %s716, 3
        %s718 = smul.addr %s717, 8
        %s719 = scalar_lea.vmem %s15, %s718
        %p720 = pneg %p448
        %p721 = pneg %p445
        %p722 = pneg %p474
        %p723 = pneg %p471
        %s724 = sand.u32 %s461, 1
        %s725 = scalar_lea.sflag [#allocation4], %s724
        %s726 = sand.u32 %s461, 1
        %s727 = smul.addr %s726, 32
        %s728 = scalar_lea.vmem [#allocation3], %s727
        %p729 = scmp.lt.s32.totalorder %s34, 1
        %s730 = scalar_select %p729, %s34, 1
        %s731 = smul.addr %s730, 4
        %s732 = smul.addr %s731, 8
        %s733 = scalar_lea.vmem %s0, %s732
        %p734 = scmp.lt.s32.totalorder %s35, 1
        %s735 = scalar_select %p734, %s35, 1
        %s736 = smul.addr %s735, 4
        %s737 = smul.addr %s736, 4
        %s738 = scalar_lea.vmem %s2, %s737
        %p739 = scmp.lt.s32.totalorder %s35, 1
        %s740 = scalar_select %p739, %s35, 1
        %s741 = smul.addr %s740, 4
        %s742 = smul.addr %s741, 4
        %s743 = scalar_lea.vmem %s3, %s742
        %p744 = scmp.lt.s32.totalorder %s35, 1
        %s745 = scalar_select %p744, %s35, 1
        %s746 = smul.addr %s745, 2
        %s747 = smul.addr %s746, 4
        %s748 = scalar_lea.vmem %s4, %s747
        %p749 = scmp.lt.s32.totalorder %s35, 1
        %s750 = scalar_select %p749, %s35, 1
        %s751 = smul.addr %s750, 2
        %s752 = smul.addr %s751, 8
        %s753 = scalar_lea.vmem %s5, %s752
        %p754 = scmp.lt.s32.totalorder %s35, 1
        %s755 = scalar_select %p754, %s35, 1
        %s756 = smul.addr %s755, 4
        %s757 = scalar_lea.vmem %s6, %s756
        %p758 = scmp.lt.s32.totalorder %s35, 1
        %s759 = scalar_select %p758, %s35, 1
        %s760 = smul.addr %s759, 8
        %s761 = scalar_lea.vmem %s7, %s760
        %p762 = scmp.lt.s32.totalorder %s35, 1
        %s763 = scalar_select %p762, %s35, 1
        %s764 = smul.addr %s763, 8
        %s765 = smul.addr %s764, 4
        %s766 = scalar_lea.vmem %s8, %s765
        %p767 = scmp.lt.s32.totalorder %s35, 1
        %s768 = scalar_select %p767, %s35, 1
        %s769 = smul.addr %s768, 8
        %s770 = smul.addr %s769, 8
        %s771 = scalar_lea.vmem %s9, %s770
        %p772 = scmp.lt.s32.totalorder %s35, 1
        %s773 = scalar_select %p772, %s35, 1
        %s774 = smul.addr %s773, 2
        %s775 = smul.addr %s774, 4
        %s776 = scalar_lea.vmem %s10, %s775
        %p777 = scmp.lt.s32.totalorder %s35, 1
        %s778 = scalar_select %p777, %s35, 1
        %s779 = smul.addr %s778, 2
        %s780 = smul.addr %s779, 8
        %s781 = scalar_lea.vmem %s11, %s780
        %p782 = scmp.lt.s32.totalorder %s35, 1
        %s783 = scalar_select %p782, %s35, 1
        %s784 = smul.addr %s783, 4
        %s785 = smul.addr %s784, 4
        %s786 = scalar_lea.vmem %s12, %s785
        %p787 = scmp.lt.s32.totalorder %s35, 1
        %s788 = scalar_select %p787, %s35, 1
        %s789 = scalar_lea.vmem %s13, %s788
        %p790 = scmp.lt.s32.totalorder %s35, 1
        %s791 = scalar_select %p790, %s35, 1
        %s792 = smul.addr %s791, 4
        %s793 = smul.addr %s792, 4
        %s794 = scalar_lea.vmem %s14, %s793
        %p795 = scmp.lt.s32.totalorder %s35, 1
        %s796 = scalar_select %p795, %s35, 1
        %s797 = smul.addr %s796, 3
        %s798 = smul.addr %s797, 8
        %s799 = scalar_lea.vmem %s15, %s798
        %p801 = scmp.eq.s32.totalorder %s35, 0
        // Predicated region
        $region85: #{tst_encoder.1} parent=83 // pred_check
          %p802 = pneg %p801
        $region86: #{tst_encoder.1} parent=83 // pred_check_branch
          %804 = sbr.rel (%p802) target = $region88
        $region87: #{tst_encoder.1} parent=83 // pred_region
          %v805 = vld [vmem:[%s733] sm:$0xff]
          %v806 = vld [vmem:[%s733 + $0x8] sm:$0xff]
          %v807 = vld [vmem:[%s733 + $0x10] sm:$0xff]
          %v808 = vld [vmem:[%s733 + $0x18] sm:$0xff]
          %vm809 = vcmask 261120
          %810 = vst.msk [vmem:[#allocation2] sm:$0xff] %vm809, %v805
          %811 = vst.msk [vmem:[#allocation2 + $0x8] sm:$0xff] %vm809, %v806
          %812 = vst.msk [vmem:[#allocation2 + $0x10] sm:$0xff] %vm809, %v807
          %813 = vst.msk [vmem:[#allocation2 + $0x18] sm:$0xff] %vm809, %v808
        $region88: #{tst_encoder.1} parent=83 // pred_fallthru
          _
        %v814 = vld [vmem:[#allocation2] sm:$0xff]
        %v815 = vld [vmem:[#allocation2 + $0x8] sm:$0xff]
        %v816 = vld [vmem:[#allocation2 + $0x10] sm:$0xff]
        %v817 = vld [vmem:[#allocation2 + $0x18] sm:$0xff]
        %v818 = vld [vmem:[%s1] sm:$0xff]
        %v819 = vld [vmem:[%s1 + $0x8] sm:$0xff]
        %v820 = vld [vmem:[%s1 + $0x10] sm:$0xff]
        %v821 = vld [vmem:[%s1 + $0x18] sm:$0xff]
        %v822 = vld [vmem:[%s738] sm:$0xf]
        %v823 = vld [vmem:[%s738 + $0x4] sm:$0xf]
        %v824 = vld [vmem:[%s738 + $0x8] sm:$0xf]
        %v825 = vld [vmem:[%s738 + $0xc] sm:$0xf]
        %v826 = vpack.c.bf16 %v815, %v814
        %v827 = vpack.c.bf16 %v817, %v816
        %v832 = vunpack.c.l.b16 %v822
        %v833 = vunpack.c.l.b16 %v823
        %v834 = vunpack.c.l.b16 %v824
        %v835 = vunpack.c.l.b16 %v825
        %v836 = vpack.c.b16 %v833, %v832
        %v837 = vpack.c.b16 %v835, %v834
        %vm840 = vcmask 261120
        %v842 = vsel %vm840, %v826, 0
        %v845 = vsel %vm840, %v827, 0
        %847 = vmatpush.bf16.msra.mxu0 0
        %848 = vmatpush.bf16.msra.mxu0 0
        %849 = vmatpush.bf16.msra.mxu0 0
        %850 = vmatpush.bf16.msra.mxu0 0
        %851 = vmatpush.bf16.msra.mxu0 0
        %852 = vmatpush.bf16.msra.mxu0 0
        %853 = vmatpush.bf16.msra.mxu0 %v837
        %854 = vmatpush.bf16.msra.mxu0 %v836
        %855 = vmatmul.bf16.gmra.mxu0 %v842
        %v856 = vpop.f32.mrf.mxu0
        %v857 = vadd.f32 0.0, %v856
        %v858 = vpop.f32.mrf.mxu0
        %v859 = vadd.f32 0.0, %v858
        %860 = vmatmul.bf16.gmra.mxu0 %v845
        %v861 = vpop.f32.mrf.mxu0
        %v862 = vadd.f32 0.0, %v861
        %v863 = vpop.f32.mrf.mxu0
        %v864 = vadd.f32 0.0, %v863
        %865 = vdwg.mxu0
        %v866 = vld [vmem:[%s799] sm:$0x1]
        %v867 = vperm.slane %v866, 0
        %v868 = vadd.f32 %v857, %v867
        %v869 = vadd.f32 %v859, %v867
        %v870 = vadd.f32 %v862, %v867
        %v871 = vadd.f32 %v864, %v867
        %v872 = vld [vmem:[%s799 + $0x4] sm:$0x1]
        %v873 = vld [vmem:[%s799 + $0x8] sm:$0x1]
        %v874 = vsel %vm840, %v868, 0.0
        %875 = vadd.xlane.f32.xlu0 %v874
        %v876 = vpop.xlane.xlu0 %875
        %v877 = vsel %vm840, %v869, 0.0
        %878 = vadd.xlane.f32.xlu0 %v877
        %v879 = vpop.xlane.xlu0 %878
        %v880 = vsel %vm840, %v870, 0.0
        %881 = vadd.xlane.f32.xlu0 %v880
        %v882 = vpop.xlane.xlu0 %881
        %v883 = vsel %vm840, %v871, 0.0
        %884 = vadd.xlane.f32.xlu0 %v883
        %v885 = vpop.xlane.xlu0 %884
        %v886 = vrcp.pop 32.0
        %v887 = vmul.f32 32.0, %v886
        %v888 = vsub.f32 1.0, %v887
        %v889 = vmul.f32 %v886, %v888
        %v890 = vadd.f32 %v886, %v889
        %vm891 = vweird.f32 %v886
        %v892 = vsel %vm891, %v886, %v890
        %v893 = vmul.f32 %v876, %v892
        %v894 = vmul.f32 %v879, %v892
        %v895 = vmul.f32 %v882, %v892
        %v896 = vmul.f32 %v885, %v892
        %v897 = vsub.f32 %v868, %v893
        %v898 = vsub.f32 %v869, %v894
        %v899 = vsub.f32 %v870, %v895
        %v900 = vsub.f32 %v871, %v896
        %v901 = vmul.f32 %v897, %v897
        %v902 = vmul.f32 %v898, %v898
        %v903 = vmul.f32 %v899, %v899
        %v904 = vmul.f32 %v900, %v900
        %v905 = vsel %vm840, %v901, 0.0
        %906 = vadd.xlane.f32.xlu0 %v905
        %v907 = vpop.xlane.xlu0 %906
        %v908 = vsel %vm840, %v902, 0.0
        %909 = vadd.xlane.f32.xlu0 %v908
        %v910 = vpop.xlane.xlu0 %909
        %v911 = vsel %vm840, %v903, 0.0
        %912 = vadd.xlane.f32.xlu0 %v911
        %v913 = vpop.xlane.xlu0 %912
        %v914 = vsel %vm840, %v904, 0.0
        %915 = vadd.xlane.f32.xlu0 %v914
        %v916 = vpop.xlane.xlu0 %915
        %v917 = vmul.f32 %v907, %v892
        %v918 = vmul.f32 %v910, %v892
        %v919 = vmul.f32 %v913, %v892
        %v920 = vmul.f32 %v916, %v892
        %v921 = vadd.f32 %v917, 1e-05
        %v922 = vadd.f32 %v918, 1e-05
        %v923 = vadd.f32 %v919, 1e-05
        %v924 = vadd.f32 %v920, 1e-05
        %v925 = vrsqrt.pop %v921
        %v926 = vmul.f32 %v925, %v921
        %v927 = vmul.f32 %v926, %v925
        %v928 = vmul.f32 0.5, %v927
        %v929 = vsub.f32 1.5, %v928
        %v930 = vmul.f32 %v925, %v929
        %vm931 = vweird.f32 %v921
        %vm932 = vweird.f32 %v925
        %vm933 = vmor %vm931, %vm932
        %v934 = vsel %vm933, %v925, %v930
        %v935 = vrsqrt.pop %v922
        %v936 = vmul.f32 %v935, %v922
        %v937 = vmul.f32 %v936, %v935
        %v938 = vmul.f32 0.5, %v937
        %v939 = vsub.f32 1.5, %v938
        %v940 = vmul.f32 %v935, %v939
        %vm941 = vweird.f32 %v922
        %vm942 = vweird.f32 %v935
        %vm943 = vmor %vm941, %vm942
        %v944 = vsel %vm943, %v935, %v940
        %v945 = vrsqrt.pop %v923
        %v946 = vmul.f32 %v945, %v923
        %v947 = vmul.f32 %v946, %v945
        %v948 = vmul.f32 0.5, %v947
        %v949 = vsub.f32 1.5, %v948
        %v950 = vmul.f32 %v945, %v949
        %vm951 = vweird.f32 %v923
        %vm952 = vweird.f32 %v945
        %vm953 = vmor %vm951, %vm952
        %v954 = vsel %vm953, %v945, %v950
        %v955 = vrsqrt.pop %v924
        %v956 = vmul.f32 %v955, %v924
        %v957 = vmul.f32 %v956, %v955
        %v958 = vmul.f32 0.5, %v957
        %v959 = vsub.f32 1.5, %v958
        %v960 = vmul.f32 %v955, %v959
        %vm961 = vweird.f32 %v924
        %vm962 = vweird.f32 %v955
        %vm963 = vmor %vm961, %vm962
        %v964 = vsel %vm963, %v955, %v960
        %v965 = vmul.f32 %v897, %v934
        %v966 = vmul.f32 %v898, %v944
        %v967 = vmul.f32 %v899, %v954
        %v968 = vmul.f32 %v900, %v964
        %v969 = vperm.slane %v872, 0
        %v970 = vmul.f32 %v965, %v969
        %v971 = vmul.f32 %v966, %v969
        %v972 = vmul.f32 %v967, %v969
        %v973 = vmul.f32 %v968, %v969
        %v974 = vperm.slane %v873, 0
        %v975 = vadd.f32 %v970, %v974
        %v976 = vadd.f32 %v971, %v974
        %v977 = vadd.f32 %v972, %v974
        %v978 = vadd.f32 %v973, %v974
        %v979 = vmax.f32 %v975, 0.0
        %v980 = vmax.f32 %v976, 0.0
        %v981 = vmax.f32 %v977, 0.0
        %v982 = vmax.f32 %v978, 0.0
        %v983 = vld [vmem:[%s799 + $0x1] sm:$0x1]
        %v984 = vperm.slane %v983, 0
        %986 = vrot.lane.b32.xlu0 %v984, 32
        %v987 = vpop.permute.xlu0 %986
        %v989 = vadd.f32 %v857, %v987
        %v990 = vadd.f32 %v859, %v987
        %v991 = vadd.f32 %v862, %v987
        %v992 = vadd.f32 %v864, %v987
        %v993 = vld [vmem:[%s799 + $0x5] sm:$0x1]
        %v994 = vld [vmem:[%s799 + $0x9] sm:$0x1]
        %999 = vrot.lane.b32.xlu0 %v989, 96
        %v1000 = vpop.permute.xlu0 %999
        %1001 = vrot.lane.b32.xlu0 %v990, 96
        %v1002 = vpop.permute.xlu0 %1001
        %1003 = vrot.lane.b32.xlu0 %v991, 96
        %v1004 = vpop.permute.xlu0 %1003
        %1005 = vrot.lane.b32.xlu0 %v992, 96
        %v1006 = vpop.permute.xlu0 %1005
        %v1011 = vsel %vm840, %v1000, 0.0
        %1012 = vadd.xlane.f32.xlu0 %v1011
        %v1013 = vpop.xlane.xlu0 %1012
        %v1014 = vsel %vm840, %v1002, 0.0
        %1015 = vadd.xlane.f32.xlu0 %v1014
        %v1016 = vpop.xlane.xlu0 %1015
        %v1017 = vsel %vm840, %v1004, 0.0
        %1018 = vadd.xlane.f32.xlu0 %v1017
        %v1019 = vpop.xlane.xlu0 %1018
        %v1020 = vsel %vm840, %v1006, 0.0
        %1021 = vadd.xlane.f32.xlu0 %v1020
        %v1022 = vpop.xlane.xlu0 %1021
        %v1023 = vmul.f32 %v1013, %v892
        %v1024 = vmul.f32 %v1016, %v892
        %v1025 = vmul.f32 %v1019, %v892
        %v1026 = vmul.f32 %v1022, %v892
        %v1027 = vsub.f32 %v989, %v1023
        %v1028 = vsub.f32 %v990, %v1024
        %v1029 = vsub.f32 %v991, %v1025
        %v1030 = vsub.f32 %v992, %v1026
        %v1031 = vmul.f32 %v1027, %v1027
        %v1032 = vmul.f32 %v1028, %v1028
        %v1033 = vmul.f32 %v1029, %v1029
        %v1034 = vmul.f32 %v1030, %v1030
        %1039 = vrot.lane.b32.xlu0 %v1031, 96
        %v1040 = vpop.permute.xlu0 %1039
        %1041 = vrot.lane.b32.xlu0 %v1032, 96
        %v1042 = vpop.permute.xlu0 %1041
        %1043 = vrot.lane.b32.xlu0 %v1033, 96
        %v1044 = vpop.permute.xlu0 %1043
        %1045 = vrot.lane.b32.xlu0 %v1034, 96
        %v1046 = vpop.permute.xlu0 %1045
        %v1051 = vsel %vm840, %v1040, 0.0
        %1052 = vadd.xlane.f32.xlu0 %v1051
        %v1053 = vpop.xlane.xlu0 %1052
        %v1054 = vsel %vm840, %v1042, 0.0
        %1055 = vadd.xlane.f32.xlu0 %v1054
        %v1056 = vpop.xlane.xlu0 %1055
        %v1057 = vsel %vm840, %v1044, 0.0
        %1058 = vadd.xlane.f32.xlu0 %v1057
        %v1059 = vpop.xlane.xlu0 %1058
        %v1060 = vsel %vm840, %v1046, 0.0
        %1061 = vadd.xlane.f32.xlu0 %v1060
        %v1062 = vpop.xlane.xlu0 %1061
        %v1063 = vmul.f32 %v1053, %v892
        %v1064 = vmul.f32 %v1056, %v892
        %v1065 = vmul.f32 %v1059, %v892
        %v1066 = vmul.f32 %v1062, %v892
        %v1067 = vadd.f32 %v1063, 1e-05
        %v1068 = vadd.f32 %v1064, 1e-05
        %v1069 = vadd.f32 %v1065, 1e-05
        %v1070 = vadd.f32 %v1066, 1e-05
        %v1071 = vrsqrt.pop %v1067
        %v1072 = vmul.f32 %v1071, %v1067
        %v1073 = vmul.f32 %v1072, %v1071
        %v1074 = vmul.f32 0.5, %v1073
        %v1075 = vsub.f32 1.5, %v1074
        %v1076 = vmul.f32 %v1071, %v1075
        %vm1077 = vweird.f32 %v1067
        %vm1078 = vweird.f32 %v1071
        %vm1079 = vmor %vm1077, %vm1078
        %v1080 = vsel %vm1079, %v1071, %v1076
        %v1081 = vrsqrt.pop %v1068
        %v1082 = vmul.f32 %v1081, %v1068
        %v1083 = vmul.f32 %v1082, %v1081
        %v1084 = vmul.f32 0.5, %v1083
        %v1085 = vsub.f32 1.5, %v1084
        %v1086 = vmul.f32 %v1081, %v1085
        %vm1087 = vweird.f32 %v1068
        %vm1088 = vweird.f32 %v1081
        %vm1089 = vmor %vm1087, %vm1088
        %v1090 = vsel %vm1089, %v1081, %v1086
        %v1091 = vrsqrt.pop %v1069
        %v1092 = vmul.f32 %v1091, %v1069
        %v1093 = vmul.f32 %v1092, %v1091
        %v1094 = vmul.f32 0.5, %v1093
        %v1095 = vsub.f32 1.5, %v1094
        %v1096 = vmul.f32 %v1091, %v1095
        %vm1097 = vweird.f32 %v1069
        %vm1098 = vweird.f32 %v1091
        %vm1099 = vmor %vm1097, %vm1098
        %v1100 = vsel %vm1099, %v1091, %v1096
        %v1101 = vrsqrt.pop %v1070
        %v1102 = vmul.f32 %v1101, %v1070
        %v1103 = vmul.f32 %v1102, %v1101
        %v1104 = vmul.f32 0.5, %v1103
        %v1105 = vsub.f32 1.5, %v1104
        %v1106 = vmul.f32 %v1101, %v1105
        %vm1107 = vweird.f32 %v1070
        %vm1108 = vweird.f32 %v1101
        %vm1109 = vmor %vm1107, %vm1108
        %v1110 = vsel %vm1109, %v1101, %v1106
        %v1111 = vmul.f32 %v1027, %v1080
        %v1112 = vmul.f32 %v1028, %v1090
        %v1113 = vmul.f32 %v1029, %v1100
        %v1114 = vmul.f32 %v1030, %v1110
        %v1115 = vperm.slane %v993, 0
        %1117 = vrot.lane.b32.xlu0 %v1115, 32
        %v1118 = vpop.permute.xlu0 %1117
        %v1120 = vmul.f32 %v1111, %v1118
        %v1121 = vmul.f32 %v1112, %v1118
        %v1122 = vmul.f32 %v1113, %v1118
        %v1123 = vmul.f32 %v1114, %v1118
        %v1124 = vperm.slane %v994, 0
        %1126 = vrot.lane.b32.xlu0 %v1124, 32
        %v1127 = vpop.permute.xlu0 %1126
        %v1129 = vadd.f32 %v1120, %v1127
        %v1130 = vadd.f32 %v1121, %v1127
        %v1131 = vadd.f32 %v1122, %v1127
        %v1132 = vadd.f32 %v1123, %v1127
        %v1133 = vmax.f32 %v1129, 0.0
        %v1134 = vmax.f32 %v1130, 0.0
        %v1135 = vmax.f32 %v1131, 0.0
        %v1136 = vmax.f32 %v1132, 0.0
        %v1137 = vld [vmem:[%s799 + $0x2] sm:$0x1]
        %v1138 = vperm.slane %v1137, 0
        %1140 = vrot.lane.b32.xlu0 %v1138, 64
        %v1141 = vpop.permute.xlu0 %1140
        %v1143 = vadd.f32 %v857, %v1141
        %v1144 = vadd.f32 %v859, %v1141
        %v1145 = vadd.f32 %v862, %v1141
        %v1146 = vadd.f32 %v864, %v1141
        %v1147 = vld [vmem:[%s799 + $0x6] sm:$0x1]
        %v1148 = vld [vmem:[%s799 + $0xa] sm:$0x1]
        %1153 = vrot.lane.b32.xlu0 %v1143, 64
        %v1154 = vpop.permute.xlu0 %1153
        %1155 = vrot.lane.b32.xlu0 %v1144, 64
        %v1156 = vpop.permute.xlu0 %1155
        %1157 = vrot.lane.b32.xlu0 %v1145, 64
        %v1158 = vpop.permute.xlu0 %1157
        %1159 = vrot.lane.b32.xlu0 %v1146, 64
        %v1160 = vpop.permute.xlu0 %1159
        %v1165 = vsel %vm840, %v1154, 0.0
        %1166 = vadd.xlane.f32.xlu0 %v1165
        %v1167 = vpop.xlane.xlu0 %1166
        %v1168 = vsel %vm840, %v1156, 0.0
        %1169 = vadd.xlane.f32.xlu0 %v1168
        %v1170 = vpop.xlane.xlu0 %1169
        %v1171 = vsel %vm840, %v1158, 0.0
        %1172 = vadd.xlane.f32.xlu0 %v1171
        %v1173 = vpop.xlane.xlu0 %1172
        %v1174 = vsel %vm840, %v1160, 0.0
        %1175 = vadd.xlane.f32.xlu0 %v1174
        %v1176 = vpop.xlane.xlu0 %1175
        %v1177 = vmul.f32 %v1167, %v892
        %v1178 = vmul.f32 %v1170, %v892
        %v1179 = vmul.f32 %v1173, %v892
        %v1180 = vmul.f32 %v1176, %v892
        %v1181 = vsub.f32 %v1143, %v1177
        %v1182 = vsub.f32 %v1144, %v1178
        %v1183 = vsub.f32 %v1145, %v1179
        %v1184 = vsub.f32 %v1146, %v1180
        %v1185 = vmul.f32 %v1181, %v1181
        %v1186 = vmul.f32 %v1182, %v1182
        %v1187 = vmul.f32 %v1183, %v1183
        %v1188 = vmul.f32 %v1184, %v1184
        %1193 = vrot.lane.b32.xlu0 %v1185, 64
        %v1194 = vpop.permute.xlu0 %1193
        %1195 = vrot.lane.b32.xlu0 %v1186, 64
        %v1196 = vpop.permute.xlu0 %1195
        %1197 = vrot.lane.b32.xlu0 %v1187, 64
        %v1198 = vpop.permute.xlu0 %1197
        %1199 = vrot.lane.b32.xlu0 %v1188, 64
        %v1200 = vpop.permute.xlu0 %1199
        %v1205 = vsel %vm840, %v1194, 0.0
        %1206 = vadd.xlane.f32.xlu0 %v1205
        %v1207 = vpop.xlane.xlu0 %1206
        %v1208 = vsel %vm840, %v1196, 0.0
        %1209 = vadd.xlane.f32.xlu0 %v1208
        %v1210 = vpop.xlane.xlu0 %1209
        %v1211 = vsel %vm840, %v1198, 0.0
        %1212 = vadd.xlane.f32.xlu0 %v1211
        %v1213 = vpop.xlane.xlu0 %1212
        %v1214 = vsel %vm840, %v1200, 0.0
        %1215 = vadd.xlane.f32.xlu0 %v1214
        %v1216 = vpop.xlane.xlu0 %1215
        %v1217 = vmul.f32 %v1207, %v892
        %v1218 = vmul.f32 %v1210, %v892
        %v1219 = vmul.f32 %v1213, %v892
        %v1220 = vmul.f32 %v1216, %v892
        %v1221 = vadd.f32 %v1217, 1e-05
        %v1222 = vadd.f32 %v1218, 1e-05
        %v1223 = vadd.f32 %v1219, 1e-05
        %v1224 = vadd.f32 %v1220, 1e-05
        %v1225 = vrsqrt.pop %v1221
        %v1226 = vmul.f32 %v1225, %v1221
        %v1227 = vmul.f32 %v1226, %v1225
        %v1228 = vmul.f32 0.5, %v1227
        %v1229 = vsub.f32 1.5, %v1228
        %v1230 = vmul.f32 %v1225, %v1229
        %vm1231 = vweird.f32 %v1221
        %vm1232 = vweird.f32 %v1225
        %vm1233 = vmor %vm1231, %vm1232
        %v1234 = vsel %vm1233, %v1225, %v1230
        %v1235 = vrsqrt.pop %v1222
        %v1236 = vmul.f32 %v1235, %v1222
        %v1237 = vmul.f32 %v1236, %v1235
        %v1238 = vmul.f32 0.5, %v1237
        %v1239 = vsub.f32 1.5, %v1238
        %v1240 = vmul.f32 %v1235, %v1239
        %vm1241 = vweird.f32 %v1222
        %vm1242 = vweird.f32 %v1235
        %vm1243 = vmor %vm1241, %vm1242
        %v1244 = vsel %vm1243, %v1235, %v1240
        %v1245 = vrsqrt.pop %v1223
        %v1246 = vmul.f32 %v1245, %v1223
        %v1247 = vmul.f32 %v1246, %v1245
        %v1248 = vmul.f32 0.5, %v1247
        %v1249 = vsub.f32 1.5, %v1248
        %v1250 = vmul.f32 %v1245, %v1249
        %vm1251 = vweird.f32 %v1223
        %vm1252 = vweird.f32 %v1245
        %vm1253 = vmor %vm1251, %vm1252
        %v1254 = vsel %vm1253, %v1245, %v1250
        %v1255 = vrsqrt.pop %v1224
        %v1256 = vmul.f32 %v1255, %v1224
        %v1257 = vmul.f32 %v1256, %v1255
        %v1258 = vmul.f32 0.5, %v1257
        %v1259 = vsub.f32 1.5, %v1258
        %v1260 = vmul.f32 %v1255, %v1259
        %vm1261 = vweird.f32 %v1224
        %vm1262 = vweird.f32 %v1255
        %vm1263 = vmor %vm1261, %vm1262
        %v1264 = vsel %vm1263, %v1255, %v1260
        %v1265 = vmul.f32 %v1181, %v1234
        %v1266 = vmul.f32 %v1182, %v1244
        %v1267 = vmul.f32 %v1183, %v1254
        %v1268 = vmul.f32 %v1184, %v1264
        %v1269 = vperm.slane %v1147, 0
        %1271 = vrot.lane.b32.xlu0 %v1269, 64
        %v1272 = vpop.permute.xlu0 %1271
        %v1274 = vmul.f32 %v1265, %v1272
        %v1275 = vmul.f32 %v1266, %v1272
        %v1276 = vmul.f32 %v1267, %v1272
        %v1277 = vmul.f32 %v1268, %v1272
        %v1278 = vperm.slane %v1148, 0
        %1280 = vrot.lane.b32.xlu0 %v1278, 64
        %v1281 = vpop.permute.xlu0 %1280
        %v1283 = vadd.f32 %v1274, %v1281
        %v1284 = vadd.f32 %v1275, %v1281
        %v1285 = vadd.f32 %v1276, %v1281
        %v1286 = vadd.f32 %v1277, %v1281
        %v1287 = vmax.f32 %v1283, 0.0
        %v1288 = vmax.f32 %v1284, 0.0
        %v1289 = vmax.f32 %v1285, 0.0
        %v1290 = vmax.f32 %v1286, 0.0
        %v1291 = vmul.f32 %v979, 0.63661975
        %v1292 = vmul.f32 %v980, 0.63661975
        %v1293 = vmul.f32 %v981, 0.63661975
        %v1294 = vmul.f32 %v982, 0.63661975
        %v1295 = vadd.f32 %v1291, 0.5
        %v1296 = vadd.f32 %v1292, 0.5
        %v1297 = vadd.f32 %v1293, 0.5
        %v1298 = vadd.f32 %v1294, 0.5
        %v1299 = vfloor.f32 %v1295
        %v1300 = vfloor.f32 %v1296
        %v1301 = vfloor.f32 %v1297
        %v1302 = vfloor.f32 %v1298
        %v1303 = vmul.f32 %v1299, 1.5707964
        %v1304 = vmul.f32 %v1300, 1.5707964
        %v1305 = vmul.f32 %v1301, 1.5707964
        %v1306 = vmul.f32 %v1302, 1.5707964
        %v1307 = vsub.f32 %v979, %v1303
        %v1308 = vsub.f32 %v980, %v1304
        %v1309 = vsub.f32 %v981, %v1305
        %v1310 = vsub.f32 %v982, %v1306
        %v1311 = vmul.f32 %v1299, 0.25
        %v1312 = vmul.f32 %v1300, 0.25
        %v1313 = vmul.f32 %v1301, 0.25
        %v1314 = vmul.f32 %v1302, 0.25
        %v1315 = vfloor.f32 %v1311
        %v1316 = vfloor.f32 %v1312
        %v1317 = vfloor.f32 %v1313
        %v1318 = vfloor.f32 %v1314
        %v1319 = vmul.f32 %v1315, 4.0
        %v1320 = vmul.f32 %v1316, 4.0
        %v1321 = vmul.f32 %v1317, 4.0
        %v1322 = vmul.f32 %v1318, 4.0
        %v1323 = vsub.f32 %v1299, %v1319
        %v1324 = vsub.f32 %v1300, %v1320
        %v1325 = vsub.f32 %v1301, %v1321
        %v1326 = vsub.f32 %v1302, %v1322
        %v1327 = vmul.f32 %v1307, %v1307
        %v1328 = vmul.f32 %v1308, %v1308
        %v1329 = vmul.f32 %v1309, %v1309
        %v1330 = vmul.f32 %v1310, %v1310
        %v1331 = vmul.f32 %v1327, -0.0001984127
        %v1332 = vmul.f32 %v1328, -0.0001984127
        %v1333 = vmul.f32 %v1329, -0.0001984127
        %v1334 = vmul.f32 %v1330, -0.0001984127
        %v1335 = vadd.f32 %v1331, 0.008333334
        %v1336 = vadd.f32 %v1332, 0.008333334
        %v1337 = vadd.f32 %v1333, 0.008333334
        %v1338 = vadd.f32 %v1334, 0.008333334
        %v1339 = vmul.f32 %v1327, %v1335
        %v1340 = vmul.f32 %v1328, %v1336
        %v1341 = vmul.f32 %v1329, %v1337
        %v1342 = vmul.f32 %v1330, %v1338
        %v1343 = vadd.f32 %v1339, -0.16666667
        %v1344 = vadd.f32 %v1340, -0.16666667
        %v1345 = vadd.f32 %v1341, -0.16666667
        %v1346 = vadd.f32 %v1342, -0.16666667
        %v1347 = vmul.f32 %v1327, %v1343
        %v1348 = vmul.f32 %v1328, %v1344
        %v1349 = vmul.f32 %v1329, %v1345
        %v1350 = vmul.f32 %v1330, %v1346
        %v1351 = vadd.f32 %v1347, 1.0
        %v1352 = vadd.f32 %v1348, 1.0
        %v1353 = vadd.f32 %v1349, 1.0
        %v1354 = vadd.f32 %v1350, 1.0
        %v1355 = vmul.f32 %v1307, %v1351
        %v1356 = vmul.f32 %v1308, %v1352
        %v1357 = vmul.f32 %v1309, %v1353
        %v1358 = vmul.f32 %v1310, %v1354
        %v1359 = vmul.f32 %v1327, 2.4801588e-05
        %v1360 = vmul.f32 %v1328, 2.4801588e-05
        %v1361 = vmul.f32 %v1329, 2.4801588e-05
        %v1362 = vmul.f32 %v1330, 2.4801588e-05
        %v1363 = vadd.f32 %v1359, -0.0013888889
        %v1364 = vadd.f32 %v1360, -0.0013888889
        %v1365 = vadd.f32 %v1361, -0.0013888889
        %v1366 = vadd.f32 %v1362, -0.0013888889
        %v1367 = vmul.f32 %v1327, %v1363
        %v1368 = vmul.f32 %v1328, %v1364
        %v1369 = vmul.f32 %v1329, %v1365
        %v1370 = vmul.f32 %v1330, %v1366
        %v1371 = vadd.f32 %v1367, 0.041666668
        %v1372 = vadd.f32 %v1368, 0.041666668
        %v1373 = vadd.f32 %v1369, 0.041666668
        %v1374 = vadd.f32 %v1370, 0.041666668
        %v1375 = vmul.f32 %v1327, %v1371
        %v1376 = vmul.f32 %v1328, %v1372
        %v1377 = vmul.f32 %v1329, %v1373
        %v1378 = vmul.f32 %v1330, %v1374
        %v1379 = vadd.f32 %v1375, -0.5
        %v1380 = vadd.f32 %v1376, -0.5
        %v1381 = vadd.f32 %v1377, -0.5
        %v1382 = vadd.f32 %v1378, -0.5
        %v1383 = vmul.f32 %v1327, %v1379
        %v1384 = vmul.f32 %v1328, %v1380
        %v1385 = vmul.f32 %v1329, %v1381
        %v1386 = vmul.f32 %v1330, %v1382
        %v1387 = vadd.f32 %v1383, 1.0
        %v1388 = vadd.f32 %v1384, 1.0
        %v1389 = vadd.f32 %v1385, 1.0
        %v1390 = vadd.f32 %v1386, 1.0
        %vm1391 = vcmp.eq.f32.partialorder %v1323, 0.0
        %vm1392 = vcmp.eq.f32.partialorder %v1324, 0.0
        %vm1393 = vcmp.eq.f32.partialorder %v1325, 0.0
        %vm1394 = vcmp.eq.f32.partialorder %v1326, 0.0
        %vm1395 = vcmp.eq.f32.partialorder %v1323, 1.0
        %vm1396 = vcmp.eq.f32.partialorder %v1324, 1.0
        %vm1397 = vcmp.eq.f32.partialorder %v1325, 1.0
        %vm1398 = vcmp.eq.f32.partialorder %v1326, 1.0
        %vm1399 = vcmp.eq.f32.partialorder %v1323, 2.0
        %vm1400 = vcmp.eq.f32.partialorder %v1324, 2.0
        %vm1401 = vcmp.eq.f32.partialorder %v1325, 2.0
        %vm1402 = vcmp.eq.f32.partialorder %v1326, 2.0
        %v1403 = vsub.f32 0.0, %v1355
        %v1404 = vsub.f32 0.0, %v1356
        %v1405 = vsub.f32 0.0, %v1357
        %v1406 = vsub.f32 0.0, %v1358
        %v1407 = vsub.f32 0.0, %v1387
        %v1408 = vsub.f32 0.0, %v1388
        %v1409 = vsub.f32 0.0, %v1389
        %v1410 = vsub.f32 0.0, %v1390
        %v1411 = vsel %vm1399, %v1403, %v1407
        %v1412 = vsel %vm1400, %v1404, %v1408
        %v1413 = vsel %vm1401, %v1405, %v1409
        %v1414 = vsel %vm1402, %v1406, %v1410
        %v1415 = vsel %vm1395, %v1387, %v1411
        %v1416 = vsel %vm1396, %v1388, %v1412
        %v1417 = vsel %vm1397, %v1389, %v1413
        %v1418 = vsel %vm1398, %v1390, %v1414
        %v1419 = vsel %vm1391, %v1355, %v1415
        %v1420 = vsel %vm1392, %v1356, %v1416
        %v1421 = vsel %vm1393, %v1357, %v1417
        %v1422 = vsel %vm1394, %v1358, %v1418
        %v1423 = vsel %vm1399, %v1407, %v1355
        %v1424 = vsel %vm1400, %v1408, %v1356
        %v1425 = vsel %vm1401, %v1409, %v1357
        %v1426 = vsel %vm1402, %v1410, %v1358
        %v1427 = vsel %vm1395, %v1403, %v1423
        %v1428 = vsel %vm1396, %v1404, %v1424
        %v1429 = vsel %vm1397, %v1405, %v1425
        %v1430 = vsel %vm1398, %v1406, %v1426
        %v1431 = vsel %vm1391, %v1387, %v1427
        %v1432 = vsel %vm1392, %v1388, %v1428
        %v1433 = vsel %vm1393, %v1389, %v1429
        %v1434 = vsel %vm1394, %v1390, %v1430
        %1439 = vrot.lane.b32.xlu0 %v1431, 32
        %v1440 = vpop.permute.xlu0 %1439
        %1441 = vrot.lane.b32.xlu0 %v1432, 32
        %v1442 = vpop.permute.xlu0 %1441
        %1443 = vrot.lane.b32.xlu0 %v1433, 32
        %v1444 = vpop.permute.xlu0 %1443
        %1445 = vrot.lane.b32.xlu0 %v1434, 32
        %v1446 = vpop.permute.xlu0 %1445
        %v1451 = vmul.f32 %v1133, %v1440
        %v1452 = vmul.f32 %v1134, %v1442
        %v1453 = vmul.f32 %v1135, %v1444
        %v1454 = vmul.f32 %v1136, %v1446
        %1459 = vrot.lane.b32.xlu0 %v1419, 64
        %v1460 = vpop.permute.xlu0 %1459
        %1461 = vrot.lane.b32.xlu0 %v1420, 64
        %v1462 = vpop.permute.xlu0 %1461
        %1463 = vrot.lane.b32.xlu0 %v1421, 64
        %v1464 = vpop.permute.xlu0 %1463
        %1465 = vrot.lane.b32.xlu0 %v1422, 64
        %v1466 = vpop.permute.xlu0 %1465
        %v1471 = vmul.f32 %v1287, %v1460
        %v1472 = vmul.f32 %v1288, %v1462
        %v1473 = vmul.f32 %v1289, %v1464
        %v1474 = vmul.f32 %v1290, %v1466
        %1479 = vrot.lane.b32.xlu0 %v1471, 96
        %v1480 = vpop.permute.xlu0 %1479
        %1481 = vrot.lane.b32.xlu0 %v1472, 96
        %v1482 = vpop.permute.xlu0 %1481
        %1483 = vrot.lane.b32.xlu0 %v1473, 96
        %v1484 = vpop.permute.xlu0 %1483
        %1485 = vrot.lane.b32.xlu0 %v1474, 96
        %v1486 = vpop.permute.xlu0 %1485
        %v1491 = vadd.f32 %v1451, %v1480
        %v1492 = vadd.f32 %v1452, %v1482
        %v1493 = vadd.f32 %v1453, %v1484
        %v1494 = vadd.f32 %v1454, %v1486
        %v1495 = vld [vmem:[%s743] sm:$0xf]
        %v1496 = vld [vmem:[%s743 + $0x4] sm:$0xf]
        %v1497 = vld [vmem:[%s743 + $0x8] sm:$0xf]
        %v1498 = vld [vmem:[%s743 + $0xc] sm:$0xf]
        %v1499 = vpack.c.bf16 %v1492, %v1491
        %v1500 = vpack.c.bf16 %v1494, %v1493
        %v1501 = vld [vmem:[%s799 + $0x3] sm:$0x1]
        %v1502 = vperm.slane %v1501, 0
        %1505 = vrot.lane.b32.xlu0 %v1499, 96
        %v1506 = vpop.permute.xlu0 %1505
        %1507 = vrot.lane.b32.xlu0 %v1500, 96
        %v1508 = vpop.permute.xlu0 %1507
        %v1513 = vunpack.c.l.b16 %v1495
        %v1514 = vunpack.c.l.b16 %v1496
        %v1515 = vunpack.c.l.b16 %v1497
        %v1516 = vunpack.c.l.b16 %v1498
        %v1517 = vpack.c.b16 %v1514, %v1513
        %v1518 = vpack.c.b16 %v1516, %v1515
        %v1522 = vsel %vm840, %v1506, 0
        %v1525 = vsel %vm840, %v1508, 0
        %1527 = vmatpush.bf16.msra.mxu0 0
        %1528 = vmatpush.bf16.msra.mxu0 0
        %1529 = vmatpush.bf16.msra.mxu0 0
        %1530 = vmatpush.bf16.msra.mxu0 0
        %1531 = vmatpush.bf16.msra.mxu0 0
        %1532 = vmatpush.bf16.msra.mxu0 0
        %1533 = vmatpush.bf16.msra.mxu0 %v1518
        %1534 = vmatpush.bf16.msra.mxu0 %v1517
        %1535 = vmatmul.bf16.gmra.mxu0 %v1522
        %v1536 = vpop.f32.mrf.mxu0
        %v1537 = vadd.f32 %v1502, %v1536
        %v1538 = vpop.f32.mrf.mxu0
        %v1539 = vadd.f32 %v1502, %v1538
        %1540 = vmatmul.bf16.gmra.mxu0 %v1525
        %v1541 = vpop.f32.mrf.mxu0
        %v1542 = vadd.f32 %v1502, %v1541
        %v1543 = vpop.f32.mrf.mxu0
        %v1544 = vadd.f32 %v1502, %v1543
        %1545 = vdwg.mxu0
        %v1546 = vld [vmem:[%s799 + $0x7] sm:$0x1]
        %v1547 = vld [vmem:[%s799 + $0xb] sm:$0x1]
        %v1548 = vsel %vm840, %v1537, 0.0
        %1549 = vadd.xlane.f32.xlu0 %v1548
        %v1550 = vpop.xlane.xlu0 %1549
        %v1551 = vsel %vm840, %v1539, 0.0
        %1552 = vadd.xlane.f32.xlu0 %v1551
        %v1553 = vpop.xlane.xlu0 %1552
        %v1554 = vsel %vm840, %v1542, 0.0
        %1555 = vadd.xlane.f32.xlu0 %v1554
        %v1556 = vpop.xlane.xlu0 %1555
        %v1557 = vsel %vm840, %v1544, 0.0
        %1558 = vadd.xlane.f32.xlu0 %v1557
        %v1559 = vpop.xlane.xlu0 %1558
        %v1560 = vmul.f32 %v1550, %v892
        %v1561 = vmul.f32 %v1553, %v892
        %v1562 = vmul.f32 %v1556, %v892
        %v1563 = vmul.f32 %v1559, %v892
        %v1564 = vsub.f32 %v1537, %v1560
        %v1565 = vsub.f32 %v1539, %v1561
        %v1566 = vsub.f32 %v1542, %v1562
        %v1567 = vsub.f32 %v1544, %v1563
        %v1568 = vmul.f32 %v1564, %v1564
        %v1569 = vmul.f32 %v1565, %v1565
        %v1570 = vmul.f32 %v1566, %v1566
        %v1571 = vmul.f32 %v1567, %v1567
        %v1572 = vsel %vm840, %v1568, 0.0
        %1573 = vadd.xlane.f32.xlu0 %v1572
        %v1574 = vpop.xlane.xlu0 %1573
        %v1575 = vsel %vm840, %v1569, 0.0
        %1576 = vadd.xlane.f32.xlu0 %v1575
        %v1577 = vpop.xlane.xlu0 %1576
        %v1578 = vsel %vm840, %v1570, 0.0
        %1579 = vadd.xlane.f32.xlu0 %v1578
        %v1580 = vpop.xlane.xlu0 %1579
        %v1581 = vsel %vm840, %v1571, 0.0
        %1582 = vadd.xlane.f32.xlu0 %v1581
        %v1583 = vpop.xlane.xlu0 %1582
        %v1584 = vmul.f32 %v1574, %v892
        %v1585 = vmul.f32 %v1577, %v892
        %v1586 = vmul.f32 %v1580, %v892
        %v1587 = vmul.f32 %v1583, %v892
        %v1588 = vadd.f32 %v1584, 1e-05
        %v1589 = vadd.f32 %v1585, 1e-05
        %v1590 = vadd.f32 %v1586, 1e-05
        %v1591 = vadd.f32 %v1587, 1e-05
        %v1592 = vrsqrt.pop %v1588
        %v1593 = vmul.f32 %v1592, %v1588
        %v1594 = vmul.f32 %v1593, %v1592
        %v1595 = vmul.f32 0.5, %v1594
        %v1596 = vsub.f32 1.5, %v1595
        %v1597 = vmul.f32 %v1592, %v1596
        %vm1598 = vweird.f32 %v1588
        %vm1599 = vweird.f32 %v1592
        %vm1600 = vmor %vm1598, %vm1599
        %v1601 = vsel %vm1600, %v1592, %v1597
        %v1602 = vrsqrt.pop %v1589
        %v1603 = vmul.f32 %v1602, %v1589
        %v1604 = vmul.f32 %v1603, %v1602
        %v1605 = vmul.f32 0.5, %v1604
        %v1606 = vsub.f32 1.5, %v1605
        %v1607 = vmul.f32 %v1602, %v1606
        %vm1608 = vweird.f32 %v1589
        %vm1609 = vweird.f32 %v1602
        %vm1610 = vmor %vm1608, %vm1609
        %v1611 = vsel %vm1610, %v1602, %v1607
        %v1612 = vrsqrt.pop %v1590
        %v1613 = vmul.f32 %v1612, %v1590
        %v1614 = vmul.f32 %v1613, %v1612
        %v1615 = vmul.f32 0.5, %v1614
        %v1616 = vsub.f32 1.5, %v1615
        %v1617 = vmul.f32 %v1612, %v1616
        %vm1618 = vweird.f32 %v1590
        %vm1619 = vweird.f32 %v1612
        %vm1620 = vmor %vm1618, %vm1619
        %v1621 = vsel %vm1620, %v1612, %v1617
        %v1622 = vrsqrt.pop %v1591
        %v1623 = vmul.f32 %v1622, %v1591
        %v1624 = vmul.f32 %v1623, %v1622
        %v1625 = vmul.f32 0.5, %v1624
        %v1626 = vsub.f32 1.5, %v1625
        %v1627 = vmul.f32 %v1622, %v1626
        %vm1628 = vweird.f32 %v1591
        %vm1629 = vweird.f32 %v1622
        %vm1630 = vmor %vm1628, %vm1629
        %v1631 = vsel %vm1630, %v1622, %v1627
        %v1632 = vmul.f32 %v1564, %v1601
        %v1633 = vmul.f32 %v1565, %v1611
        %v1634 = vmul.f32 %v1566, %v1621
        %v1635 = vmul.f32 %v1567, %v1631
        %v1636 = vperm.slane %v1546, 0
        %v1637 = vmul.f32 %v1632, %v1636
        %v1638 = vmul.f32 %v1633, %v1636
        %v1639 = vmul.f32 %v1634, %v1636
        %v1640 = vmul.f32 %v1635, %v1636
        %v1641 = vperm.slane %v1547, 0
        %v1642 = vadd.f32 %v1637, %v1641
        %v1643 = vadd.f32 %v1638, %v1641
        %v1644 = vadd.f32 %v1639, %v1641
        %v1645 = vadd.f32 %v1640, %v1641
        %v1646 = vmax.f32 %v1642, 0.0
        %v1647 = vmax.f32 %v1643, 0.0
        %v1648 = vmax.f32 %v1644, 0.0
        %v1649 = vmax.f32 %v1645, 0.0
        %v1650 = vsel %vm840, %v1646, 0.0
        %1651 = vadd.xlane.f32.xlu0 %v1650
        %v1652 = vpop.xlane.xlu0 %1651
        %v1653 = vsel %vm840, %v1647, 0.0
        %1654 = vadd.xlane.f32.xlu0 %v1653
        %v1655 = vpop.xlane.xlu0 %1654
        %v1656 = vsel %vm840, %v1648, 0.0
        %1657 = vadd.xlane.f32.xlu0 %v1656
        %v1658 = vpop.xlane.xlu0 %1657
        %v1659 = vsel %vm840, %v1649, 0.0
        %1660 = vadd.xlane.f32.xlu0 %v1659
        %v1661 = vpop.xlane.xlu0 %1660
        %v1662 = vmul.f32 %v1652, %v892
        %v1663 = vmul.f32 %v1655, %v892
        %v1664 = vmul.f32 %v1658, %v892
        %v1665 = vmul.f32 %v1661, %v892
        %v1666 = vld [vmem:[%s748] sm:$0xf]
        %v1667 = vld [vmem:[%s748 + $0x4] sm:$0xf]
        %v1668 = vpack.c.bf16 %v1662, %v1662
        %v1669 = vpack.c.bf16 %v1663, %v1663
        %v1670 = vpack.c.bf16 %v1664, %v1664
        %v1671 = vpack.c.bf16 %v1665, %v1665
        %v1672 = vld [vmem:[%s753] sm:$0xff]
        %v1673 = vld [vmem:[%s753 + $0x8] sm:$0xff]
        %v1676 = vunpack.c.l.b16 %v1666
        %v1677 = vunpack.c.l.b16 %v1667
        %v1678 = vpack.c.b16 %v1677, %v1676
        %vm1679 = vcmask 64512
        %v1681 = vsel %vm1679, %v1678, 0
        %vm1683 = vcmask 1043456
        %v1685 = vsel %vm1683, %v1668, 0
        %1687 = vmatpush.bf16.msra.mxu0 0
        %1688 = vmatpush.bf16.msra.mxu0 0
        %1689 = vmatpush.bf16.msra.mxu0 0
        %1690 = vmatpush.bf16.msra.mxu0 0
        %1691 = vmatpush.bf16.msra.mxu0 0
        %1692 = vmatpush.bf16.msra.mxu0 0
        %1693 = vmatpush.bf16.msra.mxu0 0
        %1694 = vmatpush.bf16.msra.mxu0 %v1685
        %1695 = vmatmul.bf16.gmra.mxu0 %v1681
        %v1696 = vpop.f32.mrf.mxu0
        %v1697 = vadd.f32 %v1672, %v1696
        %v1698 = vpop.f32.mrf.mxu0
        %v1699 = vadd.f32 %v1673, %v1698
        %1700 = vdwg.mxu0
        %v1702 = vsel %vm1683, %v1669, 0
        %1704 = vmatpush.bf16.msra.mxu0 0
        %1705 = vmatpush.bf16.msra.mxu0 0
        %1706 = vmatpush.bf16.msra.mxu0 0
        %1707 = vmatpush.bf16.msra.mxu0 0
        %1708 = vmatpush.bf16.msra.mxu0 0
        %1709 = vmatpush.bf16.msra.mxu0 0
        %1710 = vmatpush.bf16.msra.mxu0 0
        %1711 = vmatpush.bf16.msra.mxu0 %v1702
        %1712 = vmatmul.bf16.gmra.mxu0 %v1681
        %v1713 = vpop.f32.mrf.mxu0
        %v1714 = vadd.f32 %v1672, %v1713
        %v1715 = vpop.f32.mrf.mxu0
        %v1716 = vadd.f32 %v1673, %v1715
        %1717 = vdwg.mxu0
        %v1719 = vsel %vm1683, %v1670, 0
        %1721 = vmatpush.bf16.msra.mxu0 0
        %1722 = vmatpush.bf16.msra.mxu0 0
        %1723 = vmatpush.bf16.msra.mxu0 0
        %1724 = vmatpush.bf16.msra.mxu0 0
        %1725 = vmatpush.bf16.msra.mxu0 0
        %1726 = vmatpush.bf16.msra.mxu0 0
        %1727 = vmatpush.bf16.msra.mxu0 0
        %1728 = vmatpush.bf16.msra.mxu0 %v1719
        %1729 = vmatmul.bf16.gmra.mxu0 %v1681
        %v1730 = vpop.f32.mrf.mxu0
        %v1731 = vadd.f32 %v1672, %v1730
        %v1732 = vpop.f32.mrf.mxu0
        %v1733 = vadd.f32 %v1673, %v1732
        %1734 = vdwg.mxu0
        %v1736 = vsel %vm1683, %v1671, 0
        %1738 = vmatpush.bf16.msra.mxu0 0
        %1739 = vmatpush.bf16.msra.mxu0 0
        %1740 = vmatpush.bf16.msra.mxu0 0
        %1741 = vmatpush.bf16.msra.mxu0 0
        %1742 = vmatpush.bf16.msra.mxu0 0
        %1743 = vmatpush.bf16.msra.mxu0 0
        %1744 = vmatpush.bf16.msra.mxu0 0
        %1745 = vmatpush.bf16.msra.mxu0 %v1736
        %1746 = vmatmul.bf16.gmra.mxu0 %v1681
        %v1747 = vpop.f32.mrf.mxu0
        %v1748 = vadd.f32 %v1672, %v1747
        %v1749 = vpop.f32.mrf.mxu0
        %v1750 = vadd.f32 %v1673, %v1749
        %1751 = vdwg.mxu0
        %v1752 = vmax.f32 %v1697, 0.0
        %v1753 = vmax.f32 %v1699, 0.0
        %v1754 = vmax.f32 %v1714, 0.0
        %v1755 = vmax.f32 %v1716, 0.0
        %v1756 = vmax.f32 %v1731, 0.0
        %v1757 = vmax.f32 %v1733, 0.0
        %v1758 = vmax.f32 %v1748, 0.0
        %v1759 = vmax.f32 %v1750, 0.0
        %v1760 = vld [vmem:[%s757] sm:$0xf]
        %v1761 = vpack.c.bf16 %v1752, %v1752
        %v1762 = vpack.c.bf16 %v1753, %v1753
        %v1763 = vpack.c.bf16 %v1754, %v1754
        %v1764 = vpack.c.bf16 %v1755, %v1755
        %v1765 = vpack.c.bf16 %v1756, %v1756
        %v1766 = vpack.c.bf16 %v1757, %v1757
        %v1767 = vpack.c.bf16 %v1758, %v1758
        %v1768 = vpack.c.bf16 %v1759, %v1759
        %v1769 = vld [vmem:[%s761] sm:$0xff]
        %v1772 = vunpack.c.l.b16 %v1761
        %v1773 = vunpack.c.l.b16 %v1762
        %v1774 = vpack.c.b16 %v1773, %v1772
        %vm1776 = vcmask 130048
        %v1778 = vsel %vm1776, %v1760, 0
        %1780 = vmatpush.bf16.msra.mxu0 0
        %1781 = vmatpush.bf16.msra.mxu0 0
        %1782 = vmatpush.bf16.msra.mxu0 0
        %1783 = vmatpush.bf16.msra.mxu0 0
        %1784 = vmatpush.bf16.msra.mxu0 0
        %1785 = vmatpush.bf16.msra.mxu0 0
        %1786 = vmatpush.bf16.msra.mxu0 0
        %1787 = vmatpush.bf16.msra.mxu0 %v1774
        %1788 = vmatmul.bf16.gmra.mxu0 %v1778
        %v1789 = vpop.f32.mrf.mxu0
        %v1790 = vadd.f32 %v1769, %v1789
        %v1791 = vpop.f32.mrf.mxu0
        %1792 = vdwg.mxu0
        %v1795 = vunpack.c.l.b16 %v1763
        %v1796 = vunpack.c.l.b16 %v1764
        %v1797 = vpack.c.b16 %v1796, %v1795
        %1799 = vmatpush.bf16.msra.mxu0 0
        %1800 = vmatpush.bf16.msra.mxu0 0
        %1801 = vmatpush.bf16.msra.mxu0 0
        %1802 = vmatpush.bf16.msra.mxu0 0
        %1803 = vmatpush.bf16.msra.mxu0 0
        %1804 = vmatpush.bf16.msra.mxu0 0
        %1805 = vmatpush.bf16.msra.mxu0 0
        %1806 = vmatpush.bf16.msra.mxu0 %v1797
        %1807 = vmatmul.bf16.gmra.mxu0 %v1778
        %v1808 = vpop.f32.mrf.mxu0
        %v1809 = vadd.f32 %v1769, %v1808
        %v1810 = vpop.f32.mrf.mxu0
        %1811 = vdwg.mxu0
        %v1814 = vunpack.c.l.b16 %v1765
        %v1815 = vunpack.c.l.b16 %v1766
        %v1816 = vpack.c.b16 %v1815, %v1814
        %1818 = vmatpush.bf16.msra.mxu0 0
        %1819 = vmatpush.bf16.msra.mxu0 0
        %1820 = vmatpush.bf16.msra.mxu0 0
        %1821 = vmatpush.bf16.msra.mxu0 0
        %1822 = vmatpush.bf16.msra.mxu0 0
        %1823 = vmatpush.bf16.msra.mxu0 0
        %1824 = vmatpush.bf16.msra.mxu0 0
        %1825 = vmatpush.bf16.msra.mxu0 %v1816
        %1826 = vmatmul.bf16.gmra.mxu0 %v1778
        %v1827 = vpop.f32.mrf.mxu0
        %v1828 = vadd.f32 %v1769, %v1827
        %v1829 = vpop.f32.mrf.mxu0
        %1830 = vdwg.mxu0
        %v1833 = vunpack.c.l.b16 %v1767
        %v1834 = vunpack.c.l.b16 %v1768
        %v1835 = vpack.c.b16 %v1834, %v1833
        %1837 = vmatpush.bf16.msra.mxu0 0
        %1838 = vmatpush.bf16.msra.mxu0 0
        %1839 = vmatpush.bf16.msra.mxu0 0
        %1840 = vmatpush.bf16.msra.mxu0 0
        %1841 = vmatpush.bf16.msra.mxu0 0
        %1842 = vmatpush.bf16.msra.mxu0 0
        %1843 = vmatpush.bf16.msra.mxu0 0
        %1844 = vmatpush.bf16.msra.mxu0 %v1835
        %1845 = vmatmul.bf16.gmra.mxu0 %v1778
        %v1846 = vpop.f32.mrf.mxu0
        %v1847 = vadd.f32 %v1769, %v1846
        %v1848 = vpop.f32.mrf.mxu0
        %1849 = vdwg.mxu0
        %vm1850 = vcmask 7168
        %v1851 = vsel %vm1850, %v1790, -inf
        %v1852 = vrot.slane %v1851, 4
        %v1853 = vmax.f32 %v1851, %v1852
        %v1854 = vrot.slane %v1853, 2
        %v1855 = vmax.f32 %v1853, %v1854
        %v1856 = vrot.slane %v1855, 1
        %v1857 = vmax.f32 %v1855, %v1856
        %v1858 = vsel %vm1850, %v1809, -inf
        %v1859 = vrot.slane %v1858, 4
        %v1860 = vmax.f32 %v1858, %v1859
        %v1861 = vrot.slane %v1860, 2
        %v1862 = vmax.f32 %v1860, %v1861
        %v1863 = vrot.slane %v1862, 1
        %v1864 = vmax.f32 %v1862, %v1863
        %v1865 = vsel %vm1850, %v1828, -inf
        %v1866 = vrot.slane %v1865, 4
        %v1867 = vmax.f32 %v1865, %v1866
        %v1868 = vrot.slane %v1867, 2
        %v1869 = vmax.f32 %v1867, %v1868
        %v1870 = vrot.slane %v1869, 1
        %v1871 = vmax.f32 %v1869, %v1870
        %v1872 = vsel %vm1850, %v1847, -inf
        %v1873 = vrot.slane %v1872, 4
        %v1874 = vmax.f32 %v1872, %v1873
        %v1875 = vrot.slane %v1874, 2
        %v1876 = vmax.f32 %v1874, %v1875
        %v1877 = vrot.slane %v1876, 1
        %v1878 = vmax.f32 %v1876, %v1877
        %v1879 = vsub.f32 %v1790, %v1857
        %v1880 = vsub.f32 %v1809, %v1864
        %v1881 = vsub.f32 %v1828, %v1871
        %v1882 = vsub.f32 %v1847, %v1878
        %v1883 = vmul.f32 %v1879, 1.442695
        %v1884 = vpow.pop %v1883
        %v1885 = vmul.f32 %v1880, 1.442695
        %v1886 = vpow.pop %v1885
        %v1887 = vmul.f32 %v1881, 1.442695
        %v1888 = vpow.pop %v1887
        %v1889 = vmul.f32 %v1882, 1.442695
        %v1890 = vpow.pop %v1889
        %v1891 = vsel %vm1850, %v1884, 0.0
        %v1892 = vrot.slane %v1891, 4
        %v1893 = vadd.f32 %v1891, %v1892
        %v1894 = vrot.slane %v1893, 2
        %v1895 = vadd.f32 %v1893, %v1894
        %v1896 = vrot.slane %v1895, 1
        %v1897 = vadd.f32 %v1895, %v1896
        %v1898 = vsel %vm1850, %v1886, 0.0
        %v1899 = vrot.slane %v1898, 4
        %v1900 = vadd.f32 %v1898, %v1899
        %v1901 = vrot.slane %v1900, 2
        %v1902 = vadd.f32 %v1900, %v1901
        %v1903 = vrot.slane %v1902, 1
        %v1904 = vadd.f32 %v1902, %v1903
        %v1905 = vsel %vm1850, %v1888, 0.0
        %v1906 = vrot.slane %v1905, 4
        %v1907 = vadd.f32 %v1905, %v1906
        %v1908 = vrot.slane %v1907, 2
        %v1909 = vadd.f32 %v1907, %v1908
        %v1910 = vrot.slane %v1909, 1
        %v1911 = vadd.f32 %v1909, %v1910
        %v1912 = vsel %vm1850, %v1890, 0.0
        %v1913 = vrot.slane %v1912, 4
        %v1914 = vadd.f32 %v1912, %v1913
        %v1915 = vrot.slane %v1914, 2
        %v1916 = vadd.f32 %v1914, %v1915
        %v1917 = vrot.slane %v1916, 1
        %v1918 = vadd.f32 %v1916, %v1917
        %v1919 = vrcp.pop %v1897
        %v1920 = vrcp.pop %v1904
        %v1921 = vrcp.pop %v1911
        %v1922 = vrcp.pop %v1918
        %v1923 = vmul.f32 %v1884, %v1919
        %v1924 = vmul.f32 %v1886, %v1920
        %v1925 = vmul.f32 %v1888, %v1921
        %v1926 = vmul.f32 %v1890, %v1922
        %1928 = vset.pattern.permute.xlu0 0
        %1929 = vperm.xlu0 %1928, %v1923
        %v1930 = vpop.permute.xlu0 %1929
        %1933 = vset.pattern.permute.xlu0 0
        %1934 = vperm.xlu0 %1933, %v1924
        %v1935 = vpop.permute.xlu0 %1934
        %1938 = vset.pattern.permute.xlu0 0
        %1939 = vperm.xlu0 %1938, %v1925
        %v1940 = vpop.permute.xlu0 %1939
        %1943 = vset.pattern.permute.xlu0 0
        %1944 = vperm.xlu0 %1943, %v1926
        %v1945 = vpop.permute.xlu0 %1944
        %v1947 = vmul.f32 %v1646, %v1930
        %v1948 = vmul.f32 %v1647, %v1935
        %v1949 = vmul.f32 %v1648, %v1940
        %v1950 = vmul.f32 %v1649, %v1945
        %v1951 = vpack.c.bf16 %v1948, %v1947
        %v1952 = vpack.c.bf16 %v1950, %v1949
        %v1953 = vld [vmem:[%s799 + $0xc] sm:$0x1]
        %v1954 = vperm.slane %v1953, 0
        %1955 = vrot.lane.b32.xlu0 %v1517, 96
        %v1956 = vpop.permute.xlu0 %1955
        %1957 = vrot.lane.b32.xlu0 %v1518, 96
        %v1958 = vpop.permute.xlu0 %1957
        %v1962 = vsel %vm840, %v1951, 0
        %v1965 = vsel %vm840, %v1952, 0
        %1967 = vmatpush.bf16.msra.mxu0 0
        %1968 = vmatpush.bf16.msra.mxu0 0
        %1969 = vmatpush.bf16.msra.mxu0 0
        %1970 = vmatpush.bf16.msra.mxu0 0
        %1971 = vmatpush.bf16.msra.mxu0 0
        %1972 = vmatpush.bf16.msra.mxu0 0
        %1973 = vmatpush.bf16.msra.mxu0 %v1958
        %1974 = vmatpush.bf16.msra.mxu0 %v1956
        %1975 = vmatmul.bf16.gmra.mxu0 %v1962
        %v1976 = vpop.f32.mrf.mxu0
        %v1977 = vadd.f32 %v1954, %v1976
        %v1978 = vpop.f32.mrf.mxu0
        %v1979 = vadd.f32 %v1954, %v1978
        %1980 = vmatmul.bf16.gmra.mxu0 %v1965
        %v1981 = vpop.f32.mrf.mxu0
        %v1982 = vadd.f32 %v1954, %v1981
        %v1983 = vpop.f32.mrf.mxu0
        %v1984 = vadd.f32 %v1954, %v1983
        %1985 = vdwg.mxu0
        %v1986 = vadd.f32 %v814, %v1977
        %v1987 = vadd.f32 %v815, %v1979
        %v1988 = vadd.f32 %v816, %v1982
        %v1989 = vadd.f32 %v817, %v1984
        %v1990 = vld [vmem:[%s799 + $0xd] sm:$0x1]
        %v1991 = vld [vmem:[%s799 + $0xe] sm:$0x1]
        %v1992 = vsel %vm840, %v1986, 0.0
        %1993 = vadd.xlane.f32.xlu0 %v1992
        %v1994 = vpop.xlane.xlu0 %1993
        %v1995 = vsel %vm840, %v1987, 0.0
        %1996 = vadd.xlane.f32.xlu0 %v1995
        %v1997 = vpop.xlane.xlu0 %1996
        %v1998 = vsel %vm840, %v1988, 0.0
        %1999 = vadd.xlane.f32.xlu0 %v1998
        %v2000 = vpop.xlane.xlu0 %1999
        %v2001 = vsel %vm840, %v1989, 0.0
        %2002 = vadd.xlane.f32.xlu0 %v2001
        %v2003 = vpop.xlane.xlu0 %2002
        %v2004 = vmul.f32 %v1994, %v892
        %v2005 = vmul.f32 %v1997, %v892
        %v2006 = vmul.f32 %v2000, %v892
        %v2007 = vmul.f32 %v2003, %v892
        %v2008 = vsub.f32 %v1986, %v2004
        %v2009 = vsub.f32 %v1987, %v2005
        %v2010 = vsub.f32 %v1988, %v2006
        %v2011 = vsub.f32 %v1989, %v2007
        %v2012 = vmul.f32 %v2008, %v2008
        %v2013 = vmul.f32 %v2009, %v2009
        %v2014 = vmul.f32 %v2010, %v2010
        %v2015 = vmul.f32 %v2011, %v2011
        %v2016 = vsel %vm840, %v2012, 0.0
        %2017 = vadd.xlane.f32.xlu0 %v2016
        %v2018 = vpop.xlane.xlu0 %2017
        %v2019 = vsel %vm840, %v2013, 0.0
        %2020 = vadd.xlane.f32.xlu0 %v2019
        %v2021 = vpop.xlane.xlu0 %2020
        %v2022 = vsel %vm840, %v2014, 0.0
        %2023 = vadd.xlane.f32.xlu0 %v2022
        %v2024 = vpop.xlane.xlu0 %2023
        %v2025 = vsel %vm840, %v2015, 0.0
        %2026 = vadd.xlane.f32.xlu0 %v2025
        %v2027 = vpop.xlane.xlu0 %2026
        %v2028 = vmul.f32 %v2018, %v892
        %v2029 = vmul.f32 %v2021, %v892
        %v2030 = vmul.f32 %v2024, %v892
        %v2031 = vmul.f32 %v2027, %v892
        %v2032 = vadd.f32 %v2028, 1e-05
        %v2033 = vadd.f32 %v2029, 1e-05
        %v2034 = vadd.f32 %v2030, 1e-05
        %v2035 = vadd.f32 %v2031, 1e-05
        %v2036 = vrsqrt.pop %v2032
        %v2037 = vmul.f32 %v2036, %v2032
        %v2038 = vmul.f32 %v2037, %v2036
        %v2039 = vmul.f32 0.5, %v2038
        %v2040 = vsub.f32 1.5, %v2039
        %v2041 = vmul.f32 %v2036, %v2040
        %vm2042 = vweird.f32 %v2032
        %vm2043 = vweird.f32 %v2036
        %vm2044 = vmor %vm2042, %vm2043
        %v2045 = vsel %vm2044, %v2036, %v2041
        %v2046 = vrsqrt.pop %v2033
        %v2047 = vmul.f32 %v2046, %v2033
        %v2048 = vmul.f32 %v2047, %v2046
        %v2049 = vmul.f32 0.5, %v2048
        %v2050 = vsub.f32 1.5, %v2049
        %v2051 = vmul.f32 %v2046, %v2050
        %vm2052 = vweird.f32 %v2033
        %vm2053 = vweird.f32 %v2046
        %vm2054 = vmor %vm2052, %vm2053
        %v2055 = vsel %vm2054, %v2046, %v2051
        %v2056 = vrsqrt.pop %v2034
        %v2057 = vmul.f32 %v2056, %v2034
        %v2058 = vmul.f32 %v2057, %v2056
        %v2059 = vmul.f32 0.5, %v2058
        %v2060 = vsub.f32 1.5, %v2059
        %v2061 = vmul.f32 %v2056, %v2060
        %vm2062 = vweird.f32 %v2034
        %vm2063 = vweird.f32 %v2056
        %vm2064 = vmor %vm2062, %vm2063
        %v2065 = vsel %vm2064, %v2056, %v2061
        %v2066 = vrsqrt.pop %v2035
        %v2067 = vmul.f32 %v2066, %v2035
        %v2068 = vmul.f32 %v2067, %v2066
        %v2069 = vmul.f32 0.5, %v2068
        %v2070 = vsub.f32 1.5, %v2069
        %v2071 = vmul.f32 %v2066, %v2070
        %vm2072 = vweird.f32 %v2035
        %vm2073 = vweird.f32 %v2066
        %vm2074 = vmor %vm2072, %vm2073
        %v2075 = vsel %vm2074, %v2066, %v2071
        %v2076 = vmul.f32 %v2008, %v2045
        %v2077 = vmul.f32 %v2009, %v2055
        %v2078 = vmul.f32 %v2010, %v2065
        %v2079 = vmul.f32 %v2011, %v2075
        %v2080 = vperm.slane %v1990, 0
        %v2081 = vmul.f32 %v2076, %v2080
        %v2082 = vmul.f32 %v2077, %v2080
        %v2083 = vmul.f32 %v2078, %v2080
        %v2084 = vmul.f32 %v2079, %v2080
        %v2085 = vperm.slane %v1991, 0
        %v2086 = vadd.f32 %v2081, %v2085
        %v2087 = vadd.f32 %v2082, %v2085
        %v2088 = vadd.f32 %v2083, %v2085
        %v2089 = vadd.f32 %v2084, %v2085
        %v2090 = vld [vmem:[%s799 + $0xf] sm:$0x1]
        %v2091 = vld [vmem:[%s799 + $0x10] sm:$0x1]
        %v2092 = vld [vmem:[%s766] sm:$0xf]
        %v2093 = vld [vmem:[%s766 + $0x4] sm:$0xf]
        %v2094 = vld [vmem:[%s766 + $0x8] sm:$0xf]
        %v2095 = vld [vmem:[%s766 + $0xc] sm:$0xf]
        %v2096 = vld [vmem:[%s776] sm:$0xf]
        %v2097 = vld [vmem:[%s771] sm:$0xff]
        %v2098 = vld [vmem:[%s771 + $0x8] sm:$0xff]
        %v2099 = vld [vmem:[%s771 + $0x10] sm:$0xff]
        %v2100 = vld [vmem:[%s771 + $0x18] sm:$0xff]
        %v2101 = vld [vmem:[%s781] sm:$0xff]
        %v2102 = vpack.c.bf16 %v2086, %v2086
        %v2103 = vpack.c.bf16 %v2087, %v2087
        %v2104 = vpack.c.bf16 %v2088, %v2088
        %v2105 = vpack.c.bf16 %v2089, %v2089
        %2107 = vset.pattern.permute.xlu0 0
        %2108 = vperm.xlu0 %2107, %v2097
        %v2109 = vpop.permute.xlu0 %2108
        %2112 = vset.pattern.permute.xlu0 0
        %2113 = vperm.xlu0 %2112, %v2098
        %v2114 = vpop.permute.xlu0 %2113
        %2117 = vset.pattern.permute.xlu0 0
        %2118 = vperm.xlu0 %2117, %v2099
        %v2119 = vpop.permute.xlu0 %2118
        %2122 = vset.pattern.permute.xlu0 0
        %2123 = vperm.xlu0 %2122, %v2100
        %v2124 = vpop.permute.xlu0 %2123
        %v2130 = vunpack.c.l.b16 %v2092
        %v2131 = vunpack.c.l.b16 %v2093
        %v2132 = vunpack.c.l.b16 %v2094
        %v2133 = vunpack.c.l.b16 %v2095
        %v2134 = vpack.c.b16 %v2131, %v2130
        %v2135 = vpack.c.b16 %v2133, %v2132
        %v2137 = vsel %vm1679, %v2134, 0
        %v2140 = vsel %vm1679, %v2135, 0
        %v2143 = vsel %vm1683, %v2102, 0
        %2145 = vmatpush.bf16.msra.mxu0 0
        %2146 = vmatpush.bf16.msra.mxu0 0
        %2147 = vmatpush.bf16.msra.mxu0 0
        %2148 = vmatpush.bf16.msra.mxu0 0
        %2149 = vmatpush.bf16.msra.mxu0 0
        %2150 = vmatpush.bf16.msra.mxu0 0
        %2151 = vmatpush.bf16.msra.mxu0 0
        %2152 = vmatpush.bf16.msra.mxu0 %v2143
        %2153 = vmatmul.bf16.gmra.mxu0 %v2137
        %v2154 = vpop.f32.mrf.mxu0
        %v2155 = vadd.f32 %v2109, %v2154
        %v2156 = vpop.f32.mrf.mxu0
        %v2157 = vadd.f32 %v2114, %v2156
        %2158 = vmatmul.bf16.gmra.mxu0 %v2140
        %v2159 = vpop.f32.mrf.mxu0
        %v2160 = vadd.f32 %v2119, %v2159
        %v2161 = vpop.f32.mrf.mxu0
        %v2162 = vadd.f32 %v2124, %v2161
        %2163 = vdwg.mxu0
        %v2165 = vsel %vm1683, %v2103, 0
        %2167 = vmatpush.bf16.msra.mxu0 0
        %2168 = vmatpush.bf16.msra.mxu0 0
        %2169 = vmatpush.bf16.msra.mxu0 0
        %2170 = vmatpush.bf16.msra.mxu0 0
        %2171 = vmatpush.bf16.msra.mxu0 0
        %2172 = vmatpush.bf16.msra.mxu0 0
        %2173 = vmatpush.bf16.msra.mxu0 0
        %2174 = vmatpush.bf16.msra.mxu0 %v2165
        %2175 = vmatmul.bf16.gmra.mxu0 %v2137
        %v2176 = vpop.f32.mrf.mxu0
        %v2177 = vadd.f32 %v2109, %v2176
        %v2178 = vpop.f32.mrf.mxu0
        %v2179 = vadd.f32 %v2114, %v2178
        %2180 = vmatmul.bf16.gmra.mxu0 %v2140
        %v2181 = vpop.f32.mrf.mxu0
        %v2182 = vadd.f32 %v2119, %v2181
        %v2183 = vpop.f32.mrf.mxu0
        %v2184 = vadd.f32 %v2124, %v2183
        %2185 = vdwg.mxu0
        %v2187 = vsel %vm1683, %v2104, 0
        %2189 = vmatpush.bf16.msra.mxu0 0
        %2190 = vmatpush.bf16.msra.mxu0 0
        %2191 = vmatpush.bf16.msra.mxu0 0
        %2192 = vmatpush.bf16.msra.mxu0 0
        %2193 = vmatpush.bf16.msra.mxu0 0
        %2194 = vmatpush.bf16.msra.mxu0 0
        %2195 = vmatpush.bf16.msra.mxu0 0
        %2196 = vmatpush.bf16.msra.mxu0 %v2187
        %2197 = vmatmul.bf16.gmra.mxu0 %v2137
        %v2198 = vpop.f32.mrf.mxu0
        %v2199 = vadd.f32 %v2109, %v2198
        %v2200 = vpop.f32.mrf.mxu0
        %v2201 = vadd.f32 %v2114, %v2200
        %2202 = vmatmul.bf16.gmra.mxu0 %v2140
        %v2203 = vpop.f32.mrf.mxu0
        %v2204 = vadd.f32 %v2119, %v2203
        %v2205 = vpop.f32.mrf.mxu0
        %v2206 = vadd.f32 %v2124, %v2205
        %2207 = vdwg.mxu0
        %v2209 = vsel %vm1683, %v2105, 0
        %2211 = vmatpush.bf16.msra.mxu0 0
        %2212 = vmatpush.bf16.msra.mxu0 0
        %2213 = vmatpush.bf16.msra.mxu0 0
        %2214 = vmatpush.bf16.msra.mxu0 0
        %2215 = vmatpush.bf16.msra.mxu0 0
        %2216 = vmatpush.bf16.msra.mxu0 0
        %2217 = vmatpush.bf16.msra.mxu0 0
        %2218 = vmatpush.bf16.msra.mxu0 %v2209
        %2219 = vmatmul.bf16.gmra.mxu0 %v2137
        %v2220 = vpop.f32.mrf.mxu0
        %v2221 = vadd.f32 %v2109, %v2220
        %v2222 = vpop.f32.mrf.mxu0
        %v2223 = vadd.f32 %v2114, %v2222
        %2224 = vmatmul.bf16.gmra.mxu0 %v2140
        %v2225 = vpop.f32.mrf.mxu0
        %v2226 = vadd.f32 %v2119, %v2225
        %v2227 = vpop.f32.mrf.mxu0
        %v2228 = vadd.f32 %v2124, %v2227
        %2229 = vdwg.mxu0
        %v2230 = vmax.f32 %v2155, 0.0
        %v2231 = vmax.f32 %v2157, 0.0
        %v2232 = vmax.f32 %v2160, 0.0
        %v2233 = vmax.f32 %v2162, 0.0
        %v2234 = vmax.f32 %v2177, 0.0
        %v2235 = vmax.f32 %v2179, 0.0
        %v2236 = vmax.f32 %v2182, 0.0
        %v2237 = vmax.f32 %v2184, 0.0
        %v2238 = vmax.f32 %v2199, 0.0
        %v2239 = vmax.f32 %v2201, 0.0
        %v2240 = vmax.f32 %v2204, 0.0
        %v2241 = vmax.f32 %v2206, 0.0
        %v2242 = vmax.f32 %v2221, 0.0
        %v2243 = vmax.f32 %v2223, 0.0
        %v2244 = vmax.f32 %v2226, 0.0
        %v2245 = vmax.f32 %v2228, 0.0
        %v2246 = vpack.c.bf16 %v2230, %v2230
        %v2247 = vpack.c.bf16 %v2231, %v2231
        %v2248 = vpack.c.bf16 %v2232, %v2232
        %v2249 = vpack.c.bf16 %v2233, %v2233
        %v2250 = vpack.c.bf16 %v2234, %v2234
        %v2251 = vpack.c.bf16 %v2235, %v2235
        %v2252 = vpack.c.bf16 %v2236, %v2236
        %v2253 = vpack.c.bf16 %v2237, %v2237
        %v2254 = vpack.c.bf16 %v2238, %v2238
        %v2255 = vpack.c.bf16 %v2239, %v2239
        %v2256 = vpack.c.bf16 %v2240, %v2240
        %v2257 = vpack.c.bf16 %v2241, %v2241
        %v2258 = vpack.c.bf16 %v2242, %v2242
        %v2259 = vpack.c.bf16 %v2243, %v2243
        %v2260 = vpack.c.bf16 %v2244, %v2244
        %v2261 = vpack.c.bf16 %v2245, %v2245
        %2263 = vset.pattern.permute.xlu0 0
        %2264 = vperm.xlu0 %2263, %v2101
        %v2265 = vpop.permute.xlu0 %2264
        %v2271 = vunpack.c.l.b16 %v2246
        %v2272 = vunpack.c.l.b16 %v2247
        %v2273 = vunpack.c.l.b16 %v2248
        %v2274 = vunpack.c.l.b16 %v2249
        %v2275 = vpack.c.b16 %v2272, %v2271
        %v2276 = vpack.c.b16 %v2274, %v2273
        %v2280 = vsel %vm840, %v2096, 0
        %2282 = vmatpush.bf16.msra.mxu0 0
        %2283 = vmatpush.bf16.msra.mxu0 0
        %2284 = vmatpush.bf16.msra.mxu0 0
        %2285 = vmatpush.bf16.msra.mxu0 0
        %2286 = vmatpush.bf16.msra.mxu0 0
        %2287 = vmatpush.bf16.msra.mxu0 0
        %2288 = vmatpush.bf16.msra.mxu0 %v2276
        %2289 = vmatpush.bf16.msra.mxu0 %v2275
        %2290 = vmatmul.bf16.gmra.mxu0 %v2280
        %v2291 = vpop.f32.mrf.mxu0
        %v2292 = vadd.f32 %v2265, %v2291
        %v2293 = vpop.f32.mrf.mxu0
        %2294 = vdwg.mxu0
        %v2299 = vunpack.c.l.b16 %v2250
        %v2300 = vunpack.c.l.b16 %v2251
        %v2301 = vunpack.c.l.b16 %v2252
        %v2302 = vunpack.c.l.b16 %v2253
        %v2303 = vpack.c.b16 %v2300, %v2299
        %v2304 = vpack.c.b16 %v2302, %v2301
        %2307 = vmatpush.bf16.msra.mxu0 0
        %2308 = vmatpush.bf16.msra.mxu0 0
        %2309 = vmatpush.bf16.msra.mxu0 0
        %2310 = vmatpush.bf16.msra.mxu0 0
        %2311 = vmatpush.bf16.msra.mxu0 0
        %2312 = vmatpush.bf16.msra.mxu0 0
        %2313 = vmatpush.bf16.msra.mxu0 %v2304
        %2314 = vmatpush.bf16.msra.mxu0 %v2303
        %2315 = vmatmul.bf16.gmra.mxu0 %v2280
        %v2316 = vpop.f32.mrf.mxu0
        %v2317 = vadd.f32 %v2265, %v2316
        %v2318 = vpop.f32.mrf.mxu0
        %2319 = vdwg.mxu0
        %v2324 = vunpack.c.l.b16 %v2254
        %v2325 = vunpack.c.l.b16 %v2255
        %v2326 = vunpack.c.l.b16 %v2256
        %v2327 = vunpack.c.l.b16 %v2257
        %v2328 = vpack.c.b16 %v2325, %v2324
        %v2329 = vpack.c.b16 %v2327, %v2326
        %2332 = vmatpush.bf16.msra.mxu0 0
        %2333 = vmatpush.bf16.msra.mxu0 0
        %2334 = vmatpush.bf16.msra.mxu0 0
        %2335 = vmatpush.bf16.msra.mxu0 0
        %2336 = vmatpush.bf16.msra.mxu0 0
        %2337 = vmatpush.bf16.msra.mxu0 0
        %2338 = vmatpush.bf16.msra.mxu0 %v2329
        %2339 = vmatpush.bf16.msra.mxu0 %v2328
        %2340 = vmatmul.bf16.gmra.mxu0 %v2280
        %v2341 = vpop.f32.mrf.mxu0
        %v2342 = vadd.f32 %v2265, %v2341
        %v2343 = vpop.f32.mrf.mxu0
        %2344 = vdwg.mxu0
        %v2349 = vunpack.c.l.b16 %v2258
        %v2350 = vunpack.c.l.b16 %v2259
        %v2351 = vunpack.c.l.b16 %v2260
        %v2352 = vunpack.c.l.b16 %v2261
        %v2353 = vpack.c.b16 %v2350, %v2349
        %v2354 = vpack.c.b16 %v2352, %v2351
        %2357 = vmatpush.bf16.msra.mxu0 0
        %2358 = vmatpush.bf16.msra.mxu0 0
        %2359 = vmatpush.bf16.msra.mxu0 0
        %2360 = vmatpush.bf16.msra.mxu0 0
        %2361 = vmatpush.bf16.msra.mxu0 0
        %2362 = vmatpush.bf16.msra.mxu0 0
        %2363 = vmatpush.bf16.msra.mxu0 %v2354
        %2364 = vmatpush.bf16.msra.mxu0 %v2353
        %2365 = vmatmul.bf16.gmra.mxu0 %v2280
        %v2366 = vpop.f32.mrf.mxu0
        %v2367 = vadd.f32 %v2265, %v2366
        %v2368 = vpop.f32.mrf.mxu0
        %2369 = vdwg.mxu0
        %v2370 = vadd.f32 %v2086, %v2292
        %v2371 = vadd.f32 %v2087, %v2317
        %v2372 = vadd.f32 %v2088, %v2342
        %v2373 = vadd.f32 %v2089, %v2367
        %v2374 = vsel %vm840, %v2370, 0.0
        %2375 = vadd.xlane.f32.xlu0 %v2374
        %v2376 = vpop.xlane.xlu0 %2375
        %v2377 = vsel %vm840, %v2371, 0.0
        %2378 = vadd.xlane.f32.xlu0 %v2377
        %v2379 = vpop.xlane.xlu0 %2378
        %v2380 = vsel %vm840, %v2372, 0.0
        %2381 = vadd.xlane.f32.xlu0 %v2380
        %v2382 = vpop.xlane.xlu0 %2381
        %v2383 = vsel %vm840, %v2373, 0.0
        %2384 = vadd.xlane.f32.xlu0 %v2383
        %v2385 = vpop.xlane.xlu0 %2384
        %v2386 = vmul.f32 %v2376, %v892
        %v2387 = vmul.f32 %v2379, %v892
        %v2388 = vmul.f32 %v2382, %v892
        %v2389 = vmul.f32 %v2385, %v892
        %v2390 = vsub.f32 %v2370, %v2386
        %v2391 = vsub.f32 %v2371, %v2387
        %v2392 = vsub.f32 %v2372, %v2388
        %v2393 = vsub.f32 %v2373, %v2389
        %v2394 = vmul.f32 %v2390, %v2390
        %v2395 = vmul.f32 %v2391, %v2391
        %v2396 = vmul.f32 %v2392, %v2392
        %v2397 = vmul.f32 %v2393, %v2393
        %v2398 = vsel %vm840, %v2394, 0.0
        %2399 = vadd.xlane.f32.xlu0 %v2398
        %v2400 = vpop.xlane.xlu0 %2399
        %v2401 = vsel %vm840, %v2395, 0.0
        %2402 = vadd.xlane.f32.xlu0 %v2401
        %v2403 = vpop.xlane.xlu0 %2402
        %v2404 = vsel %vm840, %v2396, 0.0
        %2405 = vadd.xlane.f32.xlu0 %v2404
        %v2406 = vpop.xlane.xlu0 %2405
        %v2407 = vsel %vm840, %v2397, 0.0
        %2408 = vadd.xlane.f32.xlu0 %v2407
        %v2409 = vpop.xlane.xlu0 %2408
        %v2410 = vmul.f32 %v2400, %v892
        %v2411 = vmul.f32 %v2403, %v892
        %v2412 = vmul.f32 %v2406, %v892
        %v2413 = vmul.f32 %v2409, %v892
        %v2414 = vadd.f32 %v2410, 1e-05
        %v2415 = vadd.f32 %v2411, 1e-05
        %v2416 = vadd.f32 %v2412, 1e-05
        %v2417 = vadd.f32 %v2413, 1e-05
        %v2418 = vrsqrt.pop %v2414
        %v2419 = vmul.f32 %v2418, %v2414
        %v2420 = vmul.f32 %v2419, %v2418
        %v2421 = vmul.f32 0.5, %v2420
        %v2422 = vsub.f32 1.5, %v2421
        %v2423 = vmul.f32 %v2418, %v2422
        %vm2424 = vweird.f32 %v2414
        %vm2425 = vweird.f32 %v2418
        %vm2426 = vmor %vm2424, %vm2425
        %v2427 = vsel %vm2426, %v2418, %v2423
        %v2428 = vrsqrt.pop %v2415
        %v2429 = vmul.f32 %v2428, %v2415
        %v2430 = vmul.f32 %v2429, %v2428
        %v2431 = vmul.f32 0.5, %v2430
        %v2432 = vsub.f32 1.5, %v2431
        %v2433 = vmul.f32 %v2428, %v2432
        %vm2434 = vweird.f32 %v2415
        %vm2435 = vweird.f32 %v2428
        %vm2436 = vmor %vm2434, %vm2435
        %v2437 = vsel %vm2436, %v2428, %v2433
        %v2438 = vrsqrt.pop %v2416
        %v2439 = vmul.f32 %v2438, %v2416
        %v2440 = vmul.f32 %v2439, %v2438
        %v2441 = vmul.f32 0.5, %v2440
        %v2442 = vsub.f32 1.5, %v2441
        %v2443 = vmul.f32 %v2438, %v2442
        %vm2444 = vweird.f32 %v2416
        %vm2445 = vweird.f32 %v2438
        %vm2446 = vmor %vm2444, %vm2445
        %v2447 = vsel %vm2446, %v2438, %v2443
        %v2448 = vrsqrt.pop %v2417
        %v2449 = vmul.f32 %v2448, %v2417
        %v2450 = vmul.f32 %v2449, %v2448
        %v2451 = vmul.f32 0.5, %v2450
        %v2452 = vsub.f32 1.5, %v2451
        %v2453 = vmul.f32 %v2448, %v2452
        %vm2454 = vweird.f32 %v2417
        %vm2455 = vweird.f32 %v2448
        %vm2456 = vmor %vm2454, %vm2455
        %v2457 = vsel %vm2456, %v2448, %v2453
        %v2458 = vmul.f32 %v2390, %v2427
        %v2459 = vmul.f32 %v2391, %v2437
        %v2460 = vmul.f32 %v2392, %v2447
        %v2461 = vmul.f32 %v2393, %v2457
        %v2462 = vperm.slane %v2090, 0
        %v2463 = vmul.f32 %v2458, %v2462
        %v2464 = vmul.f32 %v2459, %v2462
        %v2465 = vmul.f32 %v2460, %v2462
        %v2466 = vmul.f32 %v2461, %v2462
        %v2467 = vperm.slane %v2091, 0
        %v2468 = vadd.f32 %v2463, %v2467
        %v2469 = vadd.f32 %v2464, %v2467
        %v2470 = vadd.f32 %v2465, %v2467
        %v2471 = vadd.f32 %v2466, %v2467
        %v2472 = vld [vmem:[%s786] sm:$0xf]
        %v2473 = vld [vmem:[%s786 + $0x4] sm:$0xf]
        %v2474 = vld [vmem:[%s786 + $0x8] sm:$0xf]
        %v2475 = vld [vmem:[%s786 + $0xc] sm:$0xf]
        %v2476 = vpack.c.bf16 %v2469, %v2468
        %v2477 = vpack.c.bf16 %v2471, %v2470
        %v2478 = vld [vmem:[%s789] sm:$0x1]
        %v2480 = vperm.slane %v2478, 0
        %v2486 = vunpack.c.l.b16 %v2472
        %v2487 = vunpack.c.l.b16 %v2473
        %v2488 = vunpack.c.l.b16 %v2474
        %v2489 = vunpack.c.l.b16 %v2475
        %v2490 = vpack.c.b16 %v2487, %v2486
        %v2491 = vpack.c.b16 %v2489, %v2488
        %v2495 = vsel %vm840, %v2476, 0
        %v2498 = vsel %vm840, %v2477, 0
        %2500 = vmatpush.bf16.msra.mxu0 0
        %2501 = vmatpush.bf16.msra.mxu0 0
        %2502 = vmatpush.bf16.msra.mxu0 0
        %2503 = vmatpush.bf16.msra.mxu0 0
        %2504 = vmatpush.bf16.msra.mxu0 0
        %2505 = vmatpush.bf16.msra.mxu0 0
        %2506 = vmatpush.bf16.msra.mxu0 %v2491
        %2507 = vmatpush.bf16.msra.mxu0 %v2490
        %2508 = vmatmul.bf16.gmra.mxu0 %v2495
        %v2509 = vpop.f32.mrf.mxu0
        %v2510 = vadd.f32 %v2480, %v2509
        %v2511 = vpop.f32.mrf.mxu0
        %v2512 = vadd.f32 %v2480, %v2511
        %2513 = vmatmul.bf16.gmra.mxu0 %v2498
        %v2514 = vpop.f32.mrf.mxu0
        %v2515 = vadd.f32 %v2480, %v2514
        %v2516 = vpop.f32.mrf.mxu0
        %v2517 = vadd.f32 %v2480, %v2516
        %2518 = vdwg.mxu0
        %v2519 = vpack.c.bf16 %v2512, %v2510
        %v2520 = vpack.c.bf16 %v2517, %v2515
        %2523 = vrot.lane.b32.xlu0 %v2519, 96
        %v2524 = vpop.permute.xlu0 %2523
        %2525 = vrot.lane.b32.xlu0 %v2520, 96
        %v2526 = vpop.permute.xlu0 %2525
        %v2528 = vsel %vm1776, %v2519, 0
        %v2531 = vsel %vm1776, %v2520, 0
        %v2534 = vsel %vm1776, %v2524, 0
        %v2537 = vsel %vm1776, %v2526, 0
        %2539 = vmatpush.bf16.xpose.msra.mxu0 0
        %2540 = vmatpush.bf16.xpose.msra.mxu0 0
        %2541 = vmatpush.bf16.xpose.msra.mxu0 0
        %2542 = vmatpush.bf16.xpose.msra.mxu0 0
        %2543 = vmatpush.bf16.xpose.msra.mxu0 0
        %2544 = vmatpush.bf16.xpose.msra.mxu0 0
        %2545 = vmatpush.bf16.xpose.msra.mxu0 %v2537
        %2546 = vmatpush.bf16.xpose.msra.mxu0 %v2534
        %2547 = vmatmul.bf16.gmra.mxu0 %v2528
        %v2548 = vpop.f32.mrf.mxu0
        %v2549 = vadd.f32 0.0, %v2548
        %v2550 = vpop.f32.mrf.mxu0
        %v2551 = vadd.f32 0.0, %v2550
        %2552 = vmatmul.bf16.gmra.mxu0 %v2531
        %v2553 = vpop.f32.mrf.mxu0
        %v2554 = vadd.f32 0.0, %v2553
        %v2555 = vpop.f32.mrf.mxu0
        %v2556 = vadd.f32 0.0, %v2555
        %2557 = vdwg.mxu0
        %v2558 = vmul.f32 %v2549, 0.25
        %v2559 = vmul.f32 %v2551, 0.25
        %v2560 = vmul.f32 %v2554, 0.25
        %v2561 = vmul.f32 %v2556, 0.25
        %v2562 = vadd.f32 %v2558, %v818
        %v2563 = vadd.f32 %v2559, %v819
        %v2564 = vadd.f32 %v2560, %v820
        %v2565 = vadd.f32 %v2561, %v821
        %v2566 = vsel %vm840, %v2562, -inf
        %2567 = vmax.xlane.f32.xlu0 %v2566
        %v2568 = vpop.xlane.xlu0 %2567
        %v2569 = vsel %vm840, %v2563, -inf
        %2570 = vmax.xlane.f32.xlu0 %v2569
        %v2571 = vpop.xlane.xlu0 %2570
        %v2572 = vsel %vm840, %v2564, -inf
        %2573 = vmax.xlane.f32.xlu0 %v2572
        %v2574 = vpop.xlane.xlu0 %2573
        %v2575 = vsel %vm840, %v2565, -inf
        %2576 = vmax.xlane.f32.xlu0 %v2575
        %v2577 = vpop.xlane.xlu0 %2576
        %v2578 = vsub.f32 %v2562, %v2568
        %v2579 = vsub.f32 %v2563, %v2571
        %v2580 = vsub.f32 %v2564, %v2574
        %v2581 = vsub.f32 %v2565, %v2577
        %v2582 = vmul.f32 %v2578, 1.442695
        %v2583 = vpow.pop %v2582
        %v2584 = vmul.f32 %v2579, 1.442695
        %v2585 = vpow.pop %v2584
        %v2586 = vmul.f32 %v2580, 1.442695
        %v2587 = vpow.pop %v2586
        %v2588 = vmul.f32 %v2581, 1.442695
        %v2589 = vpow.pop %v2588
        %v2590 = vsel %vm840, %v2583, 0.0
        %2591 = vadd.xlane.f32.xlu0 %v2590
        %v2592 = vpop.xlane.xlu0 %2591
        %v2593 = vsel %vm840, %v2585, 0.0
        %2594 = vadd.xlane.f32.xlu0 %v2593
        %v2595 = vpop.xlane.xlu0 %2594
        %v2596 = vsel %vm840, %v2587, 0.0
        %2597 = vadd.xlane.f32.xlu0 %v2596
        %v2598 = vpop.xlane.xlu0 %2597
        %v2599 = vsel %vm840, %v2589, 0.0
        %2600 = vadd.xlane.f32.xlu0 %v2599
        %v2601 = vpop.xlane.xlu0 %2600
        %v2602 = vrcp.pop %v2592
        %v2603 = vrcp.pop %v2595
        %v2604 = vrcp.pop %v2598
        %v2605 = vrcp.pop %v2601
        %v2606 = vmul.f32 %v2583, %v2602
        %v2607 = vmul.f32 %v2585, %v2603
        %v2608 = vmul.f32 %v2587, %v2604
        %v2609 = vmul.f32 %v2589, %v2605
        %v2610 = vpack.c.bf16 %v2607, %v2606
        %v2611 = vpack.c.bf16 %v2609, %v2608
        %2612 = vrot.lane.b32.xlu0 %v2519, 64
        %v2613 = vpop.permute.xlu0 %2612
        %2614 = vrot.lane.b32.xlu0 %v2520, 64
        %v2615 = vpop.permute.xlu0 %2614
        %v2619 = vsel %vm840, %v2610, 0
        %v2622 = vsel %vm840, %v2611, 0
        %2624 = vmatpush.bf16.msra.mxu0 0
        %2625 = vmatpush.bf16.msra.mxu0 0
        %2626 = vmatpush.bf16.msra.mxu0 0
        %2627 = vmatpush.bf16.msra.mxu0 0
        %2628 = vmatpush.bf16.msra.mxu0 0
        %2629 = vmatpush.bf16.msra.mxu0 0
        %2630 = vmatpush.bf16.msra.mxu0 %v2615
        %2631 = vmatpush.bf16.msra.mxu0 %v2613
        %2632 = vmatmul.bf16.gmra.mxu0 %v2619
        %v2633 = vpop.f32.mrf.mxu0
        %v2634 = vadd.f32 0.0, %v2633
        %v2635 = vpop.f32.mrf.mxu0
        %v2636 = vadd.f32 0.0, %v2635
        %2637 = vmatmul.bf16.gmra.mxu0 %v2622
        %v2638 = vpop.f32.mrf.mxu0
        %v2639 = vadd.f32 0.0, %v2638
        %v2640 = vpop.f32.mrf.mxu0
        %v2641 = vadd.f32 0.0, %v2640
        %2642 = vdwg.mxu0
        %2643 = vrot.lane.b32.xlu0 %v2519, 112
        %v2644 = vpop.permute.xlu0 %2643
        %2645 = vrot.lane.b32.xlu0 %v2520, 112
        %v2646 = vpop.permute.xlu0 %2645
        %2647 = vrot.lane.b32.xlu0 %v2519, 80
        %v2648 = vpop.permute.xlu0 %2647
        %2649 = vrot.lane.b32.xlu0 %v2520, 80
        %v2650 = vpop.permute.xlu0 %2649
        %v2652 = vsel %vm1776, %v2644, 0
        %v2655 = vsel %vm1776, %v2646, 0
        %v2658 = vsel %vm1776, %v2648, 0
        %v2661 = vsel %vm1776, %v2650, 0
        %2663 = vmatpush.bf16.xpose.msra.mxu0 0
        %2664 = vmatpush.bf16.xpose.msra.mxu0 0
        %2665 = vmatpush.bf16.xpose.msra.mxu0 0
        %2666 = vmatpush.bf16.xpose.msra.mxu0 0
        %2667 = vmatpush.bf16.xpose.msra.mxu0 0
        %2668 = vmatpush.bf16.xpose.msra.mxu0 0
        %2669 = vmatpush.bf16.xpose.msra.mxu0 %v2661
        %2670 = vmatpush.bf16.xpose.msra.mxu0 %v2658
        %2671 = vmatmul.bf16.gmra.mxu0 %v2652
        %v2672 = vpop.f32.mrf.mxu0
        %v2673 = vadd.f32 0.0, %v2672
        %v2674 = vpop.f32.mrf.mxu0
        %v2675 = vadd.f32 0.0, %v2674
        %2676 = vmatmul.bf16.gmra.mxu0 %v2655
        %v2677 = vpop.f32.mrf.mxu0
        %v2678 = vadd.f32 0.0, %v2677
        %v2679 = vpop.f32.mrf.mxu0
        %v2680 = vadd.f32 0.0, %v2679
        %2681 = vdwg.mxu0
        %v2682 = vmul.f32 %v2673, 0.25
        %v2683 = vmul.f32 %v2675, 0.25
        %v2684 = vmul.f32 %v2678, 0.25
        %v2685 = vmul.f32 %v2680, 0.25
        %v2686 = vadd.f32 %v2682, %v818
        %v2687 = vadd.f32 %v2683, %v819
        %v2688 = vadd.f32 %v2684, %v820
        %v2689 = vadd.f32 %v2685, %v821
        %v2690 = vsel %vm840, %v2686, -inf
        %2691 = vmax.xlane.f32.xlu0 %v2690
        %v2692 = vpop.xlane.xlu0 %2691
        %v2693 = vsel %vm840, %v2687, -inf
        %2694 = vmax.xlane.f32.xlu0 %v2693
        %v2695 = vpop.xlane.xlu0 %2694
        %v2696 = vsel %vm840, %v2688, -inf
        %2697 = vmax.xlane.f32.xlu0 %v2696
        %v2698 = vpop.xlane.xlu0 %2697
        %v2699 = vsel %vm840, %v2689, -inf
        %2700 = vmax.xlane.f32.xlu0 %v2699
        %v2701 = vpop.xlane.xlu0 %2700
        %v2702 = vsub.f32 %v2686, %v2692
        %v2703 = vsub.f32 %v2687, %v2695
        %v2704 = vsub.f32 %v2688, %v2698
        %v2705 = vsub.f32 %v2689, %v2701
        %v2706 = vmul.f32 %v2702, 1.442695
        %v2707 = vpow.pop %v2706
        %v2708 = vmul.f32 %v2703, 1.442695
        %v2709 = vpow.pop %v2708
        %v2710 = vmul.f32 %v2704, 1.442695
        %v2711 = vpow.pop %v2710
        %v2712 = vmul.f32 %v2705, 1.442695
        %v2713 = vpow.pop %v2712
        %v2714 = vsel %vm840, %v2707, 0.0
        %2715 = vadd.xlane.f32.xlu0 %v2714
        %v2716 = vpop.xlane.xlu0 %2715
        %v2717 = vsel %vm840, %v2709, 0.0
        %2718 = vadd.xlane.f32.xlu0 %v2717
        %v2719 = vpop.xlane.xlu0 %2718
        %v2720 = vsel %vm840, %v2711, 0.0
        %2721 = vadd.xlane.f32.xlu0 %v2720
        %v2722 = vpop.xlane.xlu0 %2721
        %v2723 = vsel %vm840, %v2713, 0.0
        %2724 = vadd.xlane.f32.xlu0 %v2723
        %v2725 = vpop.xlane.xlu0 %2724
        %v2726 = vrcp.pop %v2716
        %v2727 = vrcp.pop %v2719
        %v2728 = vrcp.pop %v2722
        %v2729 = vrcp.pop %v2725
        %v2730 = vmul.f32 %v2707, %v2726
        %v2731 = vmul.f32 %v2709, %v2727
        %v2732 = vmul.f32 %v2711, %v2728
        %v2733 = vmul.f32 %v2713, %v2729
        %v2734 = vpack.c.bf16 %v2731, %v2730
        %v2735 = vpack.c.bf16 %v2733, %v2732
        %2736 = vrot.lane.b32.xlu0 %v2519, 48
        %v2737 = vpop.permute.xlu0 %2736
        %2738 = vrot.lane.b32.xlu0 %v2520, 48
        %v2739 = vpop.permute.xlu0 %2738
        %v2743 = vsel %vm840, %v2734, 0
        %v2746 = vsel %vm840, %v2735, 0
        %2748 = vmatpush.bf16.msra.mxu0 0
        %2749 = vmatpush.bf16.msra.mxu0 0
        %2750 = vmatpush.bf16.msra.mxu0 0
        %2751 = vmatpush.bf16.msra.mxu0 0
        %2752 = vmatpush.bf16.msra.mxu0 0
        %2753 = vmatpush.bf16.msra.mxu0 0
        %2754 = vmatpush.bf16.msra.mxu0 %v2739
        %2755 = vmatpush.bf16.msra.mxu0 %v2737
        %2756 = vmatmul.bf16.gmra.mxu0 %v2743
        %v2757 = vpop.f32.mrf.mxu0
        %v2758 = vadd.f32 0.0, %v2757
        %v2759 = vpop.f32.mrf.mxu0
        %v2760 = vadd.f32 0.0, %v2759
        %2761 = vmatmul.bf16.gmra.mxu0 %v2746
        %v2762 = vpop.f32.mrf.mxu0
        %v2763 = vadd.f32 0.0, %v2762
        %v2764 = vpop.f32.mrf.mxu0
        %v2765 = vadd.f32 0.0, %v2764
        %2766 = vdwg.mxu0
        %2771 = vrot.lane.b32.xlu0 %v2758, 16
        %v2772 = vpop.permute.xlu0 %2771
        %2773 = vrot.lane.b32.xlu0 %v2760, 16
        %v2774 = vpop.permute.xlu0 %2773
        %2775 = vrot.lane.b32.xlu0 %v2763, 16
        %v2776 = vpop.permute.xlu0 %2775
        %2777 = vrot.lane.b32.xlu0 %v2765, 16
        %v2778 = vpop.permute.xlu0 %2777
        %v2783 = vsel %vm1776, %v2634, %v2772
        %v2784 = vsel %vm1776, %v2636, %v2774
        %v2785 = vsel %vm1776, %v2639, %v2776
        %v2786 = vsel %vm1776, %v2641, %v2778
        %v2787 = vld [vmem:[%s794] sm:$0xf]
        %v2788 = vld [vmem:[%s794 + $0x4] sm:$0xf]
        %v2789 = vld [vmem:[%s794 + $0x8] sm:$0xf]
        %v2790 = vld [vmem:[%s794 + $0xc] sm:$0xf]
        %v2791 = vpack.c.bf16 %v2784, %v2783
        %v2792 = vpack.c.bf16 %v2786, %v2785
        %v2793 = vld [vmem:[%s799 + $0x11] sm:$0x1]
        %v2794 = vperm.slane %v2793, 0
        %v2799 = vunpack.c.l.b16 %v2787
        %v2800 = vunpack.c.l.b16 %v2788
        %v2801 = vunpack.c.l.b16 %v2789
        %v2802 = vunpack.c.l.b16 %v2790
        %v2803 = vpack.c.b16 %v2800, %v2799
        %v2804 = vpack.c.b16 %v2802, %v2801
        %v2808 = vsel %vm840, %v2791, 0
        %v2811 = vsel %vm840, %v2792, 0
        %2813 = vmatpush.bf16.msra.mxu0 0
        %2814 = vmatpush.bf16.msra.mxu0 0
        %2815 = vmatpush.bf16.msra.mxu0 0
        %2816 = vmatpush.bf16.msra.mxu0 0
        %2817 = vmatpush.bf16.msra.mxu0 0
        %2818 = vmatpush.bf16.msra.mxu0 0
        %2819 = vmatpush.bf16.msra.mxu0 %v2804
        %2820 = vmatpush.bf16.msra.mxu0 %v2803
        %2821 = vmatmul.bf16.gmra.mxu0 %v2808
        %v2822 = vpop.f32.mrf.mxu0
        %v2823 = vadd.f32 %v2794, %v2822
        %v2824 = vpop.f32.mrf.mxu0
        %v2825 = vadd.f32 %v2794, %v2824
        %2826 = vmatmul.bf16.gmra.mxu0 %v2811
        %v2827 = vpop.f32.mrf.mxu0
        %v2828 = vadd.f32 %v2794, %v2827
        %v2829 = vpop.f32.mrf.mxu0
        %v2830 = vadd.f32 %v2794, %v2829
        %2831 = vdwg.mxu0
        %v2832 = vadd.f32 %v2468, %v2823
        %v2833 = vadd.f32 %v2469, %v2825
        %v2834 = vadd.f32 %v2470, %v2828
        %v2835 = vadd.f32 %v2471, %v2830
        %v2836 = vld [vmem:[%s799 + $0x12] sm:$0x1]
        %v2837 = vld [vmem:[%s799 + $0x13] sm:$0x1]
        %v2838 = vsel %vm840, %v2832, 0.0
        %2839 = vadd.xlane.f32.xlu0 %v2838
        %v2840 = vpop.xlane.xlu0 %2839
        %v2841 = vsel %vm840, %v2833, 0.0
        %2842 = vadd.xlane.f32.xlu0 %v2841
        %v2843 = vpop.xlane.xlu0 %2842
        %v2844 = vsel %vm840, %v2834, 0.0
        %2845 = vadd.xlane.f32.xlu0 %v2844
        %v2846 = vpop.xlane.xlu0 %2845
        %v2847 = vsel %vm840, %v2835, 0.0
        %2848 = vadd.xlane.f32.xlu0 %v2847
        %v2849 = vpop.xlane.xlu0 %2848
        %v2850 = vmul.f32 %v2840, %v892
        %v2851 = vmul.f32 %v2843, %v892
        %v2852 = vmul.f32 %v2846, %v892
        %v2853 = vmul.f32 %v2849, %v892
        %v2854 = vsub.f32 %v2832, %v2850
        %v2855 = vsub.f32 %v2833, %v2851
        %v2856 = vsub.f32 %v2834, %v2852
        %v2857 = vsub.f32 %v2835, %v2853
        %v2858 = vmul.f32 %v2854, %v2854
        %v2859 = vmul.f32 %v2855, %v2855
        %v2860 = vmul.f32 %v2856, %v2856
        %v2861 = vmul.f32 %v2857, %v2857
        %v2862 = vsel %vm840, %v2858, 0.0
        %2863 = vadd.xlane.f32.xlu0 %v2862
        %v2864 = vpop.xlane.xlu0 %2863
        %v2865 = vsel %vm840, %v2859, 0.0
        %2866 = vadd.xlane.f32.xlu0 %v2865
        %v2867 = vpop.xlane.xlu0 %2866
        %v2868 = vsel %vm840, %v2860, 0.0
        %2869 = vadd.xlane.f32.xlu0 %v2868
        %v2870 = vpop.xlane.xlu0 %2869
        %v2871 = vsel %vm840, %v2861, 0.0
        %2872 = vadd.xlane.f32.xlu0 %v2871
        %v2873 = vpop.xlane.xlu0 %2872
        %v2874 = vmul.f32 %v2864, %v892
        %v2875 = vmul.f32 %v2867, %v892
        %v2876 = vmul.f32 %v2870, %v892
        %v2877 = vmul.f32 %v2873, %v892
        %v2878 = vadd.f32 %v2874, 1e-05
        %v2879 = vadd.f32 %v2875, 1e-05
        %v2880 = vadd.f32 %v2876, 1e-05
        %v2881 = vadd.f32 %v2877, 1e-05
        %v2882 = vrsqrt.pop %v2878
        %v2883 = vmul.f32 %v2882, %v2878
        %v2884 = vmul.f32 %v2883, %v2882
        %v2885 = vmul.f32 0.5, %v2884
        %v2886 = vsub.f32 1.5, %v2885
        %v2887 = vmul.f32 %v2882, %v2886
        %vm2888 = vweird.f32 %v2878
        %vm2889 = vweird.f32 %v2882
        %vm2890 = vmor %vm2888, %vm2889
        %v2891 = vsel %vm2890, %v2882, %v2887
        %v2892 = vrsqrt.pop %v2879
        %v2893 = vmul.f32 %v2892, %v2879
        %v2894 = vmul.f32 %v2893, %v2892
        %v2895 = vmul.f32 0.5, %v2894
        %v2896 = vsub.f32 1.5, %v2895
        %v2897 = vmul.f32 %v2892, %v2896
        %vm2898 = vweird.f32 %v2879
        %vm2899 = vweird.f32 %v2892
        %vm2900 = vmor %vm2898, %vm2899
        %v2901 = vsel %vm2900, %v2892, %v2897
        %v2902 = vrsqrt.pop %v2880
        %v2903 = vmul.f32 %v2902, %v2880
        %v2904 = vmul.f32 %v2903, %v2902
        %v2905 = vmul.f32 0.5, %v2904
        %v2906 = vsub.f32 1.5, %v2905
        %v2907 = vmul.f32 %v2902, %v2906
        %vm2908 = vweird.f32 %v2880
        %vm2909 = vweird.f32 %v2902
        %vm2910 = vmor %vm2908, %vm2909
        %v2911 = vsel %vm2910, %v2902, %v2907
        %v2912 = vrsqrt.pop %v2881
        %v2913 = vmul.f32 %v2912, %v2881
        %v2914 = vmul.f32 %v2913, %v2912
        %v2915 = vmul.f32 0.5, %v2914
        %v2916 = vsub.f32 1.5, %v2915
        %v2917 = vmul.f32 %v2912, %v2916
        %vm2918 = vweird.f32 %v2881
        %vm2919 = vweird.f32 %v2912
        %vm2920 = vmor %vm2918, %vm2919
        %v2921 = vsel %vm2920, %v2912, %v2917
        %v2922 = vmul.f32 %v2854, %v2891
        %v2923 = vmul.f32 %v2855, %v2901
        %v2924 = vmul.f32 %v2856, %v2911
        %v2925 = vmul.f32 %v2857, %v2921
        %v2926 = vperm.slane %v2836, 0
        %v2927 = vmul.f32 %v2922, %v2926
        %v2928 = vmul.f32 %v2923, %v2926
        %v2929 = vmul.f32 %v2924, %v2926
        %v2930 = vmul.f32 %v2925, %v2926
        %v2931 = vperm.slane %v2837, 0
        %v2932 = vadd.f32 %v2927, %v2931
        %v2933 = vadd.f32 %v2928, %v2931
        %v2934 = vadd.f32 %v2929, %v2931
        %v2935 = vadd.f32 %v2930, %v2931
        %v2936 = vld [vmem:[%s799 + $0x14] sm:$0x1]
        %v2937 = vld [vmem:[%s799 + $0x15] sm:$0x1]
        %s2938 = scalar_lea.vmem %s766, 16
        %v2939 = vld [vmem:[%s2938] sm:$0xf]
        %v2940 = vld [vmem:[%s2938 + $0x4] sm:$0xf]
        %v2941 = vld [vmem:[%s2938 + $0x8] sm:$0xf]
        %v2942 = vld [vmem:[%s2938 + $0xc] sm:$0xf]
        %s2943 = scalar_lea.vmem %s776, 4
        %v2944 = vld [vmem:[%s2943] sm:$0xf]
        %s2945 = scalar_lea.vmem %s771, 32
        %v2946 = vld [vmem:[%s2945] sm:$0xff]
        %v2947 = vld [vmem:[%s2945 + $0x8] sm:$0xff]
        %v2948 = vld [vmem:[%s2945 + $0x10] sm:$0xff]
        %v2949 = vld [vmem:[%s2945 + $0x18] sm:$0xff]
        %s2950 = scalar_lea.vmem %s781, 8
        %v2951 = vld [vmem:[%s2950] sm:$0xff]
        %v2952 = vpack.c.bf16 %v2932, %v2932
        %v2953 = vpack.c.bf16 %v2933, %v2933
        %v2954 = vpack.c.bf16 %v2934, %v2934
        %v2955 = vpack.c.bf16 %v2935, %v2935
        %2957 = vset.pattern.permute.xlu0 0
        %2958 = vperm.xlu0 %2957, %v2946
        %v2959 = vpop.permute.xlu0 %2958
        %2962 = vset.pattern.permute.xlu0 0
        %2963 = vperm.xlu0 %2962, %v2947
        %v2964 = vpop.permute.xlu0 %2963
        %2967 = vset.pattern.permute.xlu0 0
        %2968 = vperm.xlu0 %2967, %v2948
        %v2969 = vpop.permute.xlu0 %2968
        %2972 = vset.pattern.permute.xlu0 0
        %2973 = vperm.xlu0 %2972, %v2949
        %v2974 = vpop.permute.xlu0 %2973
        %v2980 = vunpack.c.l.b16 %v2939
        %v2981 = vunpack.c.l.b16 %v2940
        %v2982 = vunpack.c.l.b16 %v2941
        %v2983 = vunpack.c.l.b16 %v2942
        %v2984 = vpack.c.b16 %v2981, %v2980
        %v2985 = vpack.c.b16 %v2983, %v2982
        %v2987 = vsel %vm1679, %v2984, 0
        %v2990 = vsel %vm1679, %v2985, 0
        %v2993 = vsel %vm1683, %v2952, 0
        %2995 = vmatpush.bf16.msra.mxu0 0
        %2996 = vmatpush.bf16.msra.mxu0 0
        %2997 = vmatpush.bf16.msra.mxu0 0
        %2998 = vmatpush.bf16.msra.mxu0 0
        %2999 = vmatpush.bf16.msra.mxu0 0
        %3000 = vmatpush.bf16.msra.mxu0 0
        %3001 = vmatpush.bf16.msra.mxu0 0
        %3002 = vmatpush.bf16.msra.mxu0 %v2993
        %3003 = vmatmul.bf16.gmra.mxu0 %v2987
        %v3004 = vpop.f32.mrf.mxu0
        %v3005 = vadd.f32 %v2959, %v3004
        %v3006 = vpop.f32.mrf.mxu0
        %v3007 = vadd.f32 %v2964, %v3006
        %3008 = vmatmul.bf16.gmra.mxu0 %v2990
        %v3009 = vpop.f32.mrf.mxu0
        %v3010 = vadd.f32 %v2969, %v3009
        %v3011 = vpop.f32.mrf.mxu0
        %v3012 = vadd.f32 %v2974, %v3011
        %3013 = vdwg.mxu0
        %v3015 = vsel %vm1683, %v2953, 0
        %3017 = vmatpush.bf16.msra.mxu0 0
        %3018 = vmatpush.bf16.msra.mxu0 0
        %3019 = vmatpush.bf16.msra.mxu0 0
        %3020 = vmatpush.bf16.msra.mxu0 0
        %3021 = vmatpush.bf16.msra.mxu0 0
        %3022 = vmatpush.bf16.msra.mxu0 0
        %3023 = vmatpush.bf16.msra.mxu0 0
        %3024 = vmatpush.bf16.msra.mxu0 %v3015
        %3025 = vmatmul.bf16.gmra.mxu0 %v2987
        %v3026 = vpop.f32.mrf.mxu0
        %v3027 = vadd.f32 %v2959, %v3026
        %v3028 = vpop.f32.mrf.mxu0
        %v3029 = vadd.f32 %v2964, %v3028
        %3030 = vmatmul.bf16.gmra.mxu0 %v2990
        %v3031 = vpop.f32.mrf.mxu0
        %v3032 = vadd.f32 %v2969, %v3031
        %v3033 = vpop.f32.mrf.mxu0
        %v3034 = vadd.f32 %v2974, %v3033
        %3035 = vdwg.mxu0
        %v3037 = vsel %vm1683, %v2954, 0
        %3039 = vmatpush.bf16.msra.mxu0 0
        %3040 = vmatpush.bf16.msra.mxu0 0
        %3041 = vmatpush.bf16.msra.mxu0 0
        %3042 = vmatpush.bf16.msra.mxu0 0
        %3043 = vmatpush.bf16.msra.mxu0 0
        %3044 = vmatpush.bf16.msra.mxu0 0
        %3045 = vmatpush.bf16.msra.mxu0 0
        %3046 = vmatpush.bf16.msra.mxu0 %v3037
        %3047 = vmatmul.bf16.gmra.mxu0 %v2987
        %v3048 = vpop.f32.mrf.mxu0
        %v3049 = vadd.f32 %v2959, %v3048
        %v3050 = vpop.f32.mrf.mxu0
        %v3051 = vadd.f32 %v2964, %v3050
        %3052 = vmatmul.bf16.gmra.mxu0 %v2990
        %v3053 = vpop.f32.mrf.mxu0
        %v3054 = vadd.f32 %v2969, %v3053
        %v3055 = vpop.f32.mrf.mxu0
        %v3056 = vadd.f32 %v2974, %v3055
        %3057 = vdwg.mxu0
        %v3059 = vsel %vm1683, %v2955, 0
        %3061 = vmatpush.bf16.msra.mxu0 0
        %3062 = vmatpush.bf16.msra.mxu0 0
        %3063 = vmatpush.bf16.msra.mxu0 0
        %3064 = vmatpush.bf16.msra.mxu0 0
        %3065 = vmatpush.bf16.msra.mxu0 0
        %3066 = vmatpush.bf16.msra.mxu0 0
        %3067 = vmatpush.bf16.msra.mxu0 0
        %3068 = vmatpush.bf16.msra.mxu0 %v3059
        %3069 = vmatmul.bf16.gmra.mxu0 %v2987
        %v3070 = vpop.f32.mrf.mxu0
        %v3071 = vadd.f32 %v2959, %v3070
        %v3072 = vpop.f32.mrf.mxu0
        %v3073 = vadd.f32 %v2964, %v3072
        %3074 = vmatmul.bf16.gmra.mxu0 %v2990
        %v3075 = vpop.f32.mrf.mxu0
        %v3076 = vadd.f32 %v2969, %v3075
        %v3077 = vpop.f32.mrf.mxu0
        %v3078 = vadd.f32 %v2974, %v3077
        %3079 = vdwg.mxu0
        %v3080 = vmax.f32 %v3005, 0.0
        %v3081 = vmax.f32 %v3007, 0.0
        %v3082 = vmax.f32 %v3010, 0.0
        %v3083 = vmax.f32 %v3012, 0.0
        %v3084 = vmax.f32 %v3027, 0.0
        %v3085 = vmax.f32 %v3029, 0.0
        %v3086 = vmax.f32 %v3032, 0.0
        %v3087 = vmax.f32 %v3034, 0.0
        %v3088 = vmax.f32 %v3049, 0.0
        %v3089 = vmax.f32 %v3051, 0.0
        %v3090 = vmax.f32 %v3054, 0.0
        %v3091 = vmax.f32 %v3056, 0.0
        %v3092 = vmax.f32 %v3071, 0.0
        %v3093 = vmax.f32 %v3073, 0.0
        %v3094 = vmax.f32 %v3076, 0.0
        %v3095 = vmax.f32 %v3078, 0.0
        %v3096 = vpack.c.bf16 %v3080, %v3080
        %v3097 = vpack.c.bf16 %v3081, %v3081
        %v3098 = vpack.c.bf16 %v3082, %v3082
        %v3099 = vpack.c.bf16 %v3083, %v3083
        %v3100 = vpack.c.bf16 %v3084, %v3084
        %v3101 = vpack.c.bf16 %v3085, %v3085
        %v3102 = vpack.c.bf16 %v3086, %v3086
        %v3103 = vpack.c.bf16 %v3087, %v3087
        %v3104 = vpack.c.bf16 %v3088, %v3088
        %v3105 = vpack.c.bf16 %v3089, %v3089
        %v3106 = vpack.c.bf16 %v3090, %v3090
        %v3107 = vpack.c.bf16 %v3091, %v3091
        %v3108 = vpack.c.bf16 %v3092, %v3092
        %v3109 = vpack.c.bf16 %v3093, %v3093
        %v3110 = vpack.c.bf16 %v3094, %v3094
        %v3111 = vpack.c.bf16 %v3095, %v3095
        %3113 = vset.pattern.permute.xlu0 0
        %3114 = vperm.xlu0 %3113, %v2951
        %v3115 = vpop.permute.xlu0 %3114
        %v3121 = vunpack.c.l.b16 %v3096
        %v3122 = vunpack.c.l.b16 %v3097
        %v3123 = vunpack.c.l.b16 %v3098
        %v3124 = vunpack.c.l.b16 %v3099
        %v3125 = vpack.c.b16 %v3122, %v3121
        %v3126 = vpack.c.b16 %v3124, %v3123
        %v3130 = vsel %vm840, %v2944, 0
        %3132 = vmatpush.bf16.msra.mxu0 0
        %3133 = vmatpush.bf16.msra.mxu0 0
        %3134 = vmatpush.bf16.msra.mxu0 0
        %3135 = vmatpush.bf16.msra.mxu0 0
        %3136 = vmatpush.bf16.msra.mxu0 0
        %3137 = vmatpush.bf16.msra.mxu0 0
        %3138 = vmatpush.bf16.msra.mxu0 %v3126
        %3139 = vmatpush.bf16.msra.mxu0 %v3125
        %3140 = vmatmul.bf16.gmra.mxu0 %v3130
        %v3141 = vpop.f32.mrf.mxu0
        %v3142 = vadd.f32 %v3115, %v3141
        %v3143 = vpop.f32.mrf.mxu0
        %3144 = vdwg.mxu0
        %v3149 = vunpack.c.l.b16 %v3100
        %v3150 = vunpack.c.l.b16 %v3101
        %v3151 = vunpack.c.l.b16 %v3102
        %v3152 = vunpack.c.l.b16 %v3103
        %v3153 = vpack.c.b16 %v3150, %v3149
        %v3154 = vpack.c.b16 %v3152, %v3151
        %3157 = vmatpush.bf16.msra.mxu0 0
        %3158 = vmatpush.bf16.msra.mxu0 0
        %3159 = vmatpush.bf16.msra.mxu0 0
        %3160 = vmatpush.bf16.msra.mxu0 0
        %3161 = vmatpush.bf16.msra.mxu0 0
        %3162 = vmatpush.bf16.msra.mxu0 0
        %3163 = vmatpush.bf16.msra.mxu0 %v3154
        %3164 = vmatpush.bf16.msra.mxu0 %v3153
        %3165 = vmatmul.bf16.gmra.mxu0 %v3130
        %v3166 = vpop.f32.mrf.mxu0
        %v3167 = vadd.f32 %v3115, %v3166
        %v3168 = vpop.f32.mrf.mxu0
        %3169 = vdwg.mxu0
        %v3174 = vunpack.c.l.b16 %v3104
        %v3175 = vunpack.c.l.b16 %v3105
        %v3176 = vunpack.c.l.b16 %v3106
        %v3177 = vunpack.c.l.b16 %v3107
        %v3178 = vpack.c.b16 %v3175, %v3174
        %v3179 = vpack.c.b16 %v3177, %v3176
        %3182 = vmatpush.bf16.msra.mxu0 0
        %3183 = vmatpush.bf16.msra.mxu0 0
        %3184 = vmatpush.bf16.msra.mxu0 0
        %3185 = vmatpush.bf16.msra.mxu0 0
        %3186 = vmatpush.bf16.msra.mxu0 0
        %3187 = vmatpush.bf16.msra.mxu0 0
        %3188 = vmatpush.bf16.msra.mxu0 %v3179
        %3189 = vmatpush.bf16.msra.mxu0 %v3178
        %3190 = vmatmul.bf16.gmra.mxu0 %v3130
        %v3191 = vpop.f32.mrf.mxu0
        %v3192 = vadd.f32 %v3115, %v3191
        %v3193 = vpop.f32.mrf.mxu0
        %3194 = vdwg.mxu0
        %v3199 = vunpack.c.l.b16 %v3108
        %v3200 = vunpack.c.l.b16 %v3109
        %v3201 = vunpack.c.l.b16 %v3110
        %v3202 = vunpack.c.l.b16 %v3111
        %v3203 = vpack.c.b16 %v3200, %v3199
        %v3204 = vpack.c.b16 %v3202, %v3201
        %3207 = vmatpush.bf16.msra.mxu0 0
        %3208 = vmatpush.bf16.msra.mxu0 0
        %3209 = vmatpush.bf16.msra.mxu0 0
        %3210 = vmatpush.bf16.msra.mxu0 0
        %3211 = vmatpush.bf16.msra.mxu0 0
        %3212 = vmatpush.bf16.msra.mxu0 0
        %3213 = vmatpush.bf16.msra.mxu0 %v3204
        %3214 = vmatpush.bf16.msra.mxu0 %v3203
        %3215 = vmatmul.bf16.gmra.mxu0 %v3130
        %v3216 = vpop.f32.mrf.mxu0
        %v3217 = vadd.f32 %v3115, %v3216
        %v3218 = vpop.f32.mrf.mxu0
        %3219 = vdwg.mxu0
        %v3220 = vadd.f32 %v2932, %v3142
        %v3221 = vadd.f32 %v2933, %v3167
        %v3222 = vadd.f32 %v2934, %v3192
        %v3223 = vadd.f32 %v2935, %v3217
        %v3224 = vsel %vm840, %v3220, 0.0
        %3225 = vadd.xlane.f32.xlu0 %v3224
        %v3226 = vpop.xlane.xlu0 %3225
        %v3227 = vsel %vm840, %v3221, 0.0
        %3228 = vadd.xlane.f32.xlu0 %v3227
        %v3229 = vpop.xlane.xlu0 %3228
        %v3230 = vsel %vm840, %v3222, 0.0
        %3231 = vadd.xlane.f32.xlu0 %v3230
        %v3232 = vpop.xlane.xlu0 %3231
        %v3233 = vsel %vm840, %v3223, 0.0
        %3234 = vadd.xlane.f32.xlu0 %v3233
        %v3235 = vpop.xlane.xlu0 %3234
        %v3236 = vmul.f32 %v3226, %v892
        %v3237 = vmul.f32 %v3229, %v892
        %v3238 = vmul.f32 %v3232, %v892
        %v3239 = vmul.f32 %v3235, %v892
        %v3240 = vsub.f32 %v3220, %v3236
        %v3241 = vsub.f32 %v3221, %v3237
        %v3242 = vsub.f32 %v3222, %v3238
        %v3243 = vsub.f32 %v3223, %v3239
        %v3244 = vmul.f32 %v3240, %v3240
        %v3245 = vmul.f32 %v3241, %v3241
        %v3246 = vmul.f32 %v3242, %v3242
        %v3247 = vmul.f32 %v3243, %v3243
        %v3248 = vsel %vm840, %v3244, 0.0
        %3249 = vadd.xlane.f32.xlu0 %v3248
        %v3250 = vpop.xlane.xlu0 %3249
        %v3251 = vsel %vm840, %v3245, 0.0
        %3252 = vadd.xlane.f32.xlu0 %v3251
        %v3253 = vpop.xlane.xlu0 %3252
        %v3254 = vsel %vm840, %v3246, 0.0
        %3255 = vadd.xlane.f32.xlu0 %v3254
        %v3256 = vpop.xlane.xlu0 %3255
        %v3257 = vsel %vm840, %v3247, 0.0
        %3258 = vadd.xlane.f32.xlu0 %v3257
        %v3259 = vpop.xlane.xlu0 %3258
        %v3260 = vmul.f32 %v3250, %v892
        %v3261 = vmul.f32 %v3253, %v892
        %v3262 = vmul.f32 %v3256, %v892
        %v3263 = vmul.f32 %v3259, %v892
        %v3264 = vadd.f32 %v3260, 1e-05
        %v3265 = vadd.f32 %v3261, 1e-05
        %v3266 = vadd.f32 %v3262, 1e-05
        %v3267 = vadd.f32 %v3263, 1e-05
        %v3268 = vrsqrt.pop %v3264
        %v3269 = vmul.f32 %v3268, %v3264
        %v3270 = vmul.f32 %v3269, %v3268
        %v3271 = vmul.f32 0.5, %v3270
        %v3272 = vsub.f32 1.5, %v3271
        %v3273 = vmul.f32 %v3268, %v3272
        %vm3274 = vweird.f32 %v3264
        %vm3275 = vweird.f32 %v3268
        %vm3276 = vmor %vm3274, %vm3275
        %v3277 = vsel %vm3276, %v3268, %v3273
        %v3278 = vrsqrt.pop %v3265
        %v3279 = vmul.f32 %v3278, %v3265
        %v3280 = vmul.f32 %v3279, %v3278
        %v3281 = vmul.f32 0.5, %v3280
        %v3282 = vsub.f32 1.5, %v3281
        %v3283 = vmul.f32 %v3278, %v3282
        %vm3284 = vweird.f32 %v3265
        %vm3285 = vweird.f32 %v3278
        %vm3286 = vmor %vm3284, %vm3285
        %v3287 = vsel %vm3286, %v3278, %v3283
        %v3288 = vrsqrt.pop %v3266
        %v3289 = vmul.f32 %v3288, %v3266
        %v3290 = vmul.f32 %v3289, %v3288
        %v3291 = vmul.f32 0.5, %v3290
        %v3292 = vsub.f32 1.5, %v3291
        %v3293 = vmul.f32 %v3288, %v3292
        %vm3294 = vweird.f32 %v3266
        %vm3295 = vweird.f32 %v3288
        %vm3296 = vmor %vm3294, %vm3295
        %v3297 = vsel %vm3296, %v3288, %v3293
        %v3298 = vrsqrt.pop %v3267
        %v3299 = vmul.f32 %v3298, %v3267
        %v3300 = vmul.f32 %v3299, %v3298
        %v3301 = vmul.f32 0.5, %v3300
        %v3302 = vsub.f32 1.5, %v3301
        %v3303 = vmul.f32 %v3298, %v3302
        %vm3304 = vweird.f32 %v3267
        %vm3305 = vweird.f32 %v3298
        %vm3306 = vmor %vm3304, %vm3305
        %v3307 = vsel %vm3306, %v3298, %v3303
        %v3308 = vmul.f32 %v3240, %v3277
        %v3309 = vmul.f32 %v3241, %v3287
        %v3310 = vmul.f32 %v3242, %v3297
        %v3311 = vmul.f32 %v3243, %v3307
        %v3312 = vperm.slane %v2936, 0
        %v3313 = vmul.f32 %v3308, %v3312
        %v3314 = vmul.f32 %v3309, %v3312
        %v3315 = vmul.f32 %v3310, %v3312
        %v3316 = vmul.f32 %v3311, %v3312
        %v3317 = vperm.slane %v2937, 0
        %v3318 = vadd.f32 %v3313, %v3317
        %v3319 = vadd.f32 %v3314, %v3317
        %v3320 = vadd.f32 %v3315, %v3317
        %v3321 = vadd.f32 %v3316, %v3317
        %3322 = vst.msk [vmem:[#allocation2] sm:$0xff] %vm840, %v3318
        %3323 = vst.msk [vmem:[#allocation2 + $0x8] sm:$0xff] %vm840, %v3319
        %3324 = vst.msk [vmem:[#allocation2 + $0x10] sm:$0xff] %vm840, %v3320
        %3325 = vst.msk [vmem:[#allocation2 + $0x18] sm:$0xff] %vm840, %v3321
        %p3326 = scmp.eq.s32.totalorder %s35, 1
        // Predicated region
        $region89: #{tst_encoder.1} parent=83 // pred_check
          %p3327 = pneg %p3326
        $region90: #{tst_encoder.1} parent=83 // pred_check_branch
          %3329 = sbr.rel (%p3327) target = $region92
        $region91: #{tst_encoder.1} parent=83 // pred_region
          %3330 = vst.msk [vmem:[%s728] sm:$0xff] %vm840, %v3318
          %3331 = vst.msk [vmem:[%s728 + $0x8] sm:$0xff] %vm840, %v3319
          %3332 = vst.msk [vmem:[%s728 + $0x10] sm:$0xff] %vm840, %v3320
          %3333 = vst.msk [vmem:[%s728 + $0x18] sm:$0xff] %vm840, %v3321
        $region92: #{tst_encoder.1} parent=83 // pred_fallthru
          _
        %s3334 = sand.u32 %s461, 1
        %s3335 = scalar_lea.sflag [#allocation4], %s3334
        %s3336 = sand.u32 %s461, 1
        %s3337 = smul.addr %s3336, 32
        %s3338 = scalar_lea.vmem [#allocation3], %s3337
        // Predicated region
        $region93: #{tst_encoder.1} parent=83 // pred_check
          %p3339 = pneg %p471
        $region94: #{tst_encoder.1} parent=83 // pred_check_branch
          %3341 = sbr.rel (%p3339) target = $region96
        $region95: #{tst_encoder.1} parent=83 // pred_region
          %3343 = vsyncadd %s3335, 0
          %s3344 = smul.addr %s34, 4
          %s3345 = smul.addr %s3344, 8
          %s3346 = scalar_lea.hbm %s16, %s3345
          %s3347 = sshll.u32 %s3338, 4
          %s3348 = int_to_ptr.vmem [resolvable:$true] %s3347
          %s3349 = sshll.u32 %s3346, 4
          %s3350 = int_to_ptr.hbm [resolvable:$true] %s3349
          %3355 = dma.vmem_to_hbm [thread:$0]  %s3348, 512, %s3350, %s3335, 128, 128, 8
        $region96: #{tst_encoder.1} parent=83 // pred_fallthru
          _
      $region84: #{tst_encoder.1} parent=5 // pred_fallthru
        _
      %p3356 = scmp.le.s32.totalorder 2, %s25
      // Predicated region
      $region97: #{tst_encoder.1} parent=5 // pred_check
        %p3357 = pneg %p3356
      $region98: #{tst_encoder.1} parent=5 // pred_check_branch
        %3359 = sbr.rel (%p3357) target = $region100
      $region99: #{tst_encoder.1} parent=5 // pred_region
        %s3360 = ssub.s32 %s25, 2
        // Predicated region
        $region101: #{tst_encoder.1} parent=99 // pred_check
          %p3361 = pneg %p477
        $region102: #{tst_encoder.1} parent=99 // pred_check_branch
          %3363 = sbr.rel (%p3361) target = $region104
        $region103: #{tst_encoder.1} parent=99 // pred_region
          %s3364 = sand.u32 %s462, 1
          %s3365 = scalar_lea.sflag [#allocation4], %s3364
          %s3366 = sand.u32 %s462, 1
          %s3367 = smul.addr %s3366, 32
          %s3368 = scalar_lea.vmem [#allocation3], %s3367
          %3370 = dma.done %s3365, 512
        $region104: #{tst_encoder.1} parent=99 // pred_fallthru
          _
      $region100: #{tst_encoder.1} parent=5 // pred_fallthru
        _
    $region6: #{tst_encoder.1} parent=1 // loop_footer
      %s29 = sadd.s32 1, %s25
    $region7: #{tst_encoder.1} parent=1 // loop_footer_branch
      %24 = sbr.rel target = $region3
    $region8: #{tst_encoder.1} parent=1 // loop_exit
      _
    %3371 = vsyncpa [#allocation4], 1
    %s3372 = scalar_lea.sflag [#allocation4], 1
    %3373 = vsyncpa %s3372, 1

</llo_original>
